<compile_context>
chip_gen: v6e
topology: v6e:2x2x1
jax: 0.10.0
libtpu: 0.0.40
codegen_flags: <defaults>
</compile_context>

<pallas_src>
import functools
import math

import jax
import jax.numpy as jnp
from jax import lax
from jax.experimental import pallas as pl
from jax.experimental.pallas import tpu as pltpu


_VMEM_LIMIT = 48 * 1024 * 1024  # safe on v5e/v6e (128 MiB) and v7x (64 MiB) alike


# ----------------------------------------------------------------------------
# Pallas kernels
# ----------------------------------------------------------------------------
def _conv_in_lrelu_kernel(xpf_ref, w_ref, mask_ref, o_ref, cols_ref, acc_ref, *,
                          yp, n_valid):
    """Fused 3x3x3 conv + InstanceNorm3d(eps=1e-5, affine=False) + LeakyReLU(0.2).

    xpf_ref : (1, Tp, Qin, Cin)   bf16, Qin = Xp*Yp + 2  (padded volume, XY flattened)
    w_ref   : (3, 9*Cin, Cout)    bf16  (per-T-plane tap fold of the 3x3x3 kernel)
    mask_ref: (Qout, 1)           f32   (1.0 on valid rows, 0.0 on Y-padding rows)
    o_ref   : (1, T, Qout, Cout)  bf16, Qout = X*Yp
    cols_ref: (3, Qout, 9*Cin)    bf16  VMEM scratch (rolling per-plane im2col slabs)
    acc_ref : (T, Qout, Cout)     f32   VMEM scratch (raw conv output before IN)
    """
    T = o_ref.shape[1]
    qout = o_ref.shape[2]
    cout = o_ref.shape[3]

    def build_slab(p):
        # Gather the 9 in-plane taps of padded T-plane `p` into one (Qout, 9*Cin) slab.
        # Built exactly once per plane; reused by the 3 output rows t in {p-2, p-1, p}.
        parts = []
        for dx in range(3):
            for dy in range(3):
                off = dx * yp + dy                      # contiguous tap slice
                parts.append(xpf_ref[0, p, pl.ds(off, qout), :])
        cols_ref[pl.ds(p % 3, 1)] = jnp.concatenate(parts, axis=-1)[None]

    def slab(p):
        return cols_ref[pl.ds(lax.rem(p, 3), 1)][0]     # (Qout, 9*Cin) bf16

    # prologue: planes 0 and 1 (plane t+2 is built inside the row loop)
    build_slab(0)
    build_slab(1)

    def conv_row(t, carry):
        s, ss = carry
        build_slab(t + 2)
        # 3 folded MXU contractions (one per T-tap), f32 accumulate
        acc = jnp.dot(slab(t), w_ref[0], preferred_element_type=jnp.float32)
        acc = acc + jnp.dot(slab(t + 1), w_ref[1], preferred_element_type=jnp.float32)
        acc = acc + jnp.dot(slab(t + 2), w_ref[2], preferred_element_type=jnp.float32)
        acc_ref[pl.ds(t, 1)] = acc[None, :, :]
        am = acc * mask_ref[...]                        # mask out padding rows
        s = s + jnp.sum(am, axis=0, keepdims=True)
        ss = ss + jnp.sum(am * acc, axis=0, keepdims=True)
        return s, ss

    zero = jnp.zeros((1, cout), jnp.float32)
    s, ss = lax.fori_loop(0, T, conv_row, (zero, zero))

    inv_n = 1.0 / float(n_valid)
    mean = s * inv_n
    var = jnp.maximum(ss * inv_n - mean * mean, 0.0)
    inv_std = lax.rsqrt(var + 1e-5)

    def norm_row(t, _):
        a = acc_ref[pl.ds(t, 1)]                        # (1, Qout, Cout) f32
        y = (a - mean) * inv_std
        y = jnp.where(y >= 0, y, 0.2 * y)               # LeakyReLU(0.2)
        o_ref[0, pl.ds(t, 1)] = y.astype(o_ref.dtype)
        return 0

    lax.fori_loop(0, T, norm_row, 0)


def _head_kernel(x_ref, wn_ref, bn_ref, wg_ref, bg_ref, ss_ref, out_ref, gate_ref):
    """Fused norm_conv(1x1) + gate_conv(1x1) + sigmoid gate on one spatial tile.

    x_ref: (1, tN, Cin) bf16; wn: (Cin, Cout) bf16; bn: (1, Cout) f32;
    wg: (Cout, 1) f32; bg: (1, 1) f32; ss: SMEM (2,) f32 = [scale, shift].
    """
    x = x_ref[0]
    y = jnp.dot(x, wn_ref[...], preferred_element_type=jnp.float32) + bn_ref[...]
    out_ref[0] = y
    g = jnp.dot(y, wg_ref[...], preferred_element_type=jnp.float32) + bg_ref[...]
    scale = ss_ref[0]
    shift = ss_ref[1]
    gate_ref[0] = jax.nn.sigmoid(scale * (g + shift))


# ----------------------------------------------------------------------------
# Pallas wrappers
# ----------------------------------------------------------------------------
def conv3x3_in_lrelu(xp, w):
    """xp: (B, T+2, X+2, Y+2, Cin) spatially padded input; w: (3,3,3,Cin,Cout)."""
    B, Tp, Xp, Yp, Cin = xp.shape
    T, X, Y = Tp - 2, Xp - 2, Yp - 2
    Cout = w.shape[-1]
    Qin = Xp * Yp + 2     # +2 rows so the largest tap offset (2*Yp + 2) stays in bounds
    Qout = X * Yp         # conv is computed on the padded X/Y grid; junk rows are masked

    xpf = xp.astype(jnp.bfloat16).reshape(B, Tp, Xp * Yp, Cin)
    xpf = jnp.pad(xpf, ((0, 0), (0, 0), (0, 2), (0, 0)))
    wf = w.reshape(3, 9 * Cin, Cout).astype(jnp.bfloat16)
    mask = ((jnp.arange(Qout) % Yp) < Y).astype(jnp.float32).reshape(Qout, 1)

    kernel = functools.partial(_conv_in_lrelu_kernel, yp=Yp, n_valid=T * X * Y)
    out = pl.pallas_call(
        kernel,
        out_shape=jax.ShapeDtypeStruct((B, T, Qout, Cout), jnp.bfloat16),
        grid=(B,),
        in_specs=[
            pl.BlockSpec((1, Tp, Qin, Cin), lambda b: (b, 0, 0, 0)),
            pl.BlockSpec((3, 9 * Cin, Cout), lambda b: (0, 0, 0)),
            pl.BlockSpec((Qout, 1), lambda b: (0, 0)),
        ],
        out_specs=pl.BlockSpec((1, T, Qout, Cout), lambda b: (b, 0, 0, 0)),
        scratch_shapes=[
            pltpu.VMEM((3, Qout, 9 * Cin), jnp.bfloat16),
            pltpu.VMEM((T, Qout, Cout), jnp.float32),
        ],
        compiler_params=pltpu.CompilerParams(
            dimension_semantics=("parallel",),
            vmem_limit_bytes=_VMEM_LIMIT,
        ),
    )(xpf, wf, mask)
    # strip the Y-padding rows that were computed on the padded grid
    out = out.reshape(B, T, X, Yp, Cout)[:, :, :, :Y, :]
    return out


def _largest_pow2_divisor(n, cap):
    t = 1
    while t * 2 <= cap and n % (t * 2) == 0:
        t *= 2
    return t


def head_fused(x, wn, bn, wg, bg, scale, shift):
    """Fused norm_conv + gate_conv + sigmoid. x: (B, T, X, Y, Cin) -> (out f32, gate f32)."""
    B, T, X, Y, Cin = x.shape
    Cout = wn.shape[-1]
    N = T * X * Y
    tN = _largest_pow2_divisor(N, 2048)
    if tN < 128:
        tN = N
    xf = x.astype(jnp.bfloat16).reshape(B, N, Cin)
    ss = jnp.array([scale, shift], jnp.float32)

    out, gate = pl.pallas_call(
        _head_kernel,
        out_shape=(jax.ShapeDtypeStruct((B, N, Cout), jnp.float32),
                   jax.ShapeDtypeStruct((B, N, 1), jnp.float32)),
        grid=(B, N // tN),
        in_specs=[
            pl.BlockSpec((1, tN, Cin), lambda b, n: (b, n, 0)),
            pl.BlockSpec((Cin, Cout), lambda b, n: (0, 0)),
            pl.BlockSpec((1, Cout), lambda b, n: (0, 0)),
            pl.BlockSpec((Cout, 1), lambda b, n: (0, 0)),
            pl.BlockSpec((1, 1), lambda b, n: (0, 0)),
            pl.BlockSpec(memory_space=pltpu.MemorySpace.SMEM),
        ],
        out_specs=(pl.BlockSpec((1, tN, Cout), lambda b, n: (b, n, 0)),
                   pl.BlockSpec((1, tN, 1), lambda b, n: (b, n, 0))),
        compiler_params=pltpu.CompilerParams(
            dimension_semantics=("parallel", "parallel"),
            vmem_limit_bytes=_VMEM_LIMIT,
        ),
    )(xf, wn.astype(jnp.bfloat16), bn.reshape(1, Cout).astype(jnp.float32),
      wg.astype(jnp.float32), bg.reshape(1, 1).astype(jnp.float32), ss)
    return out.reshape(B, T, X, Y, Cout), gate.reshape(B, T, X, Y, 1)


# ----------------------------------------------------------------------------
# U-Net building blocks (JAX glue around the Pallas kernels)
# ----------------------------------------------------------------------------
def conv_block_3d(x, w):
    """ConvBlock3D: Conv3d(k=3,s=1,p=1,bias=False) + InstanceNorm3d + LeakyReLU(0.2)."""
    xp = jnp.pad(x, ((0, 0), (1, 1), (1, 1), (1, 1), (0, 0)))
    return conv3x3_in_lrelu(xp, w)


def transpose_conv_block_3d(x, wt):
    """TransposeConvBlock3D: ConvTranspose3d(k=3,s=2,p=1,out_pad=1,bias=False) + IN + LReLU.

    Implemented as: zero-dilate input by 2, pad (1 left, 2 right) per spatial dim, then a
    regular valid 3x3x3 conv with the flipped transposed weight.
    wt: PyTorch ConvTranspose3d weight (Cin, Cout, 3, 3, 3).
    """
    w = jnp.transpose(jnp.flip(wt, axis=(2, 3, 4)), (2, 3, 4, 0, 1))  # (3,3,3,Cin,Cout)
    B, T, X, Y, C = x.shape
    xd = jnp.zeros((B, 2 * T - 1, 2 * X - 1, 2 * Y - 1, C), x.dtype)
    xd = xd.at[:, ::2, ::2, ::2, :].set(x)
    xp = jnp.pad(xd, ((0, 0), (1, 2), (1, 2), (1, 2), (0, 0)))
    return conv3x3_in_lrelu(xp, w)


def avg_pool3d_2(x):
    B, T, X, Y, C = x.shape
    return x.reshape(B, T // 2, 2, X // 2, 2, Y // 2, 2, C).mean(axis=(2, 4, 6))


def gaussian_smooth_xy(x, sigma):
    # TODO(synk): utils.gaussian_smooth_3d source is unavailable; approximated as a
    # separable Gaussian (truncate=4, replicate padding) along X and Y only (sigma_T=0).
    if sigma <= 0:
        return x
    radius = max(1, int(4.0 * sigma + 0.5))
    t = jnp.arange(-radius, radius + 1, dtype=jnp.float32)
    k = jnp.exp(-0.5 * (t / sigma) ** 2)
    k = k / jnp.sum(k)

    def smooth_axis(v, axis):
        pads = [(radius, radius) if a == axis else (0, 0) for a in range(v.ndim)]
        vp = jnp.pad(v, pads, mode="edge")
        n = v.shape[axis]
        out = jnp.zeros(v.shape, jnp.float32)
        for i in range(2 * radius + 1):
            sl = [slice(None)] * v.ndim
            sl[axis] = slice(i, i + n)
            out = out + k[i] * vp[tuple(sl)]
        return out

    x = smooth_axis(x, axis=2)  # X
    x = smooth_axis(x, axis=3)  # Y
    return x


def nearest_upsample(x, factor):
    assert factor >= 1 and int(factor) == factor
    for ax in (1, 2, 3):
        x = jnp.repeat(x, int(factor), axis=ax)
    return x


# ----------------------------------------------------------------------------
# UNet3D forward
# ----------------------------------------------------------------------------
def unet3d_forward(x, params, num_steps):
    stack = []
    out = x
    for w in params["down"]:
        out = conv_block_3d(out, w)
        stack.append(out)
        out = avg_pool3d_2(out)
    out = conv_block_3d(out, params["bottleneck"])

    cnt = 0
    for wt, wc in zip(params["up_t"], params["up_c"]):
        sigma = float(min(max(params["stds"][cnt], 1e-9), 7.0))  # .item()-style static sigma
        out = gaussian_smooth_xy(out, sigma)
        skip = stack.pop()
        out = transpose_conv_block_3d(out, wt)
        pads = [(0, 0)] * 5
        for ax in (1, 2, 3):
            if out.shape[ax] != skip.shape[ax]:
                pads[ax] = (1, 0)
        if any(p != (0, 0) for p in pads):
            out = jnp.pad(out, pads, mode="reflect")
        out = jnp.concatenate([out, skip.astype(out.dtype)], axis=-1)
        out = conv_block_3d(out, wc)
        cnt += 1

    out = conv_block_3d(out, params["final"])
    sigma = float(min(max(params["stds"][cnt], 1e-9), 7.0))
    out = gaussian_smooth_xy(out, sigma)
    out = nearest_upsample(out, 2 ** (num_steps - 3))
    out, gate = head_fused(out, params["norm_w"], params["norm_b"],
                           params["gate_w"], params["gate_b"],
                           params["scale"], params["shift"])
    return out, gate


# ----------------------------------------------------------------------------
# NormNet3D forward (complex <-> channel, norm/unnorm, pad/unpad)
# ----------------------------------------------------------------------------
def normnet3d_forward(image_cplx, params, num_steps):
    assert image_cplx.ndim == 5 and jnp.iscomplexobj(image_cplx)
    B, C, T, X, Y = image_cplx.shape

    # complex_to_chan_dim
    x = jnp.concatenate([jnp.real(image_cplx), jnp.imag(image_cplx)], axis=1)  # (B, 2C, T, X, Y)
    Ctot = 2 * C

    # norm (per-batch, per real/imag group; torch.std is unbiased)
    v = x.reshape(B, 2, -1)
    mean = jnp.mean(v, axis=2, keepdims=True)
    std = jnp.std(v, axis=2, ddof=1, keepdims=True)
    v = (v - mean) / (std + 1e-12)
    x = v.reshape(B, Ctot, T, X, Y)

    # pad spatial dims to multiples of 16
    T_mult = ((T - 1) | 15) + 1
    X_mult = ((X - 1) | 15) + 1
    Y_mult = ((Y - 1) | 15) + 1
    T_pad = [math.floor((T_mult - T) / 2), math.ceil((T_mult - T) / 2)]
    X_pad = [math.floor((X_mult - X) / 2), math.ceil((X_mult - X) / 2)]
    Y_pad = [math.floor((Y_mult - Y) / 2), math.ceil((Y_mult - Y) / 2)]
    x = jnp.pad(x, ((0, 0), (0, 0),
                    (T_pad[0], T_pad[1]), (X_pad[0], X_pad[1]), (Y_pad[0], Y_pad[1])))

    # NCDHW -> channels-last for the kernels
    x = jnp.transpose(x, (0, 2, 3, 4, 1))
    out, gate = unet3d_forward(x, params, num_steps)
    out = jnp.transpose(out, (0, 4, 1, 2, 3))
    gate = jnp.transpose(gate, (0, 4, 1, 2, 3))

    # unpad
    sl = (Ellipsis,
          slice(T_pad[0], T_mult - T_pad[1]),
          slice(X_pad[0], X_mult - X_pad[1]),
          slice(Y_pad[0], Y_mult - Y_pad[1]))
    out = out[sl]
    gate = gate[sl]

    # unnorm
    v = out.reshape(B, 2, -1)
    v = v * std + mean
    out = v.reshape(B, Ctot, T, X, Y)

    # chan_dim_to_complex
    out = jax.lax.complex(out[:, :C], out[:, C:])
    return out, gate


# ----------------------------------------------------------------------------
# Deterministic parameter initialization (shapes follow UNet3D.__init__)
# ----------------------------------------------------------------------------
def init_params(key, chans, num_steps, in_chans=2, out_chans=2):
    keys = iter(jax.random.split(key, 64))

    def conv_w(cin, cout):  # kernel layout (3,3,3,Cin,Cout)
        return jax.random.normal(next(keys), (3, 3, 3, cin, cout), jnp.float32) / math.sqrt(27 * cin)

    def tconv_w(cin, cout):  # PyTorch ConvTranspose3d layout (Cin,Cout,3,3,3)
        return jax.random.normal(next(keys), (cin, cout, 3, 3, 3), jnp.float32) / math.sqrt(27 * cin)

    params = {}
    down = [conv_w(in_chans, chans)]
    ch = chans
    for _ in range(num_steps - 1):
        down.append(conv_w(ch, ch * 2))
        ch *= 2
    params["down"] = down
    params["bottleneck"] = conv_w(ch, ch * 2)
    up_t, up_c = [], []
    for _ in range(num_steps - 1):
        up_t.append(tconv_w(ch * 2, ch))
        up_c.append(conv_w(ch * 2, ch))
        ch //= 2
    params["up_t"], params["up_c"] = up_t, up_c
    params["final"] = conv_w(ch * 2, ch)
    params["norm_w"] = jax.random.normal(next(keys), (ch, out_chans), jnp.float32) / math.sqrt(ch)
    params["norm_b"] = jnp.zeros((out_chans,), jnp.float32)
    params["gate_w"] = jax.random.normal(next(keys), (out_chans, 1), jnp.float32) / math.sqrt(out_chans)
    params["gate_b"] = jnp.zeros((1,), jnp.float32)
    params["scale"] = 1.0   # nn.Parameter(torch.ones(1))
    params["shift"] = 0.0   # nn.Parameter(torch.zeros(1))
    params["stds"] = [1.0] * num_steps
    return params


if __name__ == "__main__":
    key = jax.random.PRNGKey(0)
    k_img, k_img2, k_param = jax.random.split(key, 3)

    # small but shape-consistent config: num_steps=4 so interpolate(scale=2) restores size
    B, C, T, X, Y = 2, 1, 16, 16, 16
    chans, num_steps = 4, 4

    real = jax.random.normal(k_img, (B, C, T, X, Y), jnp.float32)
    imag = jax.random.normal(k_img2, (B, C, T, X, Y), jnp.float32)
    image = jax.lax.complex(real, imag)  # complex64 input, like the PyTorch module expects

    params = init_params(k_param, chans=chans, num_steps=num_steps)

    out, gate = normnet3d_forward(image, params, num_steps)
    out, gate = jax.block_until_ready((out, gate))

    assert out.shape == (B, C, T, X, Y) and jnp.iscomplexobj(out)
    assert gate.shape == (B, 1, T, X, Y)
    assert bool(jnp.all(jnp.isfinite(jnp.abs(out)))) and bool(jnp.all(jnp.isfinite(gate)))
    print("KERNEL_OK")
</pallas_src>

<mosaic_0001>
module attributes {stable_mosaic.version = 11 : i64} {
  func.func @_conv_in_lrelu_kernel(%arg0: i32, %arg1: memref<1x18x326x2xbf16, #tpu.memory_space<vmem>>, %arg2: memref<3x18x4xbf16, #tpu.memory_space<vmem>>, %arg3: memref<288x1xf32, #tpu.memory_space<vmem>>, %arg4: memref<1x16x288x4xbf16, #tpu.memory_space<vmem>>, %arg5: memref<3x288x18xbf16, #tpu.memory_space<vmem>>, %arg6: memref<16x288x4xf32, #tpu.memory_space<vmem>>) attributes {dimension_semantics = [#tpu.dimension_semantics<parallel>], iteration_bounds = array<i64: 2>, scalar_prefetch = 0 : i64, scratch_operands = 2 : i64, tpu.core_type = #tpu.core_type<tc>, window_params = [{transform_indices = @transform_0, window_bounds = array<i64: 1, 18, 326, 2>}, {pipeline_mode = #tpu.pipeline_mode<synchronous>, transform_indices = @transform_1, window_bounds = array<i64: 3, 18, 4>}, {pipeline_mode = #tpu.pipeline_mode<synchronous>, transform_indices = @transform_2, window_bounds = array<i64: 288, 1>}, {transform_indices = @transform_3, window_bounds = array<i64: 1, 16, 288, 4>}]} {
    %c0 = arith.constant 0 : index
    %c0_0 = arith.constant 0 : index
    %c0_1 = arith.constant 0 : index
    %c0_2 = arith.constant 0 : index
    %0 = vector.load %arg1[%c0, %c0_0, %c0_1, %c0_2] : memref<1x18x326x2xbf16, #tpu.memory_space<vmem>>, vector<1x1x288x2xbf16>
    %1 = vector.shape_cast %0 : vector<1x1x288x2xbf16> to vector<288x2xbf16>
    %c0_3 = arith.constant 0 : index
    %c0_4 = arith.constant 0 : index
    %c1 = arith.constant 1 : index
    %c0_5 = arith.constant 0 : index
    %2 = vector.load %arg1[%c0_3, %c0_4, %c1, %c0_5] : memref<1x18x326x2xbf16, #tpu.memory_space<vmem>>, vector<1x1x288x2xbf16>
    %3 = vector.shape_cast %2 : vector<1x1x288x2xbf16> to vector<288x2xbf16>
    %c0_6 = arith.constant 0 : index
    %c0_7 = arith.constant 0 : index
    %c2 = arith.constant 2 : index
    %c0_8 = arith.constant 0 : index
    %4 = vector.load %arg1[%c0_6, %c0_7, %c2, %c0_8] : memref<1x18x326x2xbf16, #tpu.memory_space<vmem>>, vector<1x1x288x2xbf16>
    %5 = vector.shape_cast %4 : vector<1x1x288x2xbf16> to vector<288x2xbf16>
    %c0_9 = arith.constant 0 : index
    %c0_10 = arith.constant 0 : index
    %c18 = arith.constant 18 : index
    %c0_11 = arith.constant 0 : index
    %6 = vector.load %arg1[%c0_9, %c0_10, %c18, %c0_11] : memref<1x18x326x2xbf16, #tpu.memory_space<vmem>>, vector<1x1x288x2xbf16>
    %7 = vector.shape_cast %6 : vector<1x1x288x2xbf16> to vector<288x2xbf16>
    %c0_12 = arith.constant 0 : index
    %c0_13 = arith.constant 0 : index
    %c19 = arith.constant 19 : index
    %c0_14 = arith.constant 0 : index
    %8 = vector.load %arg1[%c0_12, %c0_13, %c19, %c0_14] : memref<1x18x326x2xbf16, #tpu.memory_space<vmem>>, vector<1x1x288x2xbf16>
    %9 = vector.shape_cast %8 : vector<1x1x288x2xbf16> to vector<288x2xbf16>
    %c0_15 = arith.constant 0 : index
    %c0_16 = arith.constant 0 : index
    %c20 = arith.constant 20 : index
    %c0_17 = arith.constant 0 : index
    %10 = vector.load %arg1[%c0_15, %c0_16, %c20, %c0_17] : memref<1x18x326x2xbf16, #tpu.memory_space<vmem>>, vector<1x1x288x2xbf16>
    %11 = vector.shape_cast %10 : vector<1x1x288x2xbf16> to vector<288x2xbf16>
    %c0_18 = arith.constant 0 : index
    %c0_19 = arith.constant 0 : index
    %c36 = arith.constant 36 : index
    %c0_20 = arith.constant 0 : index
    %12 = vector.load %arg1[%c0_18, %c0_19, %c36, %c0_20] : memref<1x18x326x2xbf16, #tpu.memory_space<vmem>>, vector<1x1x288x2xbf16>
    %13 = vector.shape_cast %12 : vector<1x1x288x2xbf16> to vector<288x2xbf16>
    %c0_21 = arith.constant 0 : index
    %c0_22 = arith.constant 0 : index
    %c37 = arith.constant 37 : index
    %c0_23 = arith.constant 0 : index
    %14 = vector.load %arg1[%c0_21, %c0_22, %c37, %c0_23] : memref<1x18x326x2xbf16, #tpu.memory_space<vmem>>, vector<1x1x288x2xbf16>
    %15 = vector.shape_cast %14 : vector<1x1x288x2xbf16> to vector<288x2xbf16>
    %c0_24 = arith.constant 0 : index
    %c0_25 = arith.constant 0 : index
    %c38 = arith.constant 38 : index
    %c0_26 = arith.constant 0 : index
    %16 = vector.load %arg1[%c0_24, %c0_25, %c38, %c0_26] : memref<1x18x326x2xbf16, #tpu.memory_space<vmem>>, vector<1x1x288x2xbf16>
    %17 = vector.shape_cast %16 : vector<1x1x288x2xbf16> to vector<288x2xbf16>
    %18 = tpu.concatenate %1, %3, %5, %7, %9, %11, %13, %15, %17 in 1 : vector<288x2xbf16>, vector<288x2xbf16>, vector<288x2xbf16>, vector<288x2xbf16>, vector<288x2xbf16>, vector<288x2xbf16>, vector<288x2xbf16>, vector<288x2xbf16>, vector<288x2xbf16> -> vector<288x18xbf16>
    %19 = vector.shape_cast %18 : vector<288x18xbf16> to vector<1x288x18xbf16>
    %c0_27 = arith.constant 0 : index
    %c0_28 = arith.constant 0 : index
    %c0_29 = arith.constant 0 : index
    %20 = vector.load %arg5[%c0_27, %c0_28, %c0_29] : memref<3x288x18xbf16, #tpu.memory_space<vmem>>, vector<1x288x18xbf16>
    tpu.vector_store %arg5[%c0_27, %c0_28, %c0_29], %19 {strides = array<i32>} : memref<3x288x18xbf16, #tpu.memory_space<vmem>>, vector<1x288x18xbf16>,
    %c0_30 = arith.constant 0 : index
    %c1_31 = arith.constant 1 : index
    %c0_32 = arith.constant 0 : index
    %c0_33 = arith.constant 0 : index
    %21 = vector.load %arg1[%c0_30, %c1_31, %c0_32, %c0_33] : memref<1x18x326x2xbf16, #tpu.memory_space<vmem>>, vector<1x1x288x2xbf16>
    %22 = vector.shape_cast %21 : vector<1x1x288x2xbf16> to vector<288x2xbf16>
    %c0_34 = arith.constant 0 : index
    %c1_35 = arith.constant 1 : index
    %c1_36 = arith.constant 1 : index
    %c0_37 = arith.constant 0 : index
    %23 = vector.load %arg1[%c0_34, %c1_35, %c1_36, %c0_37] : memref<1x18x326x2xbf16, #tpu.memory_space<vmem>>, vector<1x1x288x2xbf16>
    %24 = vector.shape_cast %23 : vector<1x1x288x2xbf16> to vector<288x2xbf16>
    %c0_38 = arith.constant 0 : index
    %c1_39 = arith.constant 1 : index
    %c2_40 = arith.constant 2 : index
    %c0_41 = arith.constant 0 : index
    %25 = vector.load %arg1[%c0_38, %c1_39, %c2_40, %c0_41] : memref<1x18x326x2xbf16, #tpu.memory_space<vmem>>, vector<1x1x288x2xbf16>
    %26 = vector.shape_cast %25 : vector<1x1x288x2xbf16> to vector<288x2xbf16>
    %c0_42 = arith.constant 0 : index
    %c1_43 = arith.constant 1 : index
    %c18_44 = arith.constant 18 : index
    %c0_45 = arith.constant 0 : index
    %27 = vector.load %arg1[%c0_42, %c1_43, %c18_44, %c0_45] : memref<1x18x326x2xbf16, #tpu.memory_space<vmem>>, vector<1x1x288x2xbf16>
    %28 = vector.shape_cast %27 : vector<1x1x288x2xbf16> to vector<288x2xbf16>
    %c0_46 = arith.constant 0 : index
    %c1_47 = arith.constant 1 : index
    %c19_48 = arith.constant 19 : index
    %c0_49 = arith.constant 0 : index
    %29 = vector.load %arg1[%c0_46, %c1_47, %c19_48, %c0_49] : memref<1x18x326x2xbf16, #tpu.memory_space<vmem>>, vector<1x1x288x2xbf16>
    %30 = vector.shape_cast %29 : vector<1x1x288x2xbf16> to vector<288x2xbf16>
    %c0_50 = arith.constant 0 : index
    %c1_51 = arith.constant 1 : index
    %c20_52 = arith.constant 20 : index
    %c0_53 = arith.constant 0 : index
    %31 = vector.load %arg1[%c0_50, %c1_51, %c20_52, %c0_53] : memref<1x18x326x2xbf16, #tpu.memory_space<vmem>>, vector<1x1x288x2xbf16>
    %32 = vector.shape_cast %31 : vector<1x1x288x2xbf16> to vector<288x2xbf16>
    %c0_54 = arith.constant 0 : index
    %c1_55 = arith.constant 1 : index
    %c36_56 = arith.constant 36 : index
    %c0_57 = arith.constant 0 : index
    %33 = vector.load %arg1[%c0_54, %c1_55, %c36_56, %c0_57] : memref<1x18x326x2xbf16, #tpu.memory_space<vmem>>, vector<1x1x288x2xbf16>
    %34 = vector.shape_cast %33 : vector<1x1x288x2xbf16> to vector<288x2xbf16>
    %c0_58 = arith.constant 0 : index
    %c1_59 = arith.constant 1 : index
    %c37_60 = arith.constant 37 : index
    %c0_61 = arith.constant 0 : index
    %35 = vector.load %arg1[%c0_58, %c1_59, %c37_60, %c0_61] : memref<1x18x326x2xbf16, #tpu.memory_space<vmem>>, vector<1x1x288x2xbf16>
    %36 = vector.shape_cast %35 : vector<1x1x288x2xbf16> to vector<288x2xbf16>
    %c0_62 = arith.constant 0 : index
    %c1_63 = arith.constant 1 : index
    %c38_64 = arith.constant 38 : index
    %c0_65 = arith.constant 0 : index
    %37 = vector.load %arg1[%c0_62, %c1_63, %c38_64, %c0_65] : memref<1x18x326x2xbf16, #tpu.memory_space<vmem>>, vector<1x1x288x2xbf16>
    %38 = vector.shape_cast %37 : vector<1x1x288x2xbf16> to vector<288x2xbf16>
    %39 = tpu.concatenate %22, %24, %26, %28, %30, %32, %34, %36, %38 in 1 : vector<288x2xbf16>, vector<288x2xbf16>, vector<288x2xbf16>, vector<288x2xbf16>, vector<288x2xbf16>, vector<288x2xbf16>, vector<288x2xbf16>, vector<288x2xbf16>, vector<288x2xbf16> -> vector<288x18xbf16>
    %40 = vector.shape_cast %39 : vector<288x18xbf16> to vector<1x288x18xbf16>
    %c1_66 = arith.constant 1 : index
    %c0_67 = arith.constant 0 : index
    %c0_68 = arith.constant 0 : index
    %41 = vector.load %arg5[%c1_66, %c0_67, %c0_68] : memref<3x288x18xbf16, #tpu.memory_space<vmem>>, vector<1x288x18xbf16>
    tpu.vector_store %arg5[%c1_66, %c0_67, %c0_68], %40 {strides = array<i32>} : memref<3x288x18xbf16, #tpu.memory_space<vmem>>, vector<1x288x18xbf16>,
    %cst = arith.constant 0.000000e+00 : f32
    %42 = vector.broadcast %cst : f32 to vector<1x4xf32>
    %c0_i32 = arith.constant 0 : i32
    %c16_i32 = arith.constant 16 : i32
    %43 = arith.addi %c0_i32, %c16_i32 : i32
    %c1_i32 = arith.constant 1 : i32
    %44:2 = scf.for %arg7 = %c0_i32 to %43 step %c1_i32 iter_args(%arg8 = %42, %arg9 = %42) -> (vector<1x4xf32>, vector<1x4xf32>)  : i32 {
      %c2_i32 = arith.constant 2 : i32
      %57 = arith.addi %arg7, %c2_i32 : i32
      %c0_78 = arith.constant 0 : index
      %58 = arith.index_cast %57 : i32 to index
      %c0_79 = arith.constant 0 : index
      %c0_80 = arith.constant 0 : index
      %59 = vector.load %arg1[%c0_78, %58, %c0_79, %c0_80] : memref<1x18x326x2xbf16, #tpu.memory_space<vmem>>, vector<1x1x288x2xbf16>
      %60 = vector.shape_cast %59 : vector<1x1x288x2xbf16> to vector<288x2xbf16>
      %c0_81 = arith.constant 0 : index
      %61 = arith.index_cast %57 : i32 to index
      %c1_82 = arith.constant 1 : index
      %c0_83 = arith.constant 0 : index
      %62 = vector.load %arg1[%c0_81, %61, %c1_82, %c0_83] : memref<1x18x326x2xbf16, #tpu.memory_space<vmem>>, vector<1x1x288x2xbf16>
      %63 = vector.shape_cast %62 : vector<1x1x288x2xbf16> to vector<288x2xbf16>
      %c0_84 = arith.constant 0 : index
      %64 = arith.index_cast %57 : i32 to index
      %c2_85 = arith.constant 2 : index
      %c0_86 = arith.constant 0 : index
      %65 = vector.load %arg1[%c0_84, %64, %c2_85, %c0_86] : memref<1x18x326x2xbf16, #tpu.memory_space<vmem>>, vector<1x1x288x2xbf16>
      %66 = vector.shape_cast %65 : vector<1x1x288x2xbf16> to vector<288x2xbf16>
      %c0_87 = arith.constant 0 : index
      %67 = arith.index_cast %57 : i32 to index
      %c18_88 = arith.constant 18 : index
      %c0_89 = arith.constant 0 : index
      %68 = vector.load %arg1[%c0_87, %67, %c18_88, %c0_89] : memref<1x18x326x2xbf16, #tpu.memory_space<vmem>>, vector<1x1x288x2xbf16>
      %69 = vector.shape_cast %68 : vector<1x1x288x2xbf16> to vector<288x2xbf16>
      %c0_90 = arith.constant 0 : index
      %70 = arith.index_cast %57 : i32 to index
      %c19_91 = arith.constant 19 : index
      %c0_92 = arith.constant 0 : index
      %71 = vector.load %arg1[%c0_90, %70, %c19_91, %c0_92] : memref<1x18x326x2xbf16, #tpu.memory_space<vmem>>, vector<1x1x288x2xbf16>
      %72 = vector.shape_cast %71 : vector<1x1x288x2xbf16> to vector<288x2xbf16>
      %c0_93 = arith.constant 0 : index
      %73 = arith.index_cast %57 : i32 to index
      %c20_94 = arith.constant 20 : index
      %c0_95 = arith.constant 0 : index
      %74 = vector.load %arg1[%c0_93, %73, %c20_94, %c0_95] : memref<1x18x326x2xbf16, #tpu.memory_space<vmem>>, vector<1x1x288x2xbf16>
      %75 = vector.shape_cast %74 : vector<1x1x288x2xbf16> to vector<288x2xbf16>
      %c0_96 = arith.constant 0 : index
      %76 = arith.index_cast %57 : i32 to index
      %c36_97 = arith.constant 36 : index
      %c0_98 = arith.constant 0 : index
      %77 = vector.load %arg1[%c0_96, %76, %c36_97, %c0_98] : memref<1x18x326x2xbf16, #tpu.memory_space<vmem>>, vector<1x1x288x2xbf16>
      %78 = vector.shape_cast %77 : vector<1x1x288x2xbf16> to vector<288x2xbf16>
      %c0_99 = arith.constant 0 : index
      %79 = arith.index_cast %57 : i32 to index
      %c37_100 = arith.constant 37 : index
      %c0_101 = arith.constant 0 : index
      %80 = vector.load %arg1[%c0_99, %79, %c37_100, %c0_101] : memref<1x18x326x2xbf16, #tpu.memory_space<vmem>>, vector<1x1x288x2xbf16>
      %81 = vector.shape_cast %80 : vector<1x1x288x2xbf16> to vector<288x2xbf16>
      %c0_102 = arith.constant 0 : index
      %82 = arith.index_cast %57 : i32 to index
      %c38_103 = arith.constant 38 : index
      %c0_104 = arith.constant 0 : index
      %83 = vector.load %arg1[%c0_102, %82, %c38_103, %c0_104] : memref<1x18x326x2xbf16, #tpu.memory_space<vmem>>, vector<1x1x288x2xbf16>
      %84 = vector.shape_cast %83 : vector<1x1x288x2xbf16> to vector<288x2xbf16>
      %85 = tpu.concatenate %60, %63, %66, %69, %72, %75, %78, %81, %84 in 1 : vector<288x2xbf16>, vector<288x2xbf16>, vector<288x2xbf16>, vector<288x2xbf16>, vector<288x2xbf16>, vector<288x2xbf16>, vector<288x2xbf16>, vector<288x2xbf16>, vector<288x2xbf16> -> vector<288x18xbf16>
      %86 = vector.shape_cast %85 : vector<288x18xbf16> to vector<1x288x18xbf16>
      %c3_i32 = arith.constant 3 : i32
      %c0_i32_105 = arith.constant 0 : i32
      %87 = arith.cmpi eq, %c3_i32, %c0_i32_105 : i32
      %c1_i32_106 = arith.constant 1 : i32
      %88 = arith.select %87, %c1_i32_106, %c3_i32 : i32
      %89 = arith.remsi %57, %88 : i32
      %c0_i32_107 = arith.constant 0 : i32
      %90 = arith.cmpi ne, %89, %c0_i32_107 : i32
      %c0_i32_108 = arith.constant 0 : i32
      %91 = arith.cmpi slt, %89, %c0_i32_108 : i32
      %c0_i32_109 = arith.constant 0 : i32
      %92 = arith.cmpi slt, %88, %c0_i32_109 : i32
      %93 = arith.xori %91, %92 : i1
      %94 = arith.andi %93, %90 : i1
      %95 = arith.addi %89, %88 : i32
      %96 = arith.select %94, %95, %89 : i32
      %97 = arith.index_cast %96 : i32 to index
      %c0_110 = arith.constant 0 : index
      %c0_111 = arith.constant 0 : index
      %98 = vector.load %arg5[%97, %c0_110, %c0_111] : memref<3x288x18xbf16, #tpu.memory_space<vmem>>, vector<1x288x18xbf16>
      tpu.vector_store %arg5[%97, %c0_110, %c0_111], %86 {strides = array<i32>} : memref<3x288x18xbf16, #tpu.memory_space<vmem>>, vector<1x288x18xbf16>,
      %c3_i32_112 = arith.constant 3 : i32
      %99 = arith.remsi %arg7, %c3_i32_112 : i32
      %100 = arith.index_cast %99 : i32 to index
      %c0_113 = arith.constant 0 : index
      %c0_114 = arith.constant 0 : index
      %101 = vector.load %arg5[%100, %c0_113, %c0_114] : memref<3x288x18xbf16, #tpu.memory_space<vmem>>, vector<1x288x18xbf16>
      %102 = vector.shape_cast %101 : vector<1x288x18xbf16> to vector<288x18xbf16>
      %c0_115 = arith.constant 0 : index
      %c0_116 = arith.constant 0 : index
      %c0_117 = arith.constant 0 : index
      %103 = vector.load %arg2[%c0_115, %c0_116, %c0_117] : memref<3x18x4xbf16, #tpu.memory_space<vmem>>, vector<1x18x4xbf16>
      %104 = vector.shape_cast %103 : vector<1x18x4xbf16> to vector<18x4xbf16>
      %cst_118 = arith.constant dense<0.000000e+00> : vector<288x4xf32>
      %105 = tpu.matmul %102, %104, %cst_118 {dimension_numbers = #tpu.dot_dimension_numbers<[1], [0], [0], [1], [0, 0, 1, 1], [], []>} : vector<288x18xbf16>, vector<18x4xbf16>, vector<288x4xf32> -> vector<288x4xf32>
      %c1_i32_119 = arith.constant 1 : i32
      %106 = arith.addi %arg7, %c1_i32_119 : i32
      %c3_i32_120 = arith.constant 3 : i32
      %107 = arith.remsi %106, %c3_i32_120 : i32
      %108 = arith.index_cast %107 : i32 to index
      %c0_121 = arith.constant 0 : index
      %c0_122 = arith.constant 0 : index
      %109 = vector.load %arg5[%108, %c0_121, %c0_122] : memref<3x288x18xbf16, #tpu.memory_space<vmem>>, vector<1x288x18xbf16>
      %110 = vector.shape_cast %109 : vector<1x288x18xbf16> to vector<288x18xbf16>
      %c1_123 = arith.constant 1 : index
      %c0_124 = arith.constant 0 : index
      %c0_125 = arith.constant 0 : index
      %111 = vector.load %arg2[%c1_123, %c0_124, %c0_125] : memref<3x18x4xbf16, #tpu.memory_space<vmem>>, vector<1x18x4xbf16>
      %112 = vector.shape_cast %111 : vector<1x18x4xbf16> to vector<18x4xbf16>
      %cst_126 = arith.constant dense<0.000000e+00> : vector<288x4xf32>
      %113 = tpu.matmul %110, %112, %cst_126 {dimension_numbers = #tpu.dot_dimension_numbers<[1], [0], [0], [1], [0, 0, 1, 1], [], []>} : vector<288x18xbf16>, vector<18x4xbf16>, vector<288x4xf32> -> vector<288x4xf32>
      %114 = arith.addf %105, %113 : vector<288x4xf32>
      %c2_i32_127 = arith.constant 2 : i32
      %115 = arith.addi %arg7, %c2_i32_127 : i32
      %c3_i32_128 = arith.constant 3 : i32
      %116 = arith.remsi %115, %c3_i32_128 : i32
      %117 = arith.index_cast %116 : i32 to index
      %c0_129 = arith.constant 0 : index
      %c0_130 = arith.constant 0 : index
      %118 = vector.load %arg5[%117, %c0_129, %c0_130] : memref<3x288x18xbf16, #tpu.memory_space<vmem>>, vector<1x288x18xbf16>
      %119 = vector.shape_cast %118 : vector<1x288x18xbf16> to vector<288x18xbf16>
      %c2_131 = arith.constant 2 : index
      %c0_132 = arith.constant 0 : index
      %c0_133 = arith.constant 0 : index
      %120 = vector.load %arg2[%c2_131, %c0_132, %c0_133] : memref<3x18x4xbf16, #tpu.memory_space<vmem>>, vector<1x18x4xbf16>
      %121 = vector.shape_cast %120 : vector<1x18x4xbf16> to vector<18x4xbf16>
      %cst_134 = arith.constant dense<0.000000e+00> : vector<288x4xf32>
      %122 = tpu.matmul %119, %121, %cst_134 {dimension_numbers = #tpu.dot_dimension_numbers<[1], [0], [0], [1], [0, 0, 1, 1], [], []>} : vector<288x18xbf16>, vector<18x4xbf16>, vector<288x4xf32> -> vector<288x4xf32>
      %123 = arith.addf %114, %122 : vector<288x4xf32>
      %124 = vector.shape_cast %123 : vector<288x4xf32> to vector<1x288x4xf32>
      %125 = arith.index_cast %arg7 : i32 to index
      %c0_135 = arith.constant 0 : index
      %c0_136 = arith.constant 0 : index
      %126 = vector.load %arg6[%125, %c0_135, %c0_136] : memref<16x288x4xf32, #tpu.memory_space<vmem>>, vector<1x288x4xf32>
      tpu.vector_store %arg6[%125, %c0_135, %c0_136], %124 {strides = array<i32>} : memref<16x288x4xf32, #tpu.memory_space<vmem>>, vector<1x288x4xf32>,
      %c0_137 = arith.constant 0 : index
      %c0_138 = arith.constant 0 : index
      %127 = vector.load %arg3[%c0_137, %c0_138] : memref<288x1xf32, #tpu.memory_space<vmem>>, vector<288x1xf32>
      %128 = vector.broadcast %127 : vector<288x1xf32> to vector<288x4xf32>
      %129 = arith.mulf %123, %128 : vector<288x4xf32>
      %cst_139 = arith.constant dense<0.000000e+00> : vector<4xf32>
      %130 = vector.multi_reduction <add>, %129, %cst_139 [0] : vector<288x4xf32> to vector<4xf32>
      %131 = vector.shape_cast %130 : vector<4xf32> to vector<1x4xf32>
      %132 = arith.addf %arg8, %131 : vector<1x4xf32>
      %133 = arith.mulf %129, %123 : vector<288x4xf32>
      %cst_140 = arith.constant dense<0.000000e+00> : vector<4xf32>
      %134 = vector.multi_reduction <add>, %133, %cst_140 [0] : vector<288x4xf32> to vector<4xf32>
      %135 = vector.shape_cast %134 : vector<4xf32> to vector<1x4xf32>
      %136 = arith.addf %arg9, %135 : vector<1x4xf32>
      scf.yield %132, %136 : vector<1x4xf32>, vector<1x4xf32>
    }
    %c16_i32_69 = arith.constant 16 : i32
    %cst_70 = arith.constant 2.44140625E-4 : f32
    %45 = vector.broadcast %cst_70 : f32 to vector<1x4xf32>
    %46 = arith.mulf %44#0, %45 : vector<1x4xf32>
    %cst_71 = arith.constant 2.44140625E-4 : f32
    %47 = vector.broadcast %cst_71 : f32 to vector<1x4xf32>
    %48 = arith.mulf %44#1, %47 : vector<1x4xf32>
    %49 = arith.mulf %46, %46 : vector<1x4xf32>
    %50 = arith.subf %48, %49 : vector<1x4xf32>
    %cst_72 = arith.constant 0.000000e+00 : f32
    %51 = vector.broadcast %cst_72 : f32 to vector<1x4xf32>
    %52 = arith.maximumf %50, %51 : vector<1x4xf32>
    %cst_73 = arith.constant 9.99999974E-6 : f32
    %53 = vector.broadcast %cst_73 : f32 to vector<1x4xf32>
    %54 = arith.addf %52, %53 : vector<1x4xf32>
    %55 = math.rsqrt %54 : vector<1x4xf32>
    %c0_i32_74 = arith.constant 0 : i32
    %c16_i32_75 = arith.constant 16 : i32
    %56 = arith.addi %c0_i32_74, %c16_i32_75 : i32
    %c1_i32_76 = arith.constant 1 : i32
    scf.for %arg7 = %c0_i32_74 to %56 step %c1_i32_76  : i32 {
      %57 = arith.index_cast %arg7 : i32 to index
      %c0_78 = arith.constant 0 : index
      %c0_79 = arith.constant 0 : index
      %58 = vector.load %arg6[%57, %c0_78, %c0_79] : memref<16x288x4xf32, #tpu.memory_space<vmem>>, vector<1x288x4xf32>
      %59 = vector.shape_cast %46 : vector<1x4xf32> to vector<1x1x4xf32>
      %60 = vector.broadcast %59 : vector<1x1x4xf32> to vector<1x288x4xf32>
      %61 = arith.subf %58, %60 : vector<1x288x4xf32>
      %62 = vector.shape_cast %55 : vector<1x4xf32> to vector<1x1x4xf32>
      %63 = vector.broadcast %62 : vector<1x1x4xf32> to vector<1x288x4xf32>
      %64 = arith.mulf %61, %63 : vector<1x288x4xf32>
      %cst_80 = arith.constant 0.000000e+00 : f32
      %65 = vector.broadcast %cst_80 : f32 to vector<1x288x4xf32>
      %66 = arith.cmpf oge, %64, %65 : vector<1x288x4xf32>
      %cst_81 = arith.constant 2.000000e-01 : f32
      %67 = vector.broadcast %cst_81 : f32 to vector<1x288x4xf32>
      %68 = arith.mulf %67, %64 : vector<1x288x4xf32>
      %69 = arith.select %66, %64, %68 : vector<1x288x4xi1>, vector<1x288x4xf32>
      %70 = arith.truncf %69 : vector<1x288x4xf32> to vector<1x288x4xbf16>
      %c0_82 = arith.constant 0 : index
      %71 = arith.index_cast %arg7 : i32 to index
      %c0_83 = arith.constant 0 : index
      %c0_84 = arith.constant 0 : index
      %72 = vector.load %arg4[%c0_82, %71, %c0_83, %c0_84] : memref<1x16x288x4xbf16, #tpu.memory_space<vmem>>, vector<1x1x288x4xbf16>
      %73 = vector.shape_cast %72 : vector<1x1x288x4xbf16> to vector<1x288x4xbf16>
      %74 = vector.shape_cast %70 : vector<1x288x4xbf16> to vector<1x1x288x4xbf16>
      tpu.vector_store %arg4[%c0_82, %71, %c0_83, %c0_84], %74 {strides = array<i32>} : memref<1x16x288x4xbf16, #tpu.memory_space<vmem>>, vector<1x1x288x4xbf16>,
    }
    %c16_i32_77 = arith.constant 16 : i32
    return
  }
  func.func @transform_0(%arg0: i32) -> (i32, i32, i32, i32) {
    %c0_i32 = arith.constant 0 : i32
    %c0_i32_0 = arith.constant 0 : i32
    %c0_i32_1 = arith.constant 0 : i32
    %c0_i32_2 = arith.constant 0 : i32
    return %arg0, %c0_i32, %c0_i32_0, %c0_i32_1 : i32, i32, i32, i32
  }
  func.func @transform_1(%arg0: i32) -> (i32, i32, i32) {
    %c0_i32 = arith.constant 0 : i32
    %c0_i32_0 = arith.constant 0 : i32
    %c0_i32_1 = arith.constant 0 : i32
    %c0_i32_2 = arith.constant 0 : i32
    return %c0_i32, %c0_i32_0, %c0_i32_1 : i32, i32, i32
  }
  func.func @transform_2(%arg0: i32) -> (i32, i32) {
    %c0_i32 = arith.constant 0 : i32
    %c0_i32_0 = arith.constant 0 : i32
    %c0_i32_1 = arith.constant 0 : i32
    return %c0_i32, %c0_i32_0 : i32, i32
  }
  func.func @transform_3(%arg0: i32) -> (i32, i32, i32, i32) {
    %c0_i32 = arith.constant 0 : i32
    %c0_i32_0 = arith.constant 0 : i32
    %c0_i32_1 = arith.constant 0 : i32
    %c0_i32_2 = arith.constant 0 : i32
    return %arg0, %c0_i32, %c0_i32_0, %c0_i32_1 : i32, i32, i32, i32
  }
}

</mosaic_0001>

<llo_original>
// kernel: tpu_custom_call.1
$region0: #{tpu_custom_call.1}
  #allocation0 [shape = 'u32[]', space=smem, size = 0x4, offset = 0x4, fixed_abs, tag = 'smem constant byte address 0x4 - core index']
  #allocation1 [shape = 'u32[144,128]{1,0:T(1,128)}', space=vmem, size = 0x12000, scoped, tag = 'internal scratch']
  #allocation2 [shape = 'bf16[3,288,18]{2,1,0:T(8,128)(2,1)}', space=vmem, size = 0x36000, scoped, tag = 'scratch operand']
  #allocation3 [shape = 'f32[16,288,4]{2,1,0:T(8,128)}', space=vmem, size = 0x240000, scoped, tag = 'scratch operand']
  %s0 = inlined_call_operand.vmem [shape: bf16[2,18,326,2], index: 0, kind: input, shape index: {}]
  %s1 = inlined_call_operand.vmem [shape: bf16[3,18,4], index: 1, kind: input, shape index: {}]
  %s2 = inlined_call_operand.vmem [shape: f32[288,1], index: 2, kind: input, shape index: {}]
  %s3 = inlined_call_operand.vmem [shape: bf16[2,16,288,4], index: 3, kind: output, shape index: {}]
  %s4 = sld [smem:[#allocation0]]
  $region59: #{tpu_custom_call.1} parent=0
    _
  %s6 = ssub.s32 1, %s4
  %s7 = scalar_select 0, %s6, %s4
  loop: start=0, step=1, limit=4
  $region2: #{tpu_custom_call.1} parent=0 // loop_pre_header
    _
  $region3: #{tpu_custom_call.1} parent=0 // loop_header
    %s9 = sphi 0, %s13
    %p10 = scmp.ge.s32.totalorder %s9, 4
    %s19 = sphi 0, %s21
    %s22 = sphi 0, %s19
    %s23 = sphi 0, %s22
    %s39 = sphi 0, %s23
    %s43 = sphi 0, %s43
    %s45 = sphi 0, %s43
    %s46 = sphi 0, %s45
    %s60 = sphi 0, %s46
    %s64 = sphi 0, %s64
    %s66 = sphi 0, %s64
    %s67 = sphi 0, %s66
    %s81 = sphi 0, %s67
    %s87 = sphi 0, %s89
    %s90 = sphi 0, %s87
    %s91 = sphi 0, %s90
    %s107 = sphi 0, %s91
  $region4: #{tpu_custom_call.1} parent=0 // loop_header_branch
    %12 = sbr.rel (%p10) target = $region8
  $region5: #{tpu_custom_call.1} parent=0 // loop_body
    %s14 = ssub.s32 %s9, 1
    %s15 = ssub.s32 %s9, 2
    %s16 = sadd.s32 %s9, 1
    %s17 = ssub.s32 %s9, %s16
    %p18 = scmp.eq.s32.totalorder %s17, 0
    %s20 = sadd.s32 %s19, 1
    %s21 = scalar_select %p18, %s19, %s20
    %p24 = pneg %p18
    %p25 = scmp.eq.s32.totalorder %s9, 1
    %p26 = por %p24, %p25
    %p27 = scmp.ne.s32.totalorder %s19, %s22
    %p28 = scmp.eq.s32.totalorder %s9, 0
    %p29 = por %p27, %p28
    %p30 = scmp.ne.s32.totalorder %s19, %s22
    %p31 = scmp.eq.s32.totalorder %s14, 1
    %p32 = por %p30, %p31
    %p33 = scmp.ne.s32.totalorder %s22, %s23
    %p34 = scmp.eq.s32.totalorder %s14, 0
    %p35 = por %p33, %p34
    %p36 = scmp.ne.s32.totalorder %s22, %s23
    %p37 = scmp.eq.s32.totalorder %s15, 1
    %p38 = por %p36, %p37
    %p40 = scmp.ne.s32.totalorder %s23, %s39
    %p41 = scmp.eq.s32.totalorder %s15, 0
    %p42 = por %p40, %p41
    %s44 = sadd.s32 %s43, 1
    %p47 = scmp.eq.s32.totalorder %s9, 1
    %p48 = scmp.ne.s32.totalorder %s43, %s45
    %p49 = scmp.eq.s32.totalorder %s9, 0
    %p50 = por %p48, %p49
    %p51 = scmp.ne.s32.totalorder %s43, %s45
    %p52 = scmp.eq.s32.totalorder %s14, 1
    %p53 = por %p51, %p52
    %p54 = scmp.ne.s32.totalorder %s45, %s46
    %p55 = scmp.eq.s32.totalorder %s14, 0
    %p56 = por %p54, %p55
    %p57 = scmp.ne.s32.totalorder %s45, %s46
    %p58 = scmp.eq.s32.totalorder %s15, 1
    %p59 = por %p57, %p58
    %p61 = scmp.ne.s32.totalorder %s46, %s60
    %p62 = scmp.eq.s32.totalorder %s15, 0
    %p63 = por %p61, %p62
    %s65 = sadd.s32 %s64, 1
    %p68 = scmp.eq.s32.totalorder %s9, 1
    %p69 = scmp.ne.s32.totalorder %s64, %s66
    %p70 = scmp.eq.s32.totalorder %s9, 0
    %p71 = por %p69, %p70
    %p72 = scmp.ne.s32.totalorder %s64, %s66
    %p73 = scmp.eq.s32.totalorder %s14, 1
    %p74 = por %p72, %p73
    %p75 = scmp.ne.s32.totalorder %s66, %s67
    %p76 = scmp.eq.s32.totalorder %s14, 0
    %p77 = por %p75, %p76
    %p78 = scmp.ne.s32.totalorder %s66, %s67
    %p79 = scmp.eq.s32.totalorder %s15, 1
    %p80 = por %p78, %p79
    %p82 = scmp.ne.s32.totalorder %s67, %s81
    %p83 = scmp.eq.s32.totalorder %s15, 0
    %p84 = por %p82, %p83
    %s85 = ssub.s32 %s9, %s16
    %p86 = scmp.eq.s32.totalorder %s85, 0
    %s88 = sadd.s32 %s87, 1
    %s89 = scalar_select %p86, %s87, %s88
    %p92 = pneg %p86
    %p93 = scmp.eq.s32.totalorder %s9, 1
    %p94 = por %p92, %p93
    %p95 = scmp.ne.s32.totalorder %s87, %s90
    %p96 = scmp.eq.s32.totalorder %s9, 0
    %p97 = por %p95, %p96
    %p98 = scmp.ne.s32.totalorder %s87, %s90
    %p99 = scmp.eq.s32.totalorder %s14, 1
    %p100 = por %p98, %p99
    %p101 = scmp.ne.s32.totalorder %s90, %s91
    %p102 = scmp.eq.s32.totalorder %s14, 0
    %p103 = por %p101, %p102
    %p104 = scmp.ne.s32.totalorder %s90, %s91
    %p105 = scmp.eq.s32.totalorder %s15, 1
    %p106 = por %p104, %p105
    %p108 = scmp.ne.s32.totalorder %s91, %s107
    %p109 = scmp.eq.s32.totalorder %s15, 0
    %p110 = por %p108, %p109
    %p111 = scmp.le.s32.totalorder 1, %s9
    %p112 = scmp.lt.s32.totalorder %s9, 3
    %p113 = pnand %p111, %p112
    %p114 = pneg %p113
    // Predicated region
    $region9: #{tpu_custom_call.1} parent=5 // pred_check
      _
    $region10: #{tpu_custom_call.1} parent=5 // pred_check_branch
      %116 = sbr.rel (%p113) target = $region12
    $region11: #{tpu_custom_call.1} parent=5 // pred_region
      %s117 = ssub.s32 %s9, 1
      // Predicated region
      $region13: #{tpu_custom_call.1} parent=11 // pred_check
        %p118 = pneg %p56
      $region14: #{tpu_custom_call.1} parent=11 // pred_check_branch
        %120 = sbr.rel (%p118) target = $region16
      $region15: #{tpu_custom_call.1} parent=11 // pred_region
        _
      $region16: #{tpu_custom_call.1} parent=11 // pred_fallthru
        _
      // Predicated region
      $region17: #{tpu_custom_call.1} parent=11 // pred_check
        %p121 = pneg %p77
      $region18: #{tpu_custom_call.1} parent=11 // pred_check_branch
        %123 = sbr.rel (%p121) target = $region20
      $region19: #{tpu_custom_call.1} parent=11 // pred_region
        _
      $region20: #{tpu_custom_call.1} parent=11 // pred_fallthru
        _
    $region12: #{tpu_custom_call.1} parent=5 // pred_fallthru
      _
    %p124 = scmp.lt.s32.totalorder %s9, 2
    // Predicated region
    $region21: #{tpu_custom_call.1} parent=5 // pred_check
      %p125 = pneg %p124
    $region22: #{tpu_custom_call.1} parent=5 // pred_check_branch
      %127 = sbr.rel (%p125) target = $region24
    $region23: #{tpu_custom_call.1} parent=5 // pred_region
      // Predicated region
      $region25: #{tpu_custom_call.1} parent=23 // pred_check
        %p128 = pneg %p29
      $region26: #{tpu_custom_call.1} parent=23 // pred_check_branch
        %130 = sbr.rel (%p128) target = $region28
      $region27: #{tpu_custom_call.1} parent=23 // pred_region
        %p131 = scmp.lt.s32.totalorder %s9, 1
        %s132 = scalar_select %p131, %s9, 1
        %s133 = smul.addr %s132, 738
        %s134 = smul.addr %s133, 4
        %s135 = scalar_lea.vmem %s0, %s134
      $region28: #{tpu_custom_call.1} parent=23 // pred_fallthru
        _
    $region24: #{tpu_custom_call.1} parent=5 // pred_fallthru
      _
    %p136 = scmp.le.s32.totalorder 1, %s9
    %p137 = scmp.lt.s32.totalorder %s9, 3
    %p138 = pnand %p136, %p137
    %p139 = pneg %p138
    // Predicated region
    $region29: #{tpu_custom_call.1} parent=5 // pred_check
      _
    $region30: #{tpu_custom_call.1} parent=5 // pred_check_branch
      %141 = sbr.rel (%p138) target = $region32
    $region31: #{tpu_custom_call.1} parent=5 // pred_region
      %s142 = ssub.s32 %s9, 1
      %p143 = scmp.lt.s32.totalorder %s14, 1
      %s144 = scalar_select %p143, %s14, 1
      %s145 = smul.addr %s144, 738
      %s146 = smul.addr %s145, 4
      %s147 = scalar_lea.vmem %s0, %s146
      %p148 = pneg %p35
      %p149 = pneg %p32
      %p150 = pneg %p56
      %p151 = pneg %p53
      %p152 = pneg %p77
      %p153 = pneg %p74
      %p154 = pneg %p103
      %p155 = pneg %p100
      %p156 = scmp.lt.s32.totalorder %s14, 1
      %s157 = scalar_select %p156, %s14, 1
      %s158 = smul.addr %s157, 576
      %s159 = smul.addr %s158, 4
      %s160 = scalar_lea.vmem %s3, %s159
      %p161 = scmp.lt.s32.totalorder %s14, 1
      %s162 = scalar_select %p161, %s14, 1
      %s163 = smul.addr %s162, 738
      %s164 = smul.addr %s163, 4
      %s165 = scalar_lea.vmem %s0, %s164
      %p166 = scmp.lt.s32.totalorder %s14, 1
      %s167 = scalar_select %p166, %s14, 1
      %s168 = smul.addr %s167, 576
      %s169 = smul.addr %s168, 4
      %s170 = scalar_lea.vmem %s3, %s169
      %v172 = vld [vmem:[%s165] sm:$0xf]
      %v173 = vld [vmem:[%s165 + $0x4] sm:$0xf]
      %v174 = vld [vmem:[%s165 + $0x8] sm:$0xf]
      %v175 = vld [vmem:[%s165 + $0xc] sm:$0xf]
      %v176 = vld [vmem:[%s165 + $0x10] sm:$0xf]
      %v177 = vld [vmem:[%s165 + $0x14] sm:$0xf]
      %v178 = vld [vmem:[%s165 + $0x18] sm:$0xf]
      %v179 = vld [vmem:[%s165 + $0x1c] sm:$0xf]
      %v180 = vld [vmem:[%s165 + $0x20] sm:$0xf]
      %v181 = vld [vmem:[%s165 + $0x24] sm:$0xf]
      %v182 = vld [vmem:[%s165 + $0x28] sm:$0xf]
      %v183 = vld [vmem:[%s165 + $0x2c] sm:$0xf]
      %v184 = vld [vmem:[%s165 + $0x30] sm:$0xf]
      %v185 = vld [vmem:[%s165 + $0x34] sm:$0xf]
      %v186 = vld [vmem:[%s165 + $0x38] sm:$0xf]
      %v187 = vld [vmem:[%s165 + $0x3c] sm:$0xf]
      %v188 = vld [vmem:[%s165 + $0x40] sm:$0xf]
      %v189 = vld [vmem:[%s165 + $0x44] sm:$0xf]
      %v190 = vld [vmem:[%s165 + $0x48] sm:$0xf]
      %v191 = vld [vmem:[%s165 + $0x4c] sm:$0xf]
      %v192 = vld [vmem:[%s165 + $0x50] sm:$0xf]
      %v193 = vld [vmem:[%s165 + $0x54] sm:$0xf]
      %v194 = vld [vmem:[%s165 + $0x58] sm:$0xf]
      %v195 = vld [vmem:[%s165 + $0x5c] sm:$0xf]
      %v196 = vld [vmem:[%s165 + $0x60] sm:$0xf]
      %v197 = vld [vmem:[%s165 + $0x64] sm:$0xf]
      %v198 = vld [vmem:[%s165 + $0x68] sm:$0xf]
      %v199 = vld [vmem:[%s165 + $0x6c] sm:$0xf]
      %v200 = vld [vmem:[%s165 + $0x70] sm:$0xf]
      %v201 = vld [vmem:[%s165 + $0x74] sm:$0xf]
      %v202 = vld [vmem:[%s165 + $0x78] sm:$0xf]
      %v203 = vld [vmem:[%s165 + $0x7c] sm:$0xf]
      %v204 = vld [vmem:[%s165 + $0x80] sm:$0xf]
      %v205 = vld [vmem:[%s165 + $0x84] sm:$0xf]
      %v206 = vld [vmem:[%s165 + $0x88] sm:$0xf]
      %v207 = vld [vmem:[%s165 + $0x8c] sm:$0xf]
      %v208 = vld [vmem:[%s165 + $0x90] sm:$0x1]
      %v209 = vld [vmem:[%s165] sm:$0xe]
      %v210 = vld [vmem:[%s165 + $0x8] sm:$0xe]
      %v211 = vld [vmem:[%s165 + $0x90] sm:$0xf]
      %v212 = vld [vmem:[%s165 + $0x94] sm:$0xf]
      %v213 = vld [vmem:[%s165 + $0x98] sm:$0x1]
      %v214 = vld [vmem:[%s165 + $0x98] sm:$0x3]
      %v215 = vld [vmem:[%s165 + $0x8] sm:$0xc]
      %v216 = vld [vmem:[%s165 + $0x10] sm:$0xc]
      %v217 = vld [vmem:[%s165 + $0x98] sm:$0xf]
      %v218 = vld [vmem:[%s165 + $0x9c] sm:$0xf]
      %v219 = vld [vmem:[%s165 + $0xa0] sm:$0x3]
      %v220 = vld [vmem:[%s165 + $0xa0] sm:$0x7]
      %v221 = vld [vmem:[%s165 + $0x10] sm:$0x8]
      %v258 = vunpack.c.l.b16 %v172
      %v259 = vunpack.c.l.b16 %v173
      %v260 = vunpack.c.l.b16 %v174
      %v261 = vunpack.c.l.b16 %v175
      %v262 = vunpack.c.l.b16 %v176
      %v263 = vunpack.c.l.b16 %v177
      %v264 = vunpack.c.l.b16 %v178
      %v265 = vunpack.c.l.b16 %v179
      %v266 = vunpack.c.l.b16 %v180
      %v267 = vunpack.c.l.b16 %v181
      %v268 = vunpack.c.l.b16 %v182
      %v269 = vunpack.c.l.b16 %v183
      %v270 = vunpack.c.l.b16 %v184
      %v271 = vunpack.c.l.b16 %v185
      %v272 = vunpack.c.l.b16 %v186
      %v273 = vunpack.c.l.b16 %v187
      %v274 = vunpack.c.l.b16 %v188
      %v275 = vunpack.c.l.b16 %v189
      %v276 = vunpack.c.l.b16 %v190
      %v277 = vunpack.c.l.b16 %v191
      %v278 = vunpack.c.l.b16 %v192
      %v279 = vunpack.c.l.b16 %v193
      %v280 = vunpack.c.l.b16 %v194
      %v281 = vunpack.c.l.b16 %v195
      %v282 = vunpack.c.l.b16 %v196
      %v283 = vunpack.c.l.b16 %v197
      %v284 = vunpack.c.l.b16 %v198
      %v285 = vunpack.c.l.b16 %v199
      %v286 = vunpack.c.l.b16 %v200
      %v287 = vunpack.c.l.b16 %v201
      %v288 = vunpack.c.l.b16 %v202
      %v289 = vunpack.c.l.b16 %v203
      %v290 = vunpack.c.l.b16 %v204
      %v291 = vunpack.c.l.b16 %v205
      %v292 = vunpack.c.l.b16 %v206
      %v293 = vunpack.c.l.b16 %v207
      %v294 = vpack.c.b16 %v259, %v258
      %v295 = vpack.c.b16 %v261, %v260
      %v296 = vpack.c.b16 %v263, %v262
      %v297 = vpack.c.b16 %v265, %v264
      %v298 = vpack.c.b16 %v267, %v266
      %v299 = vpack.c.b16 %v269, %v268
      %v300 = vpack.c.b16 %v271, %v270
      %v301 = vpack.c.b16 %v273, %v272
      %v302 = vpack.c.b16 %v275, %v274
      %v303 = vpack.c.b16 %v277, %v276
      %v304 = vpack.c.b16 %v279, %v278
      %v305 = vpack.c.b16 %v281, %v280
      %v306 = vpack.c.b16 %v283, %v282
      %v307 = vpack.c.b16 %v285, %v284
      %v308 = vpack.c.b16 %v287, %v286
      %v309 = vpack.c.b16 %v289, %v288
      %v310 = vpack.c.b16 %v291, %v290
      %v311 = vpack.c.b16 %v293, %v292
      %v313 = vunpack.c.l.b16 %v208
      %v314 = vpack.c.b16 %v313, %v313
      %vm315 = vsmask.f32 7424
      %v317 = vshrl.u32 %v294, 16
      %v319 = vshll.u32 %v294, 16
      %v321 = vrot.slane %v319, 1
      %v322 = vor.u32 %v317, %v321
      %v324 = vshll.u32 %v295, 16
      %v326 = vrot.slane %v324, 1
      %v327 = vsel %vm315, %v322, %v326
      %v328 = vshrl.u32 %v295, 16
      %v330 = vor.u32 %v328, %v326
      %v332 = vshll.u32 %v296, 16
      %v334 = vrot.slane %v332, 1
      %v335 = vsel %vm315, %v330, %v334
      %v336 = vshrl.u32 %v296, 16
      %v338 = vor.u32 %v336, %v334
      %v340 = vshll.u32 %v297, 16
      %v342 = vrot.slane %v340, 1
      %v343 = vsel %vm315, %v338, %v342
      %v344 = vshrl.u32 %v297, 16
      %v346 = vor.u32 %v344, %v342
      %v348 = vshll.u32 %v298, 16
      %v350 = vrot.slane %v348, 1
      %v351 = vsel %vm315, %v346, %v350
      %v352 = vshrl.u32 %v298, 16
      %v354 = vor.u32 %v352, %v350
      %v356 = vshll.u32 %v299, 16
      %v358 = vrot.slane %v356, 1
      %v359 = vsel %vm315, %v354, %v358
      %v360 = vshrl.u32 %v299, 16
      %v362 = vor.u32 %v360, %v358
      %v364 = vshll.u32 %v300, 16
      %v366 = vrot.slane %v364, 1
      %v367 = vsel %vm315, %v362, %v366
      %v368 = vshrl.u32 %v300, 16
      %v370 = vor.u32 %v368, %v366
      %v372 = vshll.u32 %v301, 16
      %v374 = vrot.slane %v372, 1
      %v375 = vsel %vm315, %v370, %v374
      %v376 = vshrl.u32 %v301, 16
      %v378 = vor.u32 %v376, %v374
      %v380 = vshll.u32 %v302, 16
      %v382 = vrot.slane %v380, 1
      %v383 = vsel %vm315, %v378, %v382
      %v384 = vshrl.u32 %v302, 16
      %v386 = vor.u32 %v384, %v382
      %v388 = vshll.u32 %v303, 16
      %v390 = vrot.slane %v388, 1
      %v391 = vsel %vm315, %v386, %v390
      %v392 = vshrl.u32 %v303, 16
      %v394 = vor.u32 %v392, %v390
      %v396 = vshll.u32 %v304, 16
      %v398 = vrot.slane %v396, 1
      %v399 = vsel %vm315, %v394, %v398
      %v400 = vshrl.u32 %v304, 16
      %v402 = vor.u32 %v400, %v398
      %v404 = vshll.u32 %v305, 16
      %v406 = vrot.slane %v404, 1
      %v407 = vsel %vm315, %v402, %v406
      %v408 = vshrl.u32 %v305, 16
      %v410 = vor.u32 %v408, %v406
      %v412 = vshll.u32 %v306, 16
      %v414 = vrot.slane %v412, 1
      %v415 = vsel %vm315, %v410, %v414
      %v416 = vshrl.u32 %v306, 16
      %v418 = vor.u32 %v416, %v414
      %v420 = vshll.u32 %v307, 16
      %v422 = vrot.slane %v420, 1
      %v423 = vsel %vm315, %v418, %v422
      %v424 = vshrl.u32 %v307, 16
      %v426 = vor.u32 %v424, %v422
      %v428 = vshll.u32 %v308, 16
      %v430 = vrot.slane %v428, 1
      %v431 = vsel %vm315, %v426, %v430
      %v432 = vshrl.u32 %v308, 16
      %v434 = vor.u32 %v432, %v430
      %v436 = vshll.u32 %v309, 16
      %v438 = vrot.slane %v436, 1
      %v439 = vsel %vm315, %v434, %v438
      %v440 = vshrl.u32 %v309, 16
      %v442 = vor.u32 %v440, %v438
      %v444 = vshll.u32 %v310, 16
      %v446 = vrot.slane %v444, 1
      %v447 = vsel %vm315, %v442, %v446
      %v448 = vshrl.u32 %v310, 16
      %v450 = vor.u32 %v448, %v446
      %v452 = vshll.u32 %v311, 16
      %v454 = vrot.slane %v452, 1
      %v455 = vsel %vm315, %v450, %v454
      %v456 = vshrl.u32 %v311, 16
      %v458 = vor.u32 %v456, %v454
      %v460 = vshll.u32 %v314, 16
      %v462 = vrot.slane %v460, 1
      %v463 = vsel %vm315, %v458, %v462
      %464 = vrot.lane.b32.xlu0 %v327, 2
      %v465 = vpop.permute.xlu0 %464
      %466 = vrot.lane.b32.xlu0 %v335, 2
      %v467 = vpop.permute.xlu0 %466
      %468 = vrot.lane.b32.xlu0 %v343, 2
      %v469 = vpop.permute.xlu0 %468
      %470 = vrot.lane.b32.xlu0 %v351, 2
      %v471 = vpop.permute.xlu0 %470
      %472 = vrot.lane.b32.xlu0 %v359, 2
      %v473 = vpop.permute.xlu0 %472
      %474 = vrot.lane.b32.xlu0 %v367, 2
      %v475 = vpop.permute.xlu0 %474
      %476 = vrot.lane.b32.xlu0 %v375, 2
      %v477 = vpop.permute.xlu0 %476
      %478 = vrot.lane.b32.xlu0 %v383, 2
      %v479 = vpop.permute.xlu0 %478
      %480 = vrot.lane.b32.xlu0 %v391, 2
      %v481 = vpop.permute.xlu0 %480
      %482 = vrot.lane.b32.xlu0 %v399, 2
      %v483 = vpop.permute.xlu0 %482
      %484 = vrot.lane.b32.xlu0 %v407, 2
      %v485 = vpop.permute.xlu0 %484
      %486 = vrot.lane.b32.xlu0 %v415, 2
      %v487 = vpop.permute.xlu0 %486
      %488 = vrot.lane.b32.xlu0 %v423, 2
      %v489 = vpop.permute.xlu0 %488
      %490 = vrot.lane.b32.xlu0 %v431, 2
      %v491 = vpop.permute.xlu0 %490
      %492 = vrot.lane.b32.xlu0 %v439, 2
      %v493 = vpop.permute.xlu0 %492
      %494 = vrot.lane.b32.xlu0 %v447, 2
      %v495 = vpop.permute.xlu0 %494
      %496 = vrot.lane.b32.xlu0 %v455, 2
      %v497 = vpop.permute.xlu0 %496
      %498 = vrot.lane.b32.xlu0 %v463, 2
      %v499 = vpop.permute.xlu0 %498
      %v501 = vunpack.c.l.b16 %v209
      %v502 = vpack.c.b16 %v259, %v501
      %vm503 = vcmask 1046528
      %v504 = vrot.slane %v502, 1
      %v505 = vrot.slane %v295, 1
      %v506 = vsel %vm503, %v504, %v505
      %v507 = vrot.slane %v296, 1
      %v508 = vsel %vm503, %v505, %v507
      %v509 = vrot.slane %v297, 1
      %v510 = vsel %vm503, %v507, %v509
      %v511 = vrot.slane %v298, 1
      %v512 = vsel %vm503, %v509, %v511
      %v513 = vrot.slane %v299, 1
      %v514 = vsel %vm503, %v511, %v513
      %v515 = vrot.slane %v300, 1
      %v516 = vsel %vm503, %v513, %v515
      %v517 = vrot.slane %v301, 1
      %v518 = vsel %vm503, %v515, %v517
      %v519 = vrot.slane %v302, 1
      %v520 = vsel %vm503, %v517, %v519
      %v521 = vrot.slane %v303, 1
      %v522 = vsel %vm503, %v519, %v521
      %v523 = vrot.slane %v304, 1
      %v524 = vsel %vm503, %v521, %v523
      %v525 = vrot.slane %v305, 1
      %v526 = vsel %vm503, %v523, %v525
      %v527 = vrot.slane %v306, 1
      %v528 = vsel %vm503, %v525, %v527
      %v529 = vrot.slane %v307, 1
      %v530 = vsel %vm503, %v527, %v529
      %v531 = vrot.slane %v308, 1
      %v532 = vsel %vm503, %v529, %v531
      %v533 = vrot.slane %v309, 1
      %v534 = vsel %vm503, %v531, %v533
      %v535 = vrot.slane %v310, 1
      %v536 = vsel %vm503, %v533, %v535
      %v537 = vrot.slane %v311, 1
      %v538 = vsel %vm503, %v535, %v537
      %v539 = vrot.slane %v314, 1
      %v540 = vsel %vm503, %v537, %v539
      %541 = vrot.lane.b32.xlu0 %v506, 4
      %v542 = vpop.permute.xlu0 %541
      %543 = vrot.lane.b32.xlu0 %v508, 4
      %v544 = vpop.permute.xlu0 %543
      %545 = vrot.lane.b32.xlu0 %v510, 4
      %v546 = vpop.permute.xlu0 %545
      %547 = vrot.lane.b32.xlu0 %v512, 4
      %v548 = vpop.permute.xlu0 %547
      %549 = vrot.lane.b32.xlu0 %v514, 4
      %v550 = vpop.permute.xlu0 %549
      %551 = vrot.lane.b32.xlu0 %v516, 4
      %v552 = vpop.permute.xlu0 %551
      %553 = vrot.lane.b32.xlu0 %v518, 4
      %v554 = vpop.permute.xlu0 %553
      %555 = vrot.lane.b32.xlu0 %v520, 4
      %v556 = vpop.permute.xlu0 %555
      %557 = vrot.lane.b32.xlu0 %v522, 4
      %v558 = vpop.permute.xlu0 %557
      %559 = vrot.lane.b32.xlu0 %v524, 4
      %v560 = vpop.permute.xlu0 %559
      %561 = vrot.lane.b32.xlu0 %v526, 4
      %v562 = vpop.permute.xlu0 %561
      %563 = vrot.lane.b32.xlu0 %v528, 4
      %v564 = vpop.permute.xlu0 %563
      %565 = vrot.lane.b32.xlu0 %v530, 4
      %v566 = vpop.permute.xlu0 %565
      %567 = vrot.lane.b32.xlu0 %v532, 4
      %v568 = vpop.permute.xlu0 %567
      %569 = vrot.lane.b32.xlu0 %v534, 4
      %v570 = vpop.permute.xlu0 %569
      %571 = vrot.lane.b32.xlu0 %v536, 4
      %v572 = vpop.permute.xlu0 %571
      %573 = vrot.lane.b32.xlu0 %v538, 4
      %v574 = vpop.permute.xlu0 %573
      %575 = vrot.lane.b32.xlu0 %v540, 4
      %v576 = vpop.permute.xlu0 %575
      %v581 = vunpack.c.l.b16 %v210
      %v582 = vunpack.c.l.b16 %v211
      %v583 = vunpack.c.l.b16 %v212
      %v584 = vunpack.c.l.b16 %v213
      %v585 = vpack.c.b16 %v261, %v581
      %v586 = vpack.c.b16 %v583, %v582
      %v587 = vpack.c.b16 %v584, %v584
      %v588 = vrot.slane %v585, 1
      %v589 = vsel %vm503, %v588, %v507
      %v590 = vrot.slane %v586, 1
      %v591 = vsel %vm503, %v537, %v590
      %v592 = vrot.slane %v587, 1
      %v593 = vsel %vm503, %v590, %v592
      %594 = vrot.lane.b32.xlu0 %v589, 6
      %v595 = vpop.permute.xlu0 %594
      %596 = vrot.lane.b32.xlu0 %v510, 6
      %v597 = vpop.permute.xlu0 %596
      %598 = vrot.lane.b32.xlu0 %v512, 6
      %v599 = vpop.permute.xlu0 %598
      %600 = vrot.lane.b32.xlu0 %v514, 6
      %v601 = vpop.permute.xlu0 %600
      %602 = vrot.lane.b32.xlu0 %v516, 6
      %v603 = vpop.permute.xlu0 %602
      %604 = vrot.lane.b32.xlu0 %v518, 6
      %v605 = vpop.permute.xlu0 %604
      %606 = vrot.lane.b32.xlu0 %v520, 6
      %v607 = vpop.permute.xlu0 %606
      %608 = vrot.lane.b32.xlu0 %v522, 6
      %v609 = vpop.permute.xlu0 %608
      %610 = vrot.lane.b32.xlu0 %v524, 6
      %v611 = vpop.permute.xlu0 %610
      %612 = vrot.lane.b32.xlu0 %v526, 6
      %v613 = vpop.permute.xlu0 %612
      %614 = vrot.lane.b32.xlu0 %v528, 6
      %v615 = vpop.permute.xlu0 %614
      %616 = vrot.lane.b32.xlu0 %v530, 6
      %v617 = vpop.permute.xlu0 %616
      %618 = vrot.lane.b32.xlu0 %v532, 6
      %v619 = vpop.permute.xlu0 %618
      %620 = vrot.lane.b32.xlu0 %v534, 6
      %v621 = vpop.permute.xlu0 %620
      %622 = vrot.lane.b32.xlu0 %v536, 6
      %v623 = vpop.permute.xlu0 %622
      %624 = vrot.lane.b32.xlu0 %v538, 6
      %v625 = vpop.permute.xlu0 %624
      %626 = vrot.lane.b32.xlu0 %v591, 6
      %v627 = vpop.permute.xlu0 %626
      %628 = vrot.lane.b32.xlu0 %v593, 6
      %v629 = vpop.permute.xlu0 %628
      %v631 = vunpack.c.l.b16 %v214
      %v632 = vpack.c.b16 %v631, %v631
      %vm633 = vsmask.f32 6400
      %v635 = vshrl.u32 %v585, 16
      %v637 = vrot.slane %v635, 1
      %v638 = vshll.u32 %v585, 16
      %v640 = vrot.slane %v638, 2
      %v641 = vor.u32 %v637, %v640
      %v642 = vrot.slane %v336, 1
      %v643 = vrot.slane %v332, 2
      %v644 = vor.u32 %v642, %v643
      %v645 = vsel %vm633, %v641, %v644
      %v646 = vrot.slane %v344, 1
      %v647 = vrot.slane %v340, 2
      %v648 = vor.u32 %v646, %v647
      %v649 = vsel %vm633, %v644, %v648
      %v650 = vrot.slane %v352, 1
      %v651 = vrot.slane %v348, 2
      %v652 = vor.u32 %v650, %v651
      %v653 = vsel %vm633, %v648, %v652
      %v654 = vrot.slane %v360, 1
      %v655 = vrot.slane %v356, 2
      %v656 = vor.u32 %v654, %v655
      %v657 = vsel %vm633, %v652, %v656
      %v658 = vrot.slane %v368, 1
      %v659 = vrot.slane %v364, 2
      %v660 = vor.u32 %v658, %v659
      %v661 = vsel %vm633, %v656, %v660
      %v662 = vrot.slane %v376, 1
      %v663 = vrot.slane %v372, 2
      %v664 = vor.u32 %v662, %v663
      %v665 = vsel %vm633, %v660, %v664
      %v666 = vrot.slane %v384, 1
      %v667 = vrot.slane %v380, 2
      %v668 = vor.u32 %v666, %v667
      %v669 = vsel %vm633, %v664, %v668
      %v670 = vrot.slane %v392, 1
      %v671 = vrot.slane %v388, 2
      %v672 = vor.u32 %v670, %v671
      %v673 = vsel %vm633, %v668, %v672
      %v674 = vrot.slane %v400, 1
      %v675 = vrot.slane %v396, 2
      %v676 = vor.u32 %v674, %v675
      %v677 = vsel %vm633, %v672, %v676
      %v678 = vrot.slane %v408, 1
      %v679 = vrot.slane %v404, 2
      %v680 = vor.u32 %v678, %v679
      %v681 = vsel %vm633, %v676, %v680
      %v682 = vrot.slane %v416, 1
      %v683 = vrot.slane %v412, 2
      %v684 = vor.u32 %v682, %v683
      %v685 = vsel %vm633, %v680, %v684
      %v686 = vrot.slane %v424, 1
      %v687 = vrot.slane %v420, 2
      %v688 = vor.u32 %v686, %v687
      %v689 = vsel %vm633, %v684, %v688
      %v690 = vrot.slane %v432, 1
      %v691 = vrot.slane %v428, 2
      %v692 = vor.u32 %v690, %v691
      %v693 = vsel %vm633, %v688, %v692
      %v694 = vrot.slane %v440, 1
      %v695 = vrot.slane %v436, 2
      %v696 = vor.u32 %v694, %v695
      %v697 = vsel %vm633, %v692, %v696
      %v698 = vrot.slane %v448, 1
      %v699 = vrot.slane %v444, 2
      %v700 = vor.u32 %v698, %v699
      %v701 = vsel %vm633, %v696, %v700
      %v702 = vrot.slane %v456, 1
      %v703 = vrot.slane %v452, 2
      %v704 = vor.u32 %v702, %v703
      %v705 = vsel %vm633, %v700, %v704
      %v707 = vshrl.u32 %v586, 16
      %v709 = vrot.slane %v707, 1
      %v710 = vshll.u32 %v586, 16
      %v712 = vrot.slane %v710, 2
      %v713 = vor.u32 %v709, %v712
      %v714 = vsel %vm633, %v704, %v713
      %v716 = vshrl.u32 %v632, 16
      %v718 = vrot.slane %v716, 1
      %v719 = vshll.u32 %v632, 16
      %v721 = vrot.slane %v719, 2
      %v722 = vor.u32 %v718, %v721
      %v723 = vsel %vm633, %v713, %v722
      %724 = vrot.lane.b32.xlu0 %v645, 8
      %v725 = vpop.permute.xlu0 %724
      %726 = vrot.lane.b32.xlu0 %v649, 8
      %v727 = vpop.permute.xlu0 %726
      %728 = vrot.lane.b32.xlu0 %v653, 8
      %v729 = vpop.permute.xlu0 %728
      %730 = vrot.lane.b32.xlu0 %v657, 8
      %v731 = vpop.permute.xlu0 %730
      %732 = vrot.lane.b32.xlu0 %v661, 8
      %v733 = vpop.permute.xlu0 %732
      %734 = vrot.lane.b32.xlu0 %v665, 8
      %v735 = vpop.permute.xlu0 %734
      %736 = vrot.lane.b32.xlu0 %v669, 8
      %v737 = vpop.permute.xlu0 %736
      %738 = vrot.lane.b32.xlu0 %v673, 8
      %v739 = vpop.permute.xlu0 %738
      %740 = vrot.lane.b32.xlu0 %v677, 8
      %v741 = vpop.permute.xlu0 %740
      %742 = vrot.lane.b32.xlu0 %v681, 8
      %v743 = vpop.permute.xlu0 %742
      %744 = vrot.lane.b32.xlu0 %v685, 8
      %v745 = vpop.permute.xlu0 %744
      %746 = vrot.lane.b32.xlu0 %v689, 8
      %v747 = vpop.permute.xlu0 %746
      %748 = vrot.lane.b32.xlu0 %v693, 8
      %v749 = vpop.permute.xlu0 %748
      %750 = vrot.lane.b32.xlu0 %v697, 8
      %v751 = vpop.permute.xlu0 %750
      %752 = vrot.lane.b32.xlu0 %v701, 8
      %v753 = vpop.permute.xlu0 %752
      %754 = vrot.lane.b32.xlu0 %v705, 8
      %v755 = vpop.permute.xlu0 %754
      %756 = vrot.lane.b32.xlu0 %v714, 8
      %v757 = vpop.permute.xlu0 %756
      %758 = vrot.lane.b32.xlu0 %v723, 8
      %v759 = vpop.permute.xlu0 %758
      %v761 = vunpack.c.l.b16 %v215
      %v762 = vpack.c.b16 %v261, %v761
      %vm763 = vcmask 1045504
      %v764 = vrot.slane %v762, 2
      %v765 = vrot.slane %v296, 2
      %v766 = vsel %vm763, %v764, %v765
      %v767 = vrot.slane %v297, 2
      %v768 = vsel %vm763, %v765, %v767
      %v769 = vrot.slane %v298, 2
      %v770 = vsel %vm763, %v767, %v769
      %v771 = vrot.slane %v299, 2
      %v772 = vsel %vm763, %v769, %v771
      %v773 = vrot.slane %v300, 2
      %v774 = vsel %vm763, %v771, %v773
      %v775 = vrot.slane %v301, 2
      %v776 = vsel %vm763, %v773, %v775
      %v777 = vrot.slane %v302, 2
      %v778 = vsel %vm763, %v775, %v777
      %v779 = vrot.slane %v303, 2
      %v780 = vsel %vm763, %v777, %v779
      %v781 = vrot.slane %v304, 2
      %v782 = vsel %vm763, %v779, %v781
      %v783 = vrot.slane %v305, 2
      %v784 = vsel %vm763, %v781, %v783
      %v785 = vrot.slane %v306, 2
      %v786 = vsel %vm763, %v783, %v785
      %v787 = vrot.slane %v307, 2
      %v788 = vsel %vm763, %v785, %v787
      %v789 = vrot.slane %v308, 2
      %v790 = vsel %vm763, %v787, %v789
      %v791 = vrot.slane %v309, 2
      %v792 = vsel %vm763, %v789, %v791
      %v793 = vrot.slane %v310, 2
      %v794 = vsel %vm763, %v791, %v793
      %v795 = vrot.slane %v311, 2
      %v796 = vsel %vm763, %v793, %v795
      %v797 = vrot.slane %v586, 2
      %v798 = vsel %vm763, %v795, %v797
      %v799 = vrot.slane %v632, 2
      %v800 = vsel %vm763, %v797, %v799
      %801 = vrot.lane.b32.xlu0 %v766, 10
      %v802 = vpop.permute.xlu0 %801
      %803 = vrot.lane.b32.xlu0 %v768, 10
      %v804 = vpop.permute.xlu0 %803
      %805 = vrot.lane.b32.xlu0 %v770, 10
      %v806 = vpop.permute.xlu0 %805
      %807 = vrot.lane.b32.xlu0 %v772, 10
      %v808 = vpop.permute.xlu0 %807
      %809 = vrot.lane.b32.xlu0 %v774, 10
      %v810 = vpop.permute.xlu0 %809
      %811 = vrot.lane.b32.xlu0 %v776, 10
      %v812 = vpop.permute.xlu0 %811
      %813 = vrot.lane.b32.xlu0 %v778, 10
      %v814 = vpop.permute.xlu0 %813
      %815 = vrot.lane.b32.xlu0 %v780, 10
      %v816 = vpop.permute.xlu0 %815
      %817 = vrot.lane.b32.xlu0 %v782, 10
      %v818 = vpop.permute.xlu0 %817
      %819 = vrot.lane.b32.xlu0 %v784, 10
      %v820 = vpop.permute.xlu0 %819
      %821 = vrot.lane.b32.xlu0 %v786, 10
      %v822 = vpop.permute.xlu0 %821
      %823 = vrot.lane.b32.xlu0 %v788, 10
      %v824 = vpop.permute.xlu0 %823
      %825 = vrot.lane.b32.xlu0 %v790, 10
      %v826 = vpop.permute.xlu0 %825
      %827 = vrot.lane.b32.xlu0 %v792, 10
      %v828 = vpop.permute.xlu0 %827
      %829 = vrot.lane.b32.xlu0 %v794, 10
      %v830 = vpop.permute.xlu0 %829
      %831 = vrot.lane.b32.xlu0 %v796, 10
      %v832 = vpop.permute.xlu0 %831
      %833 = vrot.lane.b32.xlu0 %v798, 10
      %v834 = vpop.permute.xlu0 %833
      %835 = vrot.lane.b32.xlu0 %v800, 10
      %v836 = vpop.permute.xlu0 %835
      %v841 = vunpack.c.l.b16 %v216
      %v842 = vunpack.c.l.b16 %v217
      %v843 = vunpack.c.l.b16 %v218
      %v844 = vunpack.c.l.b16 %v219
      %v845 = vpack.c.b16 %v263, %v841
      %v846 = vpack.c.b16 %v843, %v842
      %v847 = vpack.c.b16 %v844, %v844
      %v848 = vrot.slane %v845, 2
      %v849 = vsel %vm763, %v848, %v767
      %v850 = vrot.slane %v846, 2
      %v851 = vsel %vm763, %v797, %v850
      %v852 = vrot.slane %v847, 2
      %v853 = vsel %vm763, %v850, %v852
      %854 = vrot.lane.b32.xlu0 %v849, 12
      %v855 = vpop.permute.xlu0 %854
      %856 = vrot.lane.b32.xlu0 %v770, 12
      %v857 = vpop.permute.xlu0 %856
      %858 = vrot.lane.b32.xlu0 %v772, 12
      %v859 = vpop.permute.xlu0 %858
      %860 = vrot.lane.b32.xlu0 %v774, 12
      %v861 = vpop.permute.xlu0 %860
      %862 = vrot.lane.b32.xlu0 %v776, 12
      %v863 = vpop.permute.xlu0 %862
      %864 = vrot.lane.b32.xlu0 %v778, 12
      %v865 = vpop.permute.xlu0 %864
      %866 = vrot.lane.b32.xlu0 %v780, 12
      %v867 = vpop.permute.xlu0 %866
      %868 = vrot.lane.b32.xlu0 %v782, 12
      %v869 = vpop.permute.xlu0 %868
      %870 = vrot.lane.b32.xlu0 %v784, 12
      %v871 = vpop.permute.xlu0 %870
      %872 = vrot.lane.b32.xlu0 %v786, 12
      %v873 = vpop.permute.xlu0 %872
      %874 = vrot.lane.b32.xlu0 %v788, 12
      %v875 = vpop.permute.xlu0 %874
      %876 = vrot.lane.b32.xlu0 %v790, 12
      %v877 = vpop.permute.xlu0 %876
      %878 = vrot.lane.b32.xlu0 %v792, 12
      %v879 = vpop.permute.xlu0 %878
      %880 = vrot.lane.b32.xlu0 %v794, 12
      %v881 = vpop.permute.xlu0 %880
      %882 = vrot.lane.b32.xlu0 %v796, 12
      %v883 = vpop.permute.xlu0 %882
      %884 = vrot.lane.b32.xlu0 %v798, 12
      %v885 = vpop.permute.xlu0 %884
      %886 = vrot.lane.b32.xlu0 %v851, 12
      %v887 = vpop.permute.xlu0 %886
      %888 = vrot.lane.b32.xlu0 %v853, 12
      %v889 = vpop.permute.xlu0 %888
      %v891 = vunpack.c.l.b16 %v220
      %v892 = vpack.c.b16 %v891, %v891
      %vm893 = vsmask.f32 5376
      %v895 = vshrl.u32 %v845, 16
      %v897 = vrot.slane %v895, 2
      %v898 = vshll.u32 %v845, 16
      %v900 = vrot.slane %v898, 3
      %v901 = vor.u32 %v897, %v900
      %v902 = vrot.slane %v344, 2
      %v903 = vrot.slane %v340, 3
      %v904 = vor.u32 %v902, %v903
      %v905 = vsel %vm893, %v901, %v904
      %v906 = vrot.slane %v352, 2
      %v907 = vrot.slane %v348, 3
      %v908 = vor.u32 %v906, %v907
      %v909 = vsel %vm893, %v904, %v908
      %v910 = vrot.slane %v360, 2
      %v911 = vrot.slane %v356, 3
      %v912 = vor.u32 %v910, %v911
      %v913 = vsel %vm893, %v908, %v912
      %v914 = vrot.slane %v368, 2
      %v915 = vrot.slane %v364, 3
      %v916 = vor.u32 %v914, %v915
      %v917 = vsel %vm893, %v912, %v916
      %v918 = vrot.slane %v376, 2
      %v919 = vrot.slane %v372, 3
      %v920 = vor.u32 %v918, %v919
      %v921 = vsel %vm893, %v916, %v920
      %v922 = vrot.slane %v384, 2
      %v923 = vrot.slane %v380, 3
      %v924 = vor.u32 %v922, %v923
      %v925 = vsel %vm893, %v920, %v924
      %v926 = vrot.slane %v392, 2
      %v927 = vrot.slane %v388, 3
      %v928 = vor.u32 %v926, %v927
      %v929 = vsel %vm893, %v924, %v928
      %v930 = vrot.slane %v400, 2
      %v931 = vrot.slane %v396, 3
      %v932 = vor.u32 %v930, %v931
      %v933 = vsel %vm893, %v928, %v932
      %v934 = vrot.slane %v408, 2
      %v935 = vrot.slane %v404, 3
      %v936 = vor.u32 %v934, %v935
      %v937 = vsel %vm893, %v932, %v936
      %v938 = vrot.slane %v416, 2
      %v939 = vrot.slane %v412, 3
      %v940 = vor.u32 %v938, %v939
      %v941 = vsel %vm893, %v936, %v940
      %v942 = vrot.slane %v424, 2
      %v943 = vrot.slane %v420, 3
      %v944 = vor.u32 %v942, %v943
      %v945 = vsel %vm893, %v940, %v944
      %v946 = vrot.slane %v432, 2
      %v947 = vrot.slane %v428, 3
      %v948 = vor.u32 %v946, %v947
      %v949 = vsel %vm893, %v944, %v948
      %v950 = vrot.slane %v440, 2
      %v951 = vrot.slane %v436, 3
      %v952 = vor.u32 %v950, %v951
      %v953 = vsel %vm893, %v948, %v952
      %v954 = vrot.slane %v448, 2
      %v955 = vrot.slane %v444, 3
      %v956 = vor.u32 %v954, %v955
      %v957 = vsel %vm893, %v952, %v956
      %v958 = vrot.slane %v456, 2
      %v959 = vrot.slane %v452, 3
      %v960 = vor.u32 %v958, %v959
      %v961 = vsel %vm893, %v956, %v960
      %v962 = vrot.slane %v707, 2
      %v963 = vrot.slane %v710, 3
      %v964 = vor.u32 %v962, %v963
      %v965 = vsel %vm893, %v960, %v964
      %v967 = vshrl.u32 %v846, 16
      %v969 = vrot.slane %v967, 2
      %v970 = vshll.u32 %v846, 16
      %v972 = vrot.slane %v970, 3
      %v973 = vor.u32 %v969, %v972
      %v974 = vsel %vm893, %v964, %v973
      %v976 = vshrl.u32 %v892, 16
      %v978 = vrot.slane %v976, 2
      %v979 = vshll.u32 %v892, 16
      %v981 = vrot.slane %v979, 3
      %v982 = vor.u32 %v978, %v981
      %v983 = vsel %vm893, %v973, %v982
      %984 = vrot.lane.b32.xlu0 %v905, 14
      %v985 = vpop.permute.xlu0 %984
      %986 = vrot.lane.b32.xlu0 %v909, 14
      %v987 = vpop.permute.xlu0 %986
      %988 = vrot.lane.b32.xlu0 %v913, 14
      %v989 = vpop.permute.xlu0 %988
      %990 = vrot.lane.b32.xlu0 %v917, 14
      %v991 = vpop.permute.xlu0 %990
      %992 = vrot.lane.b32.xlu0 %v921, 14
      %v993 = vpop.permute.xlu0 %992
      %994 = vrot.lane.b32.xlu0 %v925, 14
      %v995 = vpop.permute.xlu0 %994
      %996 = vrot.lane.b32.xlu0 %v929, 14
      %v997 = vpop.permute.xlu0 %996
      %998 = vrot.lane.b32.xlu0 %v933, 14
      %v999 = vpop.permute.xlu0 %998
      %1000 = vrot.lane.b32.xlu0 %v937, 14
      %v1001 = vpop.permute.xlu0 %1000
      %1002 = vrot.lane.b32.xlu0 %v941, 14
      %v1003 = vpop.permute.xlu0 %1002
      %1004 = vrot.lane.b32.xlu0 %v945, 14
      %v1005 = vpop.permute.xlu0 %1004
      %1006 = vrot.lane.b32.xlu0 %v949, 14
      %v1007 = vpop.permute.xlu0 %1006
      %1008 = vrot.lane.b32.xlu0 %v953, 14
      %v1009 = vpop.permute.xlu0 %1008
      %1010 = vrot.lane.b32.xlu0 %v957, 14
      %v1011 = vpop.permute.xlu0 %1010
      %1012 = vrot.lane.b32.xlu0 %v961, 14
      %v1013 = vpop.permute.xlu0 %1012
      %1014 = vrot.lane.b32.xlu0 %v965, 14
      %v1015 = vpop.permute.xlu0 %1014
      %1016 = vrot.lane.b32.xlu0 %v974, 14
      %v1017 = vpop.permute.xlu0 %1016
      %1018 = vrot.lane.b32.xlu0 %v983, 14
      %v1019 = vpop.permute.xlu0 %1018
      %v1021 = vunpack.c.l.b16 %v221
      %v1022 = vpack.c.b16 %v263, %v1021
      %vm1023 = vcmask 1044480
      %v1024 = vrot.slane %v1022, 3
      %v1025 = vrot.slane %v297, 3
      %v1026 = vsel %vm1023, %v1024, %v1025
      %v1027 = vrot.slane %v298, 3
      %v1028 = vsel %vm1023, %v1025, %v1027
      %v1029 = vrot.slane %v299, 3
      %v1030 = vsel %vm1023, %v1027, %v1029
      %v1031 = vrot.slane %v300, 3
      %v1032 = vsel %vm1023, %v1029, %v1031
      %v1033 = vrot.slane %v301, 3
      %v1034 = vsel %vm1023, %v1031, %v1033
      %v1035 = vrot.slane %v302, 3
      %v1036 = vsel %vm1023, %v1033, %v1035
      %v1037 = vrot.slane %v303, 3
      %v1038 = vsel %vm1023, %v1035, %v1037
      %v1039 = vrot.slane %v304, 3
      %v1040 = vsel %vm1023, %v1037, %v1039
      %v1041 = vrot.slane %v305, 3
      %v1042 = vsel %vm1023, %v1039, %v1041
      %v1043 = vrot.slane %v306, 3
      %v1044 = vsel %vm1023, %v1041, %v1043
      %v1045 = vrot.slane %v307, 3
      %v1046 = vsel %vm1023, %v1043, %v1045
      %v1047 = vrot.slane %v308, 3
      %v1048 = vsel %vm1023, %v1045, %v1047
      %v1049 = vrot.slane %v309, 3
      %v1050 = vsel %vm1023, %v1047, %v1049
      %v1051 = vrot.slane %v310, 3
      %v1052 = vsel %vm1023, %v1049, %v1051
      %v1053 = vrot.slane %v311, 3
      %v1054 = vsel %vm1023, %v1051, %v1053
      %v1055 = vrot.slane %v586, 3
      %v1056 = vsel %vm1023, %v1053, %v1055
      %v1057 = vrot.slane %v846, 3
      %v1058 = vsel %vm1023, %v1055, %v1057
      %v1059 = vrot.slane %v892, 3
      %v1060 = vsel %vm1023, %v1057, %v1059
      %1061 = vrot.lane.b32.xlu0 %v1026, 16
      %v1062 = vpop.permute.xlu0 %1061
      %1063 = vrot.lane.b32.xlu0 %v1028, 16
      %v1064 = vpop.permute.xlu0 %1063
      %1065 = vrot.lane.b32.xlu0 %v1030, 16
      %v1066 = vpop.permute.xlu0 %1065
      %1067 = vrot.lane.b32.xlu0 %v1032, 16
      %v1068 = vpop.permute.xlu0 %1067
      %1069 = vrot.lane.b32.xlu0 %v1034, 16
      %v1070 = vpop.permute.xlu0 %1069
      %1071 = vrot.lane.b32.xlu0 %v1036, 16
      %v1072 = vpop.permute.xlu0 %1071
      %1073 = vrot.lane.b32.xlu0 %v1038, 16
      %v1074 = vpop.permute.xlu0 %1073
      %1075 = vrot.lane.b32.xlu0 %v1040, 16
      %v1076 = vpop.permute.xlu0 %1075
      %1077 = vrot.lane.b32.xlu0 %v1042, 16
      %v1078 = vpop.permute.xlu0 %1077
      %1079 = vrot.lane.b32.xlu0 %v1044, 16
      %v1080 = vpop.permute.xlu0 %1079
      %1081 = vrot.lane.b32.xlu0 %v1046, 16
      %v1082 = vpop.permute.xlu0 %1081
      %1083 = vrot.lane.b32.xlu0 %v1048, 16
      %v1084 = vpop.permute.xlu0 %1083
      %1085 = vrot.lane.b32.xlu0 %v1050, 16
      %v1086 = vpop.permute.xlu0 %1085
      %1087 = vrot.lane.b32.xlu0 %v1052, 16
      %v1088 = vpop.permute.xlu0 %1087
      %1089 = vrot.lane.b32.xlu0 %v1054, 16
      %v1090 = vpop.permute.xlu0 %1089
      %1091 = vrot.lane.b32.xlu0 %v1056, 16
      %v1092 = vpop.permute.xlu0 %1091
      %1093 = vrot.lane.b32.xlu0 %v1058, 16
      %v1094 = vpop.permute.xlu0 %1093
      %1095 = vrot.lane.b32.xlu0 %v1060, 16
      %v1096 = vpop.permute.xlu0 %1095
      %vm1097 = vcmask 15360
      %v1099 = vsel %vm1097, %v294, %v465
      %v1101 = vsel %vm1097, %v295, %v467
      %v1103 = vsel %vm1097, %v296, %v469
      %v1105 = vsel %vm1097, %v297, %v471
      %v1107 = vsel %vm1097, %v298, %v473
      %v1109 = vsel %vm1097, %v299, %v475
      %v1111 = vsel %vm1097, %v300, %v477
      %v1113 = vsel %vm1097, %v301, %v479
      %v1115 = vsel %vm1097, %v302, %v481
      %v1117 = vsel %vm1097, %v303, %v483
      %v1119 = vsel %vm1097, %v304, %v485
      %v1121 = vsel %vm1097, %v305, %v487
      %v1123 = vsel %vm1097, %v306, %v489
      %v1125 = vsel %vm1097, %v307, %v491
      %v1127 = vsel %vm1097, %v308, %v493
      %v1129 = vsel %vm1097, %v309, %v495
      %v1131 = vsel %vm1097, %v310, %v497
      %v1133 = vsel %vm1097, %v311, %v499
      %vm1134 = vcmask 31744
      %v1136 = vsel %vm1134, %v1099, %v542
      %v1138 = vsel %vm1134, %v1101, %v544
      %v1140 = vsel %vm1134, %v1103, %v546
      %v1142 = vsel %vm1134, %v1105, %v548
      %v1144 = vsel %vm1134, %v1107, %v550
      %v1146 = vsel %vm1134, %v1109, %v552
      %v1148 = vsel %vm1134, %v1111, %v554
      %v1150 = vsel %vm1134, %v1113, %v556
      %v1152 = vsel %vm1134, %v1115, %v558
      %v1154 = vsel %vm1134, %v1117, %v560
      %v1156 = vsel %vm1134, %v1119, %v562
      %v1158 = vsel %vm1134, %v1121, %v564
      %v1160 = vsel %vm1134, %v1123, %v566
      %v1162 = vsel %vm1134, %v1125, %v568
      %v1164 = vsel %vm1134, %v1127, %v570
      %v1166 = vsel %vm1134, %v1129, %v572
      %v1168 = vsel %vm1134, %v1131, %v574
      %v1170 = vsel %vm1134, %v1133, %v576
      %vm1171 = vcmask 48128
      %v1173 = vsel %vm1171, %v1136, %v595
      %v1175 = vsel %vm1171, %v1138, %v597
      %v1177 = vsel %vm1171, %v1140, %v599
      %v1179 = vsel %vm1171, %v1142, %v601
      %v1181 = vsel %vm1171, %v1144, %v603
      %v1183 = vsel %vm1171, %v1146, %v605
      %v1185 = vsel %vm1171, %v1148, %v607
      %v1187 = vsel %vm1171, %v1150, %v609
      %v1189 = vsel %vm1171, %v1152, %v611
      %v1191 = vsel %vm1171, %v1154, %v613
      %v1193 = vsel %vm1171, %v1156, %v615
      %v1195 = vsel %vm1171, %v1158, %v617
      %v1197 = vsel %vm1171, %v1160, %v619
      %v1199 = vsel %vm1171, %v1162, %v621
      %v1201 = vsel %vm1171, %v1164, %v623
      %v1203 = vsel %vm1171, %v1166, %v625
      %v1205 = vsel %vm1171, %v1168, %v627
      %v1207 = vsel %vm1171, %v1170, %v629
      %vm1208 = vcmask 64512
      %v1210 = vsel %vm1208, %v1173, %v725
      %v1212 = vsel %vm1208, %v1175, %v727
      %v1214 = vsel %vm1208, %v1177, %v729
      %v1216 = vsel %vm1208, %v1179, %v731
      %v1218 = vsel %vm1208, %v1181, %v733
      %v1220 = vsel %vm1208, %v1183, %v735
      %v1222 = vsel %vm1208, %v1185, %v737
      %v1224 = vsel %vm1208, %v1187, %v739
      %v1226 = vsel %vm1208, %v1189, %v741
      %v1228 = vsel %vm1208, %v1191, %v743
      %v1230 = vsel %vm1208, %v1193, %v745
      %v1232 = vsel %vm1208, %v1195, %v747
      %v1234 = vsel %vm1208, %v1197, %v749
      %v1236 = vsel %vm1208, %v1199, %v751
      %v1238 = vsel %vm1208, %v1201, %v753
      %v1240 = vsel %vm1208, %v1203, %v755
      %v1242 = vsel %vm1208, %v1205, %v757
      %v1244 = vsel %vm1208, %v1207, %v759
      %vm1245 = vcmask 80896
      %v1247 = vsel %vm1245, %v1210, %v802
      %v1249 = vsel %vm1245, %v1212, %v804
      %v1251 = vsel %vm1245, %v1214, %v806
      %v1253 = vsel %vm1245, %v1216, %v808
      %v1255 = vsel %vm1245, %v1218, %v810
      %v1257 = vsel %vm1245, %v1220, %v812
      %v1259 = vsel %vm1245, %v1222, %v814
      %v1261 = vsel %vm1245, %v1224, %v816
      %v1263 = vsel %vm1245, %v1226, %v818
      %v1265 = vsel %vm1245, %v1228, %v820
      %v1267 = vsel %vm1245, %v1230, %v822
      %v1269 = vsel %vm1245, %v1232, %v824
      %v1271 = vsel %vm1245, %v1234, %v826
      %v1273 = vsel %vm1245, %v1236, %v828
      %v1275 = vsel %vm1245, %v1238, %v830
      %v1277 = vsel %vm1245, %v1240, %v832
      %v1279 = vsel %vm1245, %v1242, %v834
      %v1281 = vsel %vm1245, %v1244, %v836
      %vm1282 = vcmask 97280
      %v1284 = vsel %vm1282, %v1247, %v855
      %v1286 = vsel %vm1282, %v1249, %v857
      %v1288 = vsel %vm1282, %v1251, %v859
      %v1290 = vsel %vm1282, %v1253, %v861
      %v1292 = vsel %vm1282, %v1255, %v863
      %v1294 = vsel %vm1282, %v1257, %v865
      %v1296 = vsel %vm1282, %v1259, %v867
      %v1298 = vsel %vm1282, %v1261, %v869
      %v1300 = vsel %vm1282, %v1263, %v871
      %v1302 = vsel %vm1282, %v1265, %v873
      %v1304 = vsel %vm1282, %v1267, %v875
      %v1306 = vsel %vm1282, %v1269, %v877
      %v1308 = vsel %vm1282, %v1271, %v879
      %v1310 = vsel %vm1282, %v1273, %v881
      %v1312 = vsel %vm1282, %v1275, %v883
      %v1314 = vsel %vm1282, %v1277, %v885
      %v1316 = vsel %vm1282, %v1279, %v887
      %v1318 = vsel %vm1282, %v1281, %v889
      %vm1319 = vcmask 113664
      %v1321 = vsel %vm1319, %v1284, %v985
      %v1323 = vsel %vm1319, %v1286, %v987
      %v1325 = vsel %vm1319, %v1288, %v989
      %v1327 = vsel %vm1319, %v1290, %v991
      %v1329 = vsel %vm1319, %v1292, %v993
      %v1331 = vsel %vm1319, %v1294, %v995
      %v1333 = vsel %vm1319, %v1296, %v997
      %v1335 = vsel %vm1319, %v1298, %v999
      %v1337 = vsel %vm1319, %v1300, %v1001
      %v1339 = vsel %vm1319, %v1302, %v1003
      %v1341 = vsel %vm1319, %v1304, %v1005
      %v1343 = vsel %vm1319, %v1306, %v1007
      %v1345 = vsel %vm1319, %v1308, %v1009
      %v1347 = vsel %vm1319, %v1310, %v1011
      %v1349 = vsel %vm1319, %v1312, %v1013
      %v1351 = vsel %vm1319, %v1314, %v1015
      %v1353 = vsel %vm1319, %v1316, %v1017
      %v1355 = vsel %vm1319, %v1318, %v1019
      %vm1356 = vcmask 130048
      %v1358 = vsel %vm1356, %v1321, %v1062
      %v1360 = vsel %vm1356, %v1323, %v1064
      %v1362 = vsel %vm1356, %v1325, %v1066
      %v1364 = vsel %vm1356, %v1327, %v1068
      %v1366 = vsel %vm1356, %v1329, %v1070
      %v1368 = vsel %vm1356, %v1331, %v1072
      %v1370 = vsel %vm1356, %v1333, %v1074
      %v1372 = vsel %vm1356, %v1335, %v1076
      %v1374 = vsel %vm1356, %v1337, %v1078
      %v1376 = vsel %vm1356, %v1339, %v1080
      %v1378 = vsel %vm1356, %v1341, %v1082
      %v1380 = vsel %vm1356, %v1343, %v1084
      %v1382 = vsel %vm1356, %v1345, %v1086
      %v1384 = vsel %vm1356, %v1347, %v1088
      %v1386 = vsel %vm1356, %v1349, %v1090
      %v1388 = vsel %vm1356, %v1351, %v1092
      %v1390 = vsel %vm1356, %v1353, %v1094
      %v1392 = vsel %vm1356, %v1355, %v1096
      %v1411 = vunpack.c.l.b16 %v1358
      %v1412 = vunpack.c.h.b16 %v1358
      %v1413 = vunpack.c.l.b16 %v1360
      %v1414 = vunpack.c.h.b16 %v1360
      %v1415 = vunpack.c.l.b16 %v1362
      %v1416 = vunpack.c.h.b16 %v1362
      %v1417 = vunpack.c.l.b16 %v1364
      %v1418 = vunpack.c.h.b16 %v1364
      %v1419 = vunpack.c.l.b16 %v1366
      %v1420 = vunpack.c.h.b16 %v1366
      %v1421 = vunpack.c.l.b16 %v1368
      %v1422 = vunpack.c.h.b16 %v1368
      %v1423 = vunpack.c.l.b16 %v1370
      %v1424 = vunpack.c.h.b16 %v1370
      %v1425 = vunpack.c.l.b16 %v1372
      %v1426 = vunpack.c.h.b16 %v1372
      %v1427 = vunpack.c.l.b16 %v1374
      %v1428 = vunpack.c.h.b16 %v1374
      %v1429 = vunpack.c.l.b16 %v1376
      %v1430 = vunpack.c.h.b16 %v1376
      %v1431 = vunpack.c.l.b16 %v1378
      %v1432 = vunpack.c.h.b16 %v1378
      %v1433 = vunpack.c.l.b16 %v1380
      %v1434 = vunpack.c.h.b16 %v1380
      %v1435 = vunpack.c.l.b16 %v1382
      %v1436 = vunpack.c.h.b16 %v1382
      %v1437 = vunpack.c.l.b16 %v1384
      %v1438 = vunpack.c.h.b16 %v1384
      %v1439 = vunpack.c.l.b16 %v1386
      %v1440 = vunpack.c.h.b16 %v1386
      %v1441 = vunpack.c.l.b16 %v1388
      %v1442 = vunpack.c.h.b16 %v1388
      %v1443 = vunpack.c.l.b16 %v1390
      %v1444 = vunpack.c.h.b16 %v1390
      %v1445 = vunpack.c.l.b16 %v1392
      %v1446 = vunpack.c.h.b16 %v1392
      %v1447 = vpack.c.b16 %v1411, %v1411
      %v1448 = vpack.c.b16 %v1412, %v1412
      %v1449 = vpack.c.b16 %v1413, %v1413
      %v1450 = vpack.c.b16 %v1414, %v1414
      %v1451 = vpack.c.b16 %v1415, %v1415
      %v1452 = vpack.c.b16 %v1416, %v1416
      %v1453 = vpack.c.b16 %v1417, %v1417
      %v1454 = vpack.c.b16 %v1418, %v1418
      %v1455 = vpack.c.b16 %v1419, %v1419
      %v1456 = vpack.c.b16 %v1420, %v1420
      %v1457 = vpack.c.b16 %v1421, %v1421
      %v1458 = vpack.c.b16 %v1422, %v1422
      %v1459 = vpack.c.b16 %v1423, %v1423
      %v1460 = vpack.c.b16 %v1424, %v1424
      %v1461 = vpack.c.b16 %v1425, %v1425
      %v1462 = vpack.c.b16 %v1426, %v1426
      %v1463 = vpack.c.b16 %v1427, %v1427
      %v1464 = vpack.c.b16 %v1428, %v1428
      %v1465 = vpack.c.b16 %v1429, %v1429
      %v1466 = vpack.c.b16 %v1430, %v1430
      %v1467 = vpack.c.b16 %v1431, %v1431
      %v1468 = vpack.c.b16 %v1432, %v1432
      %v1469 = vpack.c.b16 %v1433, %v1433
      %v1470 = vpack.c.b16 %v1434, %v1434
      %v1471 = vpack.c.b16 %v1435, %v1435
      %v1472 = vpack.c.b16 %v1436, %v1436
      %v1473 = vpack.c.b16 %v1437, %v1437
      %v1474 = vpack.c.b16 %v1438, %v1438
      %v1475 = vpack.c.b16 %v1439, %v1439
      %v1476 = vpack.c.b16 %v1440, %v1440
      %v1477 = vpack.c.b16 %v1441, %v1441
      %v1478 = vpack.c.b16 %v1442, %v1442
      %v1479 = vpack.c.b16 %v1443, %v1443
      %v1480 = vpack.c.b16 %v1444, %v1444
      %v1481 = vpack.c.b16 %v1445, %v1445
      %v1482 = vpack.c.b16 %v1446, %v1446
      %vm1519 = vcmask 142336
      %1520 = vst.msk [vmem:[#allocation2] sm:$0xf] %vm1519, %v1447
      %1521 = vst.msk [vmem:[#allocation2 + $0x4] sm:$0xf] %vm1519, %v1448
      %1522 = vst.msk [vmem:[#allocation2 + $0x8] sm:$0xf] %vm1519, %v1449
      %1523 = vst.msk [vmem:[#allocation2 + $0xc] sm:$0xf] %vm1519, %v1450
      %1524 = vst.msk [vmem:[#allocation2 + $0x10] sm:$0xf] %vm1519, %v1451
      %1525 = vst.msk [vmem:[#allocation2 + $0x14] sm:$0xf] %vm1519, %v1452
      %1526 = vst.msk [vmem:[#allocation2 + $0x18] sm:$0xf] %vm1519, %v1453
      %1527 = vst.msk [vmem:[#allocation2 + $0x1c] sm:$0xf] %vm1519, %v1454
      %1528 = vst.msk [vmem:[#allocation2 + $0x20] sm:$0xf] %vm1519, %v1455
      %1529 = vst.msk [vmem:[#allocation2 + $0x24] sm:$0xf] %vm1519, %v1456
      %1530 = vst.msk [vmem:[#allocation2 + $0x28] sm:$0xf] %vm1519, %v1457
      %1531 = vst.msk [vmem:[#allocation2 + $0x2c] sm:$0xf] %vm1519, %v1458
      %1532 = vst.msk [vmem:[#allocation2 + $0x30] sm:$0xf] %vm1519, %v1459
      %1533 = vst.msk [vmem:[#allocation2 + $0x34] sm:$0xf] %vm1519, %v1460
      %1534 = vst.msk [vmem:[#allocation2 + $0x38] sm:$0xf] %vm1519, %v1461
      %1535 = vst.msk [vmem:[#allocation2 + $0x3c] sm:$0xf] %vm1519, %v1462
      %1536 = vst.msk [vmem:[#allocation2 + $0x40] sm:$0xf] %vm1519, %v1463
      %1537 = vst.msk [vmem:[#allocation2 + $0x44] sm:$0xf] %vm1519, %v1464
      %1538 = vst.msk [vmem:[#allocation2 + $0x48] sm:$0xf] %vm1519, %v1465
      %1539 = vst.msk [vmem:[#allocation2 + $0x4c] sm:$0xf] %vm1519, %v1466
      %1540 = vst.msk [vmem:[#allocation2 + $0x50] sm:$0xf] %vm1519, %v1467
      %1541 = vst.msk [vmem:[#allocation2 + $0x54] sm:$0xf] %vm1519, %v1468
      %1542 = vst.msk [vmem:[#allocation2 + $0x58] sm:$0xf] %vm1519, %v1469
      %1543 = vst.msk [vmem:[#allocation2 + $0x5c] sm:$0xf] %vm1519, %v1470
      %1544 = vst.msk [vmem:[#allocation2 + $0x60] sm:$0xf] %vm1519, %v1471
      %1545 = vst.msk [vmem:[#allocation2 + $0x64] sm:$0xf] %vm1519, %v1472
      %1546 = vst.msk [vmem:[#allocation2 + $0x68] sm:$0xf] %vm1519, %v1473
      %1547 = vst.msk [vmem:[#allocation2 + $0x6c] sm:$0xf] %vm1519, %v1474
      %1548 = vst.msk [vmem:[#allocation2 + $0x70] sm:$0xf] %vm1519, %v1475
      %1549 = vst.msk [vmem:[#allocation2 + $0x74] sm:$0xf] %vm1519, %v1476
      %1550 = vst.msk [vmem:[#allocation2 + $0x78] sm:$0xf] %vm1519, %v1477
      %1551 = vst.msk [vmem:[#allocation2 + $0x7c] sm:$0xf] %vm1519, %v1478
      %1552 = vst.msk [vmem:[#allocation2 + $0x80] sm:$0xf] %vm1519, %v1479
      %1553 = vst.msk [vmem:[#allocation2 + $0x84] sm:$0xf] %vm1519, %v1480
      %1554 = vst.msk [vmem:[#allocation2 + $0x88] sm:$0xf] %vm1519, %v1481
      %1555 = vst.msk [vmem:[#allocation2 + $0x8c] sm:$0xf] %vm1519, %v1482
      %s1556 = scalar_lea.vmem %s165, 164
      %v1557 = vld [vmem:[%s1556] sm:$0xf]
      %v1558 = vld [vmem:[%s1556 + $0x4] sm:$0xf]
      %v1559 = vld [vmem:[%s1556 + $0x8] sm:$0xf]
      %v1560 = vld [vmem:[%s1556 + $0xc] sm:$0xf]
      %v1561 = vld [vmem:[%s1556 + $0x10] sm:$0xf]
      %v1562 = vld [vmem:[%s1556 + $0x14] sm:$0xf]
      %v1563 = vld [vmem:[%s1556 + $0x18] sm:$0xf]
      %v1564 = vld [vmem:[%s1556 + $0x1c] sm:$0xf]
      %v1565 = vld [vmem:[%s1556 + $0x20] sm:$0xf]
      %v1566 = vld [vmem:[%s1556 + $0x24] sm:$0xf]
      %v1567 = vld [vmem:[%s1556 + $0x28] sm:$0xf]
      %v1568 = vld [vmem:[%s1556 + $0x2c] sm:$0xf]
      %v1569 = vld [vmem:[%s1556 + $0x30] sm:$0xf]
      %v1570 = vld [vmem:[%s1556 + $0x34] sm:$0xf]
      %v1571 = vld [vmem:[%s1556 + $0x38] sm:$0xf]
      %v1572 = vld [vmem:[%s1556 + $0x3c] sm:$0xf]
      %v1573 = vld [vmem:[%s1556 + $0x40] sm:$0xf]
      %v1574 = vld [vmem:[%s1556 + $0x44] sm:$0xf]
      %v1575 = vld [vmem:[%s1556 + $0x48] sm:$0xf]
      %v1576 = vld [vmem:[%s1556 + $0x4c] sm:$0xf]
      %v1577 = vld [vmem:[%s1556 + $0x50] sm:$0xf]
      %v1578 = vld [vmem:[%s1556 + $0x54] sm:$0xf]
      %v1579 = vld [vmem:[%s1556 + $0x58] sm:$0xf]
      %v1580 = vld [vmem:[%s1556 + $0x5c] sm:$0xf]
      %v1581 = vld [vmem:[%s1556 + $0x60] sm:$0xf]
      %v1582 = vld [vmem:[%s1556 + $0x64] sm:$0xf]
      %v1583 = vld [vmem:[%s1556 + $0x68] sm:$0xf]
      %v1584 = vld [vmem:[%s1556 + $0x6c] sm:$0xf]
      %v1585 = vld [vmem:[%s1556 + $0x70] sm:$0xf]
      %v1586 = vld [vmem:[%s1556 + $0x74] sm:$0xf]
      %v1587 = vld [vmem:[%s1556 + $0x78] sm:$0xf]
      %v1588 = vld [vmem:[%s1556 + $0x7c] sm:$0xf]
      %v1589 = vld [vmem:[%s1556 + $0x80] sm:$0xf]
      %v1590 = vld [vmem:[%s1556 + $0x84] sm:$0xf]
      %v1591 = vld [vmem:[%s1556 + $0x88] sm:$0xf]
      %v1592 = vld [vmem:[%s1556 + $0x8c] sm:$0xf]
      %v1593 = vld [vmem:[%s1556 + $0x90] sm:$0x1]
      %v1594 = vld [vmem:[%s1556] sm:$0xe]
      %v1595 = vld [vmem:[%s1556 + $0x8] sm:$0xe]
      %v1596 = vld [vmem:[%s1556 + $0x90] sm:$0xf]
      %v1597 = vld [vmem:[%s1556 + $0x94] sm:$0xf]
      %v1598 = vld [vmem:[%s1556 + $0x98] sm:$0x1]
      %v1599 = vld [vmem:[%s1556 + $0x98] sm:$0x3]
      %v1600 = vld [vmem:[%s1556 + $0x8] sm:$0xc]
      %v1601 = vld [vmem:[%s1556 + $0x10] sm:$0xc]
      %v1602 = vld [vmem:[%s1556 + $0x98] sm:$0xf]
      %v1603 = vld [vmem:[%s1556 + $0x9c] sm:$0xf]
      %v1604 = vld [vmem:[%s1556 + $0xa0] sm:$0x3]
      %v1605 = vld [vmem:[%s1556 + $0xa0] sm:$0x7]
      %v1606 = vld [vmem:[%s1556 + $0x10] sm:$0x8]
      %v1643 = vunpack.c.l.b16 %v1557
      %v1644 = vunpack.c.l.b16 %v1558
      %v1645 = vunpack.c.l.b16 %v1559
      %v1646 = vunpack.c.l.b16 %v1560
      %v1647 = vunpack.c.l.b16 %v1561
      %v1648 = vunpack.c.l.b16 %v1562
      %v1649 = vunpack.c.l.b16 %v1563
      %v1650 = vunpack.c.l.b16 %v1564
      %v1651 = vunpack.c.l.b16 %v1565
      %v1652 = vunpack.c.l.b16 %v1566
      %v1653 = vunpack.c.l.b16 %v1567
      %v1654 = vunpack.c.l.b16 %v1568
      %v1655 = vunpack.c.l.b16 %v1569
      %v1656 = vunpack.c.l.b16 %v1570
      %v1657 = vunpack.c.l.b16 %v1571
      %v1658 = vunpack.c.l.b16 %v1572
      %v1659 = vunpack.c.l.b16 %v1573
      %v1660 = vunpack.c.l.b16 %v1574
      %v1661 = vunpack.c.l.b16 %v1575
      %v1662 = vunpack.c.l.b16 %v1576
      %v1663 = vunpack.c.l.b16 %v1577
      %v1664 = vunpack.c.l.b16 %v1578
      %v1665 = vunpack.c.l.b16 %v1579
      %v1666 = vunpack.c.l.b16 %v1580
      %v1667 = vunpack.c.l.b16 %v1581
      %v1668 = vunpack.c.l.b16 %v1582
      %v1669 = vunpack.c.l.b16 %v1583
      %v1670 = vunpack.c.l.b16 %v1584
      %v1671 = vunpack.c.l.b16 %v1585
      %v1672 = vunpack.c.l.b16 %v1586
      %v1673 = vunpack.c.l.b16 %v1587
      %v1674 = vunpack.c.l.b16 %v1588
      %v1675 = vunpack.c.l.b16 %v1589
      %v1676 = vunpack.c.l.b16 %v1590
      %v1677 = vunpack.c.l.b16 %v1591
      %v1678 = vunpack.c.l.b16 %v1592
      %v1679 = vpack.c.b16 %v1644, %v1643
      %v1680 = vpack.c.b16 %v1646, %v1645
      %v1681 = vpack.c.b16 %v1648, %v1647
      %v1682 = vpack.c.b16 %v1650, %v1649
      %v1683 = vpack.c.b16 %v1652, %v1651
      %v1684 = vpack.c.b16 %v1654, %v1653
      %v1685 = vpack.c.b16 %v1656, %v1655
      %v1686 = vpack.c.b16 %v1658, %v1657
      %v1687 = vpack.c.b16 %v1660, %v1659
      %v1688 = vpack.c.b16 %v1662, %v1661
      %v1689 = vpack.c.b16 %v1664, %v1663
      %v1690 = vpack.c.b16 %v1666, %v1665
      %v1691 = vpack.c.b16 %v1668, %v1667
      %v1692 = vpack.c.b16 %v1670, %v1669
      %v1693 = vpack.c.b16 %v1672, %v1671
      %v1694 = vpack.c.b16 %v1674, %v1673
      %v1695 = vpack.c.b16 %v1676, %v1675
      %v1696 = vpack.c.b16 %v1678, %v1677
      %v1698 = vunpack.c.l.b16 %v1593
      %v1699 = vpack.c.b16 %v1698, %v1698
      %v1701 = vshrl.u32 %v1679, 16
      %v1703 = vshll.u32 %v1679, 16
      %v1705 = vrot.slane %v1703, 1
      %v1706 = vor.u32 %v1701, %v1705
      %v1708 = vshll.u32 %v1680, 16
      %v1710 = vrot.slane %v1708, 1
      %v1711 = vsel %vm315, %v1706, %v1710
      %v1712 = vshrl.u32 %v1680, 16
      %v1714 = vor.u32 %v1712, %v1710
      %v1716 = vshll.u32 %v1681, 16
      %v1718 = vrot.slane %v1716, 1
      %v1719 = vsel %vm315, %v1714, %v1718
      %v1720 = vshrl.u32 %v1681, 16
      %v1722 = vor.u32 %v1720, %v1718
      %v1724 = vshll.u32 %v1682, 16
      %v1726 = vrot.slane %v1724, 1
      %v1727 = vsel %vm315, %v1722, %v1726
      %v1728 = vshrl.u32 %v1682, 16
      %v1730 = vor.u32 %v1728, %v1726
      %v1732 = vshll.u32 %v1683, 16
      %v1734 = vrot.slane %v1732, 1
      %v1735 = vsel %vm315, %v1730, %v1734
      %v1736 = vshrl.u32 %v1683, 16
      %v1738 = vor.u32 %v1736, %v1734
      %v1740 = vshll.u32 %v1684, 16
      %v1742 = vrot.slane %v1740, 1
      %v1743 = vsel %vm315, %v1738, %v1742
      %v1744 = vshrl.u32 %v1684, 16
      %v1746 = vor.u32 %v1744, %v1742
      %v1748 = vshll.u32 %v1685, 16
      %v1750 = vrot.slane %v1748, 1
      %v1751 = vsel %vm315, %v1746, %v1750
      %v1752 = vshrl.u32 %v1685, 16
      %v1754 = vor.u32 %v1752, %v1750
      %v1756 = vshll.u32 %v1686, 16
      %v1758 = vrot.slane %v1756, 1
      %v1759 = vsel %vm315, %v1754, %v1758
      %v1760 = vshrl.u32 %v1686, 16
      %v1762 = vor.u32 %v1760, %v1758
      %v1764 = vshll.u32 %v1687, 16
      %v1766 = vrot.slane %v1764, 1
      %v1767 = vsel %vm315, %v1762, %v1766
      %v1768 = vshrl.u32 %v1687, 16
      %v1770 = vor.u32 %v1768, %v1766
      %v1772 = vshll.u32 %v1688, 16
      %v1774 = vrot.slane %v1772, 1
      %v1775 = vsel %vm315, %v1770, %v1774
      %v1776 = vshrl.u32 %v1688, 16
      %v1778 = vor.u32 %v1776, %v1774
      %v1780 = vshll.u32 %v1689, 16
      %v1782 = vrot.slane %v1780, 1
      %v1783 = vsel %vm315, %v1778, %v1782
      %v1784 = vshrl.u32 %v1689, 16
      %v1786 = vor.u32 %v1784, %v1782
      %v1788 = vshll.u32 %v1690, 16
      %v1790 = vrot.slane %v1788, 1
      %v1791 = vsel %vm315, %v1786, %v1790
      %v1792 = vshrl.u32 %v1690, 16
      %v1794 = vor.u32 %v1792, %v1790
      %v1796 = vshll.u32 %v1691, 16
      %v1798 = vrot.slane %v1796, 1
      %v1799 = vsel %vm315, %v1794, %v1798
      %v1800 = vshrl.u32 %v1691, 16
      %v1802 = vor.u32 %v1800, %v1798
      %v1804 = vshll.u32 %v1692, 16
      %v1806 = vrot.slane %v1804, 1
      %v1807 = vsel %vm315, %v1802, %v1806
      %v1808 = vshrl.u32 %v1692, 16
      %v1810 = vor.u32 %v1808, %v1806
      %v1812 = vshll.u32 %v1693, 16
      %v1814 = vrot.slane %v1812, 1
      %v1815 = vsel %vm315, %v1810, %v1814
      %v1816 = vshrl.u32 %v1693, 16
      %v1818 = vor.u32 %v1816, %v1814
      %v1820 = vshll.u32 %v1694, 16
      %v1822 = vrot.slane %v1820, 1
      %v1823 = vsel %vm315, %v1818, %v1822
      %v1824 = vshrl.u32 %v1694, 16
      %v1826 = vor.u32 %v1824, %v1822
      %v1828 = vshll.u32 %v1695, 16
      %v1830 = vrot.slane %v1828, 1
      %v1831 = vsel %vm315, %v1826, %v1830
      %v1832 = vshrl.u32 %v1695, 16
      %v1834 = vor.u32 %v1832, %v1830
      %v1836 = vshll.u32 %v1696, 16
      %v1838 = vrot.slane %v1836, 1
      %v1839 = vsel %vm315, %v1834, %v1838
      %v1840 = vshrl.u32 %v1696, 16
      %v1842 = vor.u32 %v1840, %v1838
      %v1844 = vshll.u32 %v1699, 16
      %v1846 = vrot.slane %v1844, 1
      %v1847 = vsel %vm315, %v1842, %v1846
      %1848 = vrot.lane.b32.xlu0 %v1711, 2
      %v1849 = vpop.permute.xlu0 %1848
      %1850 = vrot.lane.b32.xlu0 %v1719, 2
      %v1851 = vpop.permute.xlu0 %1850
      %1852 = vrot.lane.b32.xlu0 %v1727, 2
      %v1853 = vpop.permute.xlu0 %1852
      %1854 = vrot.lane.b32.xlu0 %v1735, 2
      %v1855 = vpop.permute.xlu0 %1854
      %1856 = vrot.lane.b32.xlu0 %v1743, 2
      %v1857 = vpop.permute.xlu0 %1856
      %1858 = vrot.lane.b32.xlu0 %v1751, 2
      %v1859 = vpop.permute.xlu0 %1858
      %1860 = vrot.lane.b32.xlu0 %v1759, 2
      %v1861 = vpop.permute.xlu0 %1860
      %1862 = vrot.lane.b32.xlu0 %v1767, 2
      %v1863 = vpop.permute.xlu0 %1862
      %1864 = vrot.lane.b32.xlu0 %v1775, 2
      %v1865 = vpop.permute.xlu0 %1864
      %1866 = vrot.lane.b32.xlu0 %v1783, 2
      %v1867 = vpop.permute.xlu0 %1866
      %1868 = vrot.lane.b32.xlu0 %v1791, 2
      %v1869 = vpop.permute.xlu0 %1868
      %1870 = vrot.lane.b32.xlu0 %v1799, 2
      %v1871 = vpop.permute.xlu0 %1870
      %1872 = vrot.lane.b32.xlu0 %v1807, 2
      %v1873 = vpop.permute.xlu0 %1872
      %1874 = vrot.lane.b32.xlu0 %v1815, 2
      %v1875 = vpop.permute.xlu0 %1874
      %1876 = vrot.lane.b32.xlu0 %v1823, 2
      %v1877 = vpop.permute.xlu0 %1876
      %1878 = vrot.lane.b32.xlu0 %v1831, 2
      %v1879 = vpop.permute.xlu0 %1878
      %1880 = vrot.lane.b32.xlu0 %v1839, 2
      %v1881 = vpop.permute.xlu0 %1880
      %1882 = vrot.lane.b32.xlu0 %v1847, 2
      %v1883 = vpop.permute.xlu0 %1882
      %v1885 = vunpack.c.l.b16 %v1594
      %v1886 = vpack.c.b16 %v1644, %v1885
      %v1887 = vrot.slane %v1886, 1
      %v1888 = vrot.slane %v1680, 1
      %v1889 = vsel %vm503, %v1887, %v1888
      %v1890 = vrot.slane %v1681, 1
      %v1891 = vsel %vm503, %v1888, %v1890
      %v1892 = vrot.slane %v1682, 1
      %v1893 = vsel %vm503, %v1890, %v1892
      %v1894 = vrot.slane %v1683, 1
      %v1895 = vsel %vm503, %v1892, %v1894
      %v1896 = vrot.slane %v1684, 1
      %v1897 = vsel %vm503, %v1894, %v1896
      %v1898 = vrot.slane %v1685, 1
      %v1899 = vsel %vm503, %v1896, %v1898
      %v1900 = vrot.slane %v1686, 1
      %v1901 = vsel %vm503, %v1898, %v1900
      %v1902 = vrot.slane %v1687, 1
      %v1903 = vsel %vm503, %v1900, %v1902
      %v1904 = vrot.slane %v1688, 1
      %v1905 = vsel %vm503, %v1902, %v1904
      %v1906 = vrot.slane %v1689, 1
      %v1907 = vsel %vm503, %v1904, %v1906
      %v1908 = vrot.slane %v1690, 1
      %v1909 = vsel %vm503, %v1906, %v1908
      %v1910 = vrot.slane %v1691, 1
      %v1911 = vsel %vm503, %v1908, %v1910
      %v1912 = vrot.slane %v1692, 1
      %v1913 = vsel %vm503, %v1910, %v1912
      %v1914 = vrot.slane %v1693, 1
      %v1915 = vsel %vm503, %v1912, %v1914
      %v1916 = vrot.slane %v1694, 1
      %v1917 = vsel %vm503, %v1914, %v1916
      %v1918 = vrot.slane %v1695, 1
      %v1919 = vsel %vm503, %v1916, %v1918
      %v1920 = vrot.slane %v1696, 1
      %v1921 = vsel %vm503, %v1918, %v1920
      %v1922 = vrot.slane %v1699, 1
      %v1923 = vsel %vm503, %v1920, %v1922
      %1924 = vrot.lane.b32.xlu0 %v1889, 4
      %v1925 = vpop.permute.xlu0 %1924
      %1926 = vrot.lane.b32.xlu0 %v1891, 4
      %v1927 = vpop.permute.xlu0 %1926
      %1928 = vrot.lane.b32.xlu0 %v1893, 4
      %v1929 = vpop.permute.xlu0 %1928
      %1930 = vrot.lane.b32.xlu0 %v1895, 4
      %v1931 = vpop.permute.xlu0 %1930
      %1932 = vrot.lane.b32.xlu0 %v1897, 4
      %v1933 = vpop.permute.xlu0 %1932
      %1934 = vrot.lane.b32.xlu0 %v1899, 4
      %v1935 = vpop.permute.xlu0 %1934
      %1936 = vrot.lane.b32.xlu0 %v1901, 4
      %v1937 = vpop.permute.xlu0 %1936
      %1938 = vrot.lane.b32.xlu0 %v1903, 4
      %v1939 = vpop.permute.xlu0 %1938
      %1940 = vrot.lane.b32.xlu0 %v1905, 4
      %v1941 = vpop.permute.xlu0 %1940
      %1942 = vrot.lane.b32.xlu0 %v1907, 4
      %v1943 = vpop.permute.xlu0 %1942
      %1944 = vrot.lane.b32.xlu0 %v1909, 4
      %v1945 = vpop.permute.xlu0 %1944
      %1946 = vrot.lane.b32.xlu0 %v1911, 4
      %v1947 = vpop.permute.xlu0 %1946
      %1948 = vrot.lane.b32.xlu0 %v1913, 4
      %v1949 = vpop.permute.xlu0 %1948
      %1950 = vrot.lane.b32.xlu0 %v1915, 4
      %v1951 = vpop.permute.xlu0 %1950
      %1952 = vrot.lane.b32.xlu0 %v1917, 4
      %v1953 = vpop.permute.xlu0 %1952
      %1954 = vrot.lane.b32.xlu0 %v1919, 4
      %v1955 = vpop.permute.xlu0 %1954
      %1956 = vrot.lane.b32.xlu0 %v1921, 4
      %v1957 = vpop.permute.xlu0 %1956
      %1958 = vrot.lane.b32.xlu0 %v1923, 4
      %v1959 = vpop.permute.xlu0 %1958
      %v1964 = vunpack.c.l.b16 %v1595
      %v1965 = vunpack.c.l.b16 %v1596
      %v1966 = vunpack.c.l.b16 %v1597
      %v1967 = vunpack.c.l.b16 %v1598
      %v1968 = vpack.c.b16 %v1646, %v1964
      %v1969 = vpack.c.b16 %v1966, %v1965
      %v1970 = vpack.c.b16 %v1967, %v1967
      %v1971 = vrot.slane %v1968, 1
      %v1972 = vsel %vm503, %v1971, %v1890
      %v1973 = vrot.slane %v1969, 1
      %v1974 = vsel %vm503, %v1920, %v1973
      %v1975 = vrot.slane %v1970, 1
      %v1976 = vsel %vm503, %v1973, %v1975
      %1977 = vrot.lane.b32.xlu0 %v1972, 6
      %v1978 = vpop.permute.xlu0 %1977
      %1979 = vrot.lane.b32.xlu0 %v1893, 6
      %v1980 = vpop.permute.xlu0 %1979
      %1981 = vrot.lane.b32.xlu0 %v1895, 6
      %v1982 = vpop.permute.xlu0 %1981
      %1983 = vrot.lane.b32.xlu0 %v1897, 6
      %v1984 = vpop.permute.xlu0 %1983
      %1985 = vrot.lane.b32.xlu0 %v1899, 6
      %v1986 = vpop.permute.xlu0 %1985
      %1987 = vrot.lane.b32.xlu0 %v1901, 6
      %v1988 = vpop.permute.xlu0 %1987
      %1989 = vrot.lane.b32.xlu0 %v1903, 6
      %v1990 = vpop.permute.xlu0 %1989
      %1991 = vrot.lane.b32.xlu0 %v1905, 6
      %v1992 = vpop.permute.xlu0 %1991
      %1993 = vrot.lane.b32.xlu0 %v1907, 6
      %v1994 = vpop.permute.xlu0 %1993
      %1995 = vrot.lane.b32.xlu0 %v1909, 6
      %v1996 = vpop.permute.xlu0 %1995
      %1997 = vrot.lane.b32.xlu0 %v1911, 6
      %v1998 = vpop.permute.xlu0 %1997
      %1999 = vrot.lane.b32.xlu0 %v1913, 6
      %v2000 = vpop.permute.xlu0 %1999
      %2001 = vrot.lane.b32.xlu0 %v1915, 6
      %v2002 = vpop.permute.xlu0 %2001
      %2003 = vrot.lane.b32.xlu0 %v1917, 6
      %v2004 = vpop.permute.xlu0 %2003
      %2005 = vrot.lane.b32.xlu0 %v1919, 6
      %v2006 = vpop.permute.xlu0 %2005
      %2007 = vrot.lane.b32.xlu0 %v1921, 6
      %v2008 = vpop.permute.xlu0 %2007
      %2009 = vrot.lane.b32.xlu0 %v1974, 6
      %v2010 = vpop.permute.xlu0 %2009
      %2011 = vrot.lane.b32.xlu0 %v1976, 6
      %v2012 = vpop.permute.xlu0 %2011
      %v2014 = vunpack.c.l.b16 %v1599
      %v2015 = vpack.c.b16 %v2014, %v2014
      %v2017 = vshrl.u32 %v1968, 16
      %v2019 = vrot.slane %v2017, 1
      %v2020 = vshll.u32 %v1968, 16
      %v2022 = vrot.slane %v2020, 2
      %v2023 = vor.u32 %v2019, %v2022
      %v2024 = vrot.slane %v1720, 1
      %v2025 = vrot.slane %v1716, 2
      %v2026 = vor.u32 %v2024, %v2025
      %v2027 = vsel %vm633, %v2023, %v2026
      %v2028 = vrot.slane %v1728, 1
      %v2029 = vrot.slane %v1724, 2
      %v2030 = vor.u32 %v2028, %v2029
      %v2031 = vsel %vm633, %v2026, %v2030
      %v2032 = vrot.slane %v1736, 1
      %v2033 = vrot.slane %v1732, 2
      %v2034 = vor.u32 %v2032, %v2033
      %v2035 = vsel %vm633, %v2030, %v2034
      %v2036 = vrot.slane %v1744, 1
      %v2037 = vrot.slane %v1740, 2
      %v2038 = vor.u32 %v2036, %v2037
      %v2039 = vsel %vm633, %v2034, %v2038
      %v2040 = vrot.slane %v1752, 1
      %v2041 = vrot.slane %v1748, 2
      %v2042 = vor.u32 %v2040, %v2041
      %v2043 = vsel %vm633, %v2038, %v2042
      %v2044 = vrot.slane %v1760, 1
      %v2045 = vrot.slane %v1756, 2
      %v2046 = vor.u32 %v2044, %v2045
      %v2047 = vsel %vm633, %v2042, %v2046
      %v2048 = vrot.slane %v1768, 1
      %v2049 = vrot.slane %v1764, 2
      %v2050 = vor.u32 %v2048, %v2049
      %v2051 = vsel %vm633, %v2046, %v2050
      %v2052 = vrot.slane %v1776, 1
      %v2053 = vrot.slane %v1772, 2
      %v2054 = vor.u32 %v2052, %v2053
      %v2055 = vsel %vm633, %v2050, %v2054
      %v2056 = vrot.slane %v1784, 1
      %v2057 = vrot.slane %v1780, 2
      %v2058 = vor.u32 %v2056, %v2057
      %v2059 = vsel %vm633, %v2054, %v2058
      %v2060 = vrot.slane %v1792, 1
      %v2061 = vrot.slane %v1788, 2
      %v2062 = vor.u32 %v2060, %v2061
      %v2063 = vsel %vm633, %v2058, %v2062
      %v2064 = vrot.slane %v1800, 1
      %v2065 = vrot.slane %v1796, 2
      %v2066 = vor.u32 %v2064, %v2065
      %v2067 = vsel %vm633, %v2062, %v2066
      %v2068 = vrot.slane %v1808, 1
      %v2069 = vrot.slane %v1804, 2
      %v2070 = vor.u32 %v2068, %v2069
      %v2071 = vsel %vm633, %v2066, %v2070
      %v2072 = vrot.slane %v1816, 1
      %v2073 = vrot.slane %v1812, 2
      %v2074 = vor.u32 %v2072, %v2073
      %v2075 = vsel %vm633, %v2070, %v2074
      %v2076 = vrot.slane %v1824, 1
      %v2077 = vrot.slane %v1820, 2
      %v2078 = vor.u32 %v2076, %v2077
      %v2079 = vsel %vm633, %v2074, %v2078
      %v2080 = vrot.slane %v1832, 1
      %v2081 = vrot.slane %v1828, 2
      %v2082 = vor.u32 %v2080, %v2081
      %v2083 = vsel %vm633, %v2078, %v2082
      %v2084 = vrot.slane %v1840, 1
      %v2085 = vrot.slane %v1836, 2
      %v2086 = vor.u32 %v2084, %v2085
      %v2087 = vsel %vm633, %v2082, %v2086
      %v2089 = vshrl.u32 %v1969, 16
      %v2091 = vrot.slane %v2089, 1
      %v2092 = vshll.u32 %v1969, 16
      %v2094 = vrot.slane %v2092, 2
      %v2095 = vor.u32 %v2091, %v2094
      %v2096 = vsel %vm633, %v2086, %v2095
      %v2098 = vshrl.u32 %v2015, 16
      %v2100 = vrot.slane %v2098, 1
      %v2101 = vshll.u32 %v2015, 16
      %v2103 = vrot.slane %v2101, 2
      %v2104 = vor.u32 %v2100, %v2103
      %v2105 = vsel %vm633, %v2095, %v2104
      %2106 = vrot.lane.b32.xlu0 %v2027, 8
      %v2107 = vpop.permute.xlu0 %2106
      %2108 = vrot.lane.b32.xlu0 %v2031, 8
      %v2109 = vpop.permute.xlu0 %2108
      %2110 = vrot.lane.b32.xlu0 %v2035, 8
      %v2111 = vpop.permute.xlu0 %2110
      %2112 = vrot.lane.b32.xlu0 %v2039, 8
      %v2113 = vpop.permute.xlu0 %2112
      %2114 = vrot.lane.b32.xlu0 %v2043, 8
      %v2115 = vpop.permute.xlu0 %2114
      %2116 = vrot.lane.b32.xlu0 %v2047, 8
      %v2117 = vpop.permute.xlu0 %2116
      %2118 = vrot.lane.b32.xlu0 %v2051, 8
      %v2119 = vpop.permute.xlu0 %2118
      %2120 = vrot.lane.b32.xlu0 %v2055, 8
      %v2121 = vpop.permute.xlu0 %2120
      %2122 = vrot.lane.b32.xlu0 %v2059, 8
      %v2123 = vpop.permute.xlu0 %2122
      %2124 = vrot.lane.b32.xlu0 %v2063, 8
      %v2125 = vpop.permute.xlu0 %2124
      %2126 = vrot.lane.b32.xlu0 %v2067, 8
      %v2127 = vpop.permute.xlu0 %2126
      %2128 = vrot.lane.b32.xlu0 %v2071, 8
      %v2129 = vpop.permute.xlu0 %2128
      %2130 = vrot.lane.b32.xlu0 %v2075, 8
      %v2131 = vpop.permute.xlu0 %2130
      %2132 = vrot.lane.b32.xlu0 %v2079, 8
      %v2133 = vpop.permute.xlu0 %2132
      %2134 = vrot.lane.b32.xlu0 %v2083, 8
      %v2135 = vpop.permute.xlu0 %2134
      %2136 = vrot.lane.b32.xlu0 %v2087, 8
      %v2137 = vpop.permute.xlu0 %2136
      %2138 = vrot.lane.b32.xlu0 %v2096, 8
      %v2139 = vpop.permute.xlu0 %2138
      %2140 = vrot.lane.b32.xlu0 %v2105, 8
      %v2141 = vpop.permute.xlu0 %2140
      %v2143 = vunpack.c.l.b16 %v1600
      %v2144 = vpack.c.b16 %v1646, %v2143
      %v2145 = vrot.slane %v2144, 2
      %v2146 = vrot.slane %v1681, 2
      %v2147 = vsel %vm763, %v2145, %v2146
      %v2148 = vrot.slane %v1682, 2
      %v2149 = vsel %vm763, %v2146, %v2148
      %v2150 = vrot.slane %v1683, 2
      %v2151 = vsel %vm763, %v2148, %v2150
      %v2152 = vrot.slane %v1684, 2
      %v2153 = vsel %vm763, %v2150, %v2152
      %v2154 = vrot.slane %v1685, 2
      %v2155 = vsel %vm763, %v2152, %v2154
      %v2156 = vrot.slane %v1686, 2
      %v2157 = vsel %vm763, %v2154, %v2156
      %v2158 = vrot.slane %v1687, 2
      %v2159 = vsel %vm763, %v2156, %v2158
      %v2160 = vrot.slane %v1688, 2
      %v2161 = vsel %vm763, %v2158, %v2160
      %v2162 = vrot.slane %v1689, 2
      %v2163 = vsel %vm763, %v2160, %v2162
      %v2164 = vrot.slane %v1690, 2
      %v2165 = vsel %vm763, %v2162, %v2164
      %v2166 = vrot.slane %v1691, 2
      %v2167 = vsel %vm763, %v2164, %v2166
      %v2168 = vrot.slane %v1692, 2
      %v2169 = vsel %vm763, %v2166, %v2168
      %v2170 = vrot.slane %v1693, 2
      %v2171 = vsel %vm763, %v2168, %v2170
      %v2172 = vrot.slane %v1694, 2
      %v2173 = vsel %vm763, %v2170, %v2172
      %v2174 = vrot.slane %v1695, 2
      %v2175 = vsel %vm763, %v2172, %v2174
      %v2176 = vrot.slane %v1696, 2
      %v2177 = vsel %vm763, %v2174, %v2176
      %v2178 = vrot.slane %v1969, 2
      %v2179 = vsel %vm763, %v2176, %v2178
      %v2180 = vrot.slane %v2015, 2
      %v2181 = vsel %vm763, %v2178, %v2180
      %2182 = vrot.lane.b32.xlu0 %v2147, 10
      %v2183 = vpop.permute.xlu0 %2182
      %2184 = vrot.lane.b32.xlu0 %v2149, 10
      %v2185 = vpop.permute.xlu0 %2184
      %2186 = vrot.lane.b32.xlu0 %v2151, 10
      %v2187 = vpop.permute.xlu0 %2186
      %2188 = vrot.lane.b32.xlu0 %v2153, 10
      %v2189 = vpop.permute.xlu0 %2188
      %2190 = vrot.lane.b32.xlu0 %v2155, 10
      %v2191 = vpop.permute.xlu0 %2190
      %2192 = vrot.lane.b32.xlu0 %v2157, 10
      %v2193 = vpop.permute.xlu0 %2192
      %2194 = vrot.lane.b32.xlu0 %v2159, 10
      %v2195 = vpop.permute.xlu0 %2194
      %2196 = vrot.lane.b32.xlu0 %v2161, 10
      %v2197 = vpop.permute.xlu0 %2196
      %2198 = vrot.lane.b32.xlu0 %v2163, 10
      %v2199 = vpop.permute.xlu0 %2198
      %2200 = vrot.lane.b32.xlu0 %v2165, 10
      %v2201 = vpop.permute.xlu0 %2200
      %2202 = vrot.lane.b32.xlu0 %v2167, 10
      %v2203 = vpop.permute.xlu0 %2202
      %2204 = vrot.lane.b32.xlu0 %v2169, 10
      %v2205 = vpop.permute.xlu0 %2204
      %2206 = vrot.lane.b32.xlu0 %v2171, 10
      %v2207 = vpop.permute.xlu0 %2206
      %2208 = vrot.lane.b32.xlu0 %v2173, 10
      %v2209 = vpop.permute.xlu0 %2208
      %2210 = vrot.lane.b32.xlu0 %v2175, 10
      %v2211 = vpop.permute.xlu0 %2210
      %2212 = vrot.lane.b32.xlu0 %v2177, 10
      %v2213 = vpop.permute.xlu0 %2212
      %2214 = vrot.lane.b32.xlu0 %v2179, 10
      %v2215 = vpop.permute.xlu0 %2214
      %2216 = vrot.lane.b32.xlu0 %v2181, 10
      %v2217 = vpop.permute.xlu0 %2216
      %v2222 = vunpack.c.l.b16 %v1601
      %v2223 = vunpack.c.l.b16 %v1602
      %v2224 = vunpack.c.l.b16 %v1603
      %v2225 = vunpack.c.l.b16 %v1604
      %v2226 = vpack.c.b16 %v1648, %v2222
      %v2227 = vpack.c.b16 %v2224, %v2223
      %v2228 = vpack.c.b16 %v2225, %v2225
      %v2229 = vrot.slane %v2226, 2
      %v2230 = vsel %vm763, %v2229, %v2148
      %v2231 = vrot.slane %v2227, 2
      %v2232 = vsel %vm763, %v2178, %v2231
      %v2233 = vrot.slane %v2228, 2
      %v2234 = vsel %vm763, %v2231, %v2233
      %2235 = vrot.lane.b32.xlu0 %v2230, 12
      %v2236 = vpop.permute.xlu0 %2235
      %2237 = vrot.lane.b32.xlu0 %v2151, 12
      %v2238 = vpop.permute.xlu0 %2237
      %2239 = vrot.lane.b32.xlu0 %v2153, 12
      %v2240 = vpop.permute.xlu0 %2239
      %2241 = vrot.lane.b32.xlu0 %v2155, 12
      %v2242 = vpop.permute.xlu0 %2241
      %2243 = vrot.lane.b32.xlu0 %v2157, 12
      %v2244 = vpop.permute.xlu0 %2243
      %2245 = vrot.lane.b32.xlu0 %v2159, 12
      %v2246 = vpop.permute.xlu0 %2245
      %2247 = vrot.lane.b32.xlu0 %v2161, 12
      %v2248 = vpop.permute.xlu0 %2247
      %2249 = vrot.lane.b32.xlu0 %v2163, 12
      %v2250 = vpop.permute.xlu0 %2249
      %2251 = vrot.lane.b32.xlu0 %v2165, 12
      %v2252 = vpop.permute.xlu0 %2251
      %2253 = vrot.lane.b32.xlu0 %v2167, 12
      %v2254 = vpop.permute.xlu0 %2253
      %2255 = vrot.lane.b32.xlu0 %v2169, 12
      %v2256 = vpop.permute.xlu0 %2255
      %2257 = vrot.lane.b32.xlu0 %v2171, 12
      %v2258 = vpop.permute.xlu0 %2257
      %2259 = vrot.lane.b32.xlu0 %v2173, 12
      %v2260 = vpop.permute.xlu0 %2259
      %2261 = vrot.lane.b32.xlu0 %v2175, 12
      %v2262 = vpop.permute.xlu0 %2261
      %2263 = vrot.lane.b32.xlu0 %v2177, 12
      %v2264 = vpop.permute.xlu0 %2263
      %2265 = vrot.lane.b32.xlu0 %v2179, 12
      %v2266 = vpop.permute.xlu0 %2265
      %2267 = vrot.lane.b32.xlu0 %v2232, 12
      %v2268 = vpop.permute.xlu0 %2267
      %2269 = vrot.lane.b32.xlu0 %v2234, 12
      %v2270 = vpop.permute.xlu0 %2269
      %v2272 = vunpack.c.l.b16 %v1605
      %v2273 = vpack.c.b16 %v2272, %v2272
      %v2275 = vshrl.u32 %v2226, 16
      %v2277 = vrot.slane %v2275, 2
      %v2278 = vshll.u32 %v2226, 16
      %v2280 = vrot.slane %v2278, 3
      %v2281 = vor.u32 %v2277, %v2280
      %v2282 = vrot.slane %v1728, 2
      %v2283 = vrot.slane %v1724, 3
      %v2284 = vor.u32 %v2282, %v2283
      %v2285 = vsel %vm893, %v2281, %v2284
      %v2286 = vrot.slane %v1736, 2
      %v2287 = vrot.slane %v1732, 3
      %v2288 = vor.u32 %v2286, %v2287
      %v2289 = vsel %vm893, %v2284, %v2288
      %v2290 = vrot.slane %v1744, 2
      %v2291 = vrot.slane %v1740, 3
      %v2292 = vor.u32 %v2290, %v2291
      %v2293 = vsel %vm893, %v2288, %v2292
      %v2294 = vrot.slane %v1752, 2
      %v2295 = vrot.slane %v1748, 3
      %v2296 = vor.u32 %v2294, %v2295
      %v2297 = vsel %vm893, %v2292, %v2296
      %v2298 = vrot.slane %v1760, 2
      %v2299 = vrot.slane %v1756, 3
      %v2300 = vor.u32 %v2298, %v2299
      %v2301 = vsel %vm893, %v2296, %v2300
      %v2302 = vrot.slane %v1768, 2
      %v2303 = vrot.slane %v1764, 3
      %v2304 = vor.u32 %v2302, %v2303
      %v2305 = vsel %vm893, %v2300, %v2304
      %v2306 = vrot.slane %v1776, 2
      %v2307 = vrot.slane %v1772, 3
      %v2308 = vor.u32 %v2306, %v2307
      %v2309 = vsel %vm893, %v2304, %v2308
      %v2310 = vrot.slane %v1784, 2
      %v2311 = vrot.slane %v1780, 3
      %v2312 = vor.u32 %v2310, %v2311
      %v2313 = vsel %vm893, %v2308, %v2312
      %v2314 = vrot.slane %v1792, 2
      %v2315 = vrot.slane %v1788, 3
      %v2316 = vor.u32 %v2314, %v2315
      %v2317 = vsel %vm893, %v2312, %v2316
      %v2318 = vrot.slane %v1800, 2
      %v2319 = vrot.slane %v1796, 3
      %v2320 = vor.u32 %v2318, %v2319
      %v2321 = vsel %vm893, %v2316, %v2320
      %v2322 = vrot.slane %v1808, 2
      %v2323 = vrot.slane %v1804, 3
      %v2324 = vor.u32 %v2322, %v2323
      %v2325 = vsel %vm893, %v2320, %v2324
      %v2326 = vrot.slane %v1816, 2
      %v2327 = vrot.slane %v1812, 3
      %v2328 = vor.u32 %v2326, %v2327
      %v2329 = vsel %vm893, %v2324, %v2328
      %v2330 = vrot.slane %v1824, 2
      %v2331 = vrot.slane %v1820, 3
      %v2332 = vor.u32 %v2330, %v2331
      %v2333 = vsel %vm893, %v2328, %v2332
      %v2334 = vrot.slane %v1832, 2
      %v2335 = vrot.slane %v1828, 3
      %v2336 = vor.u32 %v2334, %v2335
      %v2337 = vsel %vm893, %v2332, %v2336
      %v2338 = vrot.slane %v1840, 2
      %v2339 = vrot.slane %v1836, 3
      %v2340 = vor.u32 %v2338, %v2339
      %v2341 = vsel %vm893, %v2336, %v2340
      %v2342 = vrot.slane %v2089, 2
      %v2343 = vrot.slane %v2092, 3
      %v2344 = vor.u32 %v2342, %v2343
      %v2345 = vsel %vm893, %v2340, %v2344
      %v2347 = vshrl.u32 %v2227, 16
      %v2349 = vrot.slane %v2347, 2
      %v2350 = vshll.u32 %v2227, 16
      %v2352 = vrot.slane %v2350, 3
      %v2353 = vor.u32 %v2349, %v2352
      %v2354 = vsel %vm893, %v2344, %v2353
      %v2356 = vshrl.u32 %v2273, 16
      %v2358 = vrot.slane %v2356, 2
      %v2359 = vshll.u32 %v2273, 16
      %v2361 = vrot.slane %v2359, 3
      %v2362 = vor.u32 %v2358, %v2361
      %v2363 = vsel %vm893, %v2353, %v2362
      %2364 = vrot.lane.b32.xlu0 %v2285, 14
      %v2365 = vpop.permute.xlu0 %2364
      %2366 = vrot.lane.b32.xlu0 %v2289, 14
      %v2367 = vpop.permute.xlu0 %2366
      %2368 = vrot.lane.b32.xlu0 %v2293, 14
      %v2369 = vpop.permute.xlu0 %2368
      %2370 = vrot.lane.b32.xlu0 %v2297, 14
      %v2371 = vpop.permute.xlu0 %2370
      %2372 = vrot.lane.b32.xlu0 %v2301, 14
      %v2373 = vpop.permute.xlu0 %2372
      %2374 = vrot.lane.b32.xlu0 %v2305, 14
      %v2375 = vpop.permute.xlu0 %2374
      %2376 = vrot.lane.b32.xlu0 %v2309, 14
      %v2377 = vpop.permute.xlu0 %2376
      %2378 = vrot.lane.b32.xlu0 %v2313, 14
      %v2379 = vpop.permute.xlu0 %2378
      %2380 = vrot.lane.b32.xlu0 %v2317, 14
      %v2381 = vpop.permute.xlu0 %2380
      %2382 = vrot.lane.b32.xlu0 %v2321, 14
      %v2383 = vpop.permute.xlu0 %2382
      %2384 = vrot.lane.b32.xlu0 %v2325, 14
      %v2385 = vpop.permute.xlu0 %2384
      %2386 = vrot.lane.b32.xlu0 %v2329, 14
      %v2387 = vpop.permute.xlu0 %2386
      %2388 = vrot.lane.b32.xlu0 %v2333, 14
      %v2389 = vpop.permute.xlu0 %2388
      %2390 = vrot.lane.b32.xlu0 %v2337, 14
      %v2391 = vpop.permute.xlu0 %2390
      %2392 = vrot.lane.b32.xlu0 %v2341, 14
      %v2393 = vpop.permute.xlu0 %2392
      %2394 = vrot.lane.b32.xlu0 %v2345, 14
      %v2395 = vpop.permute.xlu0 %2394
      %2396 = vrot.lane.b32.xlu0 %v2354, 14
      %v2397 = vpop.permute.xlu0 %2396
      %2398 = vrot.lane.b32.xlu0 %v2363, 14
      %v2399 = vpop.permute.xlu0 %2398
      %v2401 = vunpack.c.l.b16 %v1606
      %v2402 = vpack.c.b16 %v1648, %v2401
      %v2403 = vrot.slane %v2402, 3
      %v2404 = vrot.slane %v1682, 3
      %v2405 = vsel %vm1023, %v2403, %v2404
      %v2406 = vrot.slane %v1683, 3
      %v2407 = vsel %vm1023, %v2404, %v2406
      %v2408 = vrot.slane %v1684, 3
      %v2409 = vsel %vm1023, %v2406, %v2408
      %v2410 = vrot.slane %v1685, 3
      %v2411 = vsel %vm1023, %v2408, %v2410
      %v2412 = vrot.slane %v1686, 3
      %v2413 = vsel %vm1023, %v2410, %v2412
      %v2414 = vrot.slane %v1687, 3
      %v2415 = vsel %vm1023, %v2412, %v2414
      %v2416 = vrot.slane %v1688, 3
      %v2417 = vsel %vm1023, %v2414, %v2416
      %v2418 = vrot.slane %v1689, 3
      %v2419 = vsel %vm1023, %v2416, %v2418
      %v2420 = vrot.slane %v1690, 3
      %v2421 = vsel %vm1023, %v2418, %v2420
      %v2422 = vrot.slane %v1691, 3
      %v2423 = vsel %vm1023, %v2420, %v2422
      %v2424 = vrot.slane %v1692, 3
      %v2425 = vsel %vm1023, %v2422, %v2424
      %v2426 = vrot.slane %v1693, 3
      %v2427 = vsel %vm1023, %v2424, %v2426
      %v2428 = vrot.slane %v1694, 3
      %v2429 = vsel %vm1023, %v2426, %v2428
      %v2430 = vrot.slane %v1695, 3
      %v2431 = vsel %vm1023, %v2428, %v2430
      %v2432 = vrot.slane %v1696, 3
      %v2433 = vsel %vm1023, %v2430, %v2432
      %v2434 = vrot.slane %v1969, 3
      %v2435 = vsel %vm1023, %v2432, %v2434
      %v2436 = vrot.slane %v2227, 3
      %v2437 = vsel %vm1023, %v2434, %v2436
      %v2438 = vrot.slane %v2273, 3
      %v2439 = vsel %vm1023, %v2436, %v2438
      %2440 = vrot.lane.b32.xlu0 %v2405, 16
      %v2441 = vpop.permute.xlu0 %2440
      %2442 = vrot.lane.b32.xlu0 %v2407, 16
      %v2443 = vpop.permute.xlu0 %2442
      %2444 = vrot.lane.b32.xlu0 %v2409, 16
      %v2445 = vpop.permute.xlu0 %2444
      %2446 = vrot.lane.b32.xlu0 %v2411, 16
      %v2447 = vpop.permute.xlu0 %2446
      %2448 = vrot.lane.b32.xlu0 %v2413, 16
      %v2449 = vpop.permute.xlu0 %2448
      %2450 = vrot.lane.b32.xlu0 %v2415, 16
      %v2451 = vpop.permute.xlu0 %2450
      %2452 = vrot.lane.b32.xlu0 %v2417, 16
      %v2453 = vpop.permute.xlu0 %2452
      %2454 = vrot.lane.b32.xlu0 %v2419, 16
      %v2455 = vpop.permute.xlu0 %2454
      %2456 = vrot.lane.b32.xlu0 %v2421, 16
      %v2457 = vpop.permute.xlu0 %2456
      %2458 = vrot.lane.b32.xlu0 %v2423, 16
      %v2459 = vpop.permute.xlu0 %2458
      %2460 = vrot.lane.b32.xlu0 %v2425, 16
      %v2461 = vpop.permute.xlu0 %2460
      %2462 = vrot.lane.b32.xlu0 %v2427, 16
      %v2463 = vpop.permute.xlu0 %2462
      %2464 = vrot.lane.b32.xlu0 %v2429, 16
      %v2465 = vpop.permute.xlu0 %2464
      %2466 = vrot.lane.b32.xlu0 %v2431, 16
      %v2467 = vpop.permute.xlu0 %2466
      %2468 = vrot.lane.b32.xlu0 %v2433, 16
      %v2469 = vpop.permute.xlu0 %2468
      %2470 = vrot.lane.b32.xlu0 %v2435, 16
      %v2471 = vpop.permute.xlu0 %2470
      %2472 = vrot.lane.b32.xlu0 %v2437, 16
      %v2473 = vpop.permute.xlu0 %2472
      %2474 = vrot.lane.b32.xlu0 %v2439, 16
      %v2475 = vpop.permute.xlu0 %2474
      %v2477 = vsel %vm1097, %v1679, %v1849
      %v2479 = vsel %vm1097, %v1680, %v1851
      %v2481 = vsel %vm1097, %v1681, %v1853
      %v2483 = vsel %vm1097, %v1682, %v1855
      %v2485 = vsel %vm1097, %v1683, %v1857
      %v2487 = vsel %vm1097, %v1684, %v1859
      %v2489 = vsel %vm1097, %v1685, %v1861
      %v2491 = vsel %vm1097, %v1686, %v1863
      %v2493 = vsel %vm1097, %v1687, %v1865
      %v2495 = vsel %vm1097, %v1688, %v1867
      %v2497 = vsel %vm1097, %v1689, %v1869
      %v2499 = vsel %vm1097, %v1690, %v1871
      %v2501 = vsel %vm1097, %v1691, %v1873
      %v2503 = vsel %vm1097, %v1692, %v1875
      %v2505 = vsel %vm1097, %v1693, %v1877
      %v2507 = vsel %vm1097, %v1694, %v1879
      %v2509 = vsel %vm1097, %v1695, %v1881
      %v2511 = vsel %vm1097, %v1696, %v1883
      %v2513 = vsel %vm1134, %v2477, %v1925
      %v2515 = vsel %vm1134, %v2479, %v1927
      %v2517 = vsel %vm1134, %v2481, %v1929
      %v2519 = vsel %vm1134, %v2483, %v1931
      %v2521 = vsel %vm1134, %v2485, %v1933
      %v2523 = vsel %vm1134, %v2487, %v1935
      %v2525 = vsel %vm1134, %v2489, %v1937
      %v2527 = vsel %vm1134, %v2491, %v1939
      %v2529 = vsel %vm1134, %v2493, %v1941
      %v2531 = vsel %vm1134, %v2495, %v1943
      %v2533 = vsel %vm1134, %v2497, %v1945
      %v2535 = vsel %vm1134, %v2499, %v1947
      %v2537 = vsel %vm1134, %v2501, %v1949
      %v2539 = vsel %vm1134, %v2503, %v1951
      %v2541 = vsel %vm1134, %v2505, %v1953
      %v2543 = vsel %vm1134, %v2507, %v1955
      %v2545 = vsel %vm1134, %v2509, %v1957
      %v2547 = vsel %vm1134, %v2511, %v1959
      %v2549 = vsel %vm1171, %v2513, %v1978
      %v2551 = vsel %vm1171, %v2515, %v1980
      %v2553 = vsel %vm1171, %v2517, %v1982
      %v2555 = vsel %vm1171, %v2519, %v1984
      %v2557 = vsel %vm1171, %v2521, %v1986
      %v2559 = vsel %vm1171, %v2523, %v1988
      %v2561 = vsel %vm1171, %v2525, %v1990
      %v2563 = vsel %vm1171, %v2527, %v1992
      %v2565 = vsel %vm1171, %v2529, %v1994
      %v2567 = vsel %vm1171, %v2531, %v1996
      %v2569 = vsel %vm1171, %v2533, %v1998
      %v2571 = vsel %vm1171, %v2535, %v2000
      %v2573 = vsel %vm1171, %v2537, %v2002
      %v2575 = vsel %vm1171, %v2539, %v2004
      %v2577 = vsel %vm1171, %v2541, %v2006
      %v2579 = vsel %vm1171, %v2543, %v2008
      %v2581 = vsel %vm1171, %v2545, %v2010
      %v2583 = vsel %vm1171, %v2547, %v2012
      %v2585 = vsel %vm1208, %v2549, %v2107
      %v2587 = vsel %vm1208, %v2551, %v2109
      %v2589 = vsel %vm1208, %v2553, %v2111
      %v2591 = vsel %vm1208, %v2555, %v2113
      %v2593 = vsel %vm1208, %v2557, %v2115
      %v2595 = vsel %vm1208, %v2559, %v2117
      %v2597 = vsel %vm1208, %v2561, %v2119
      %v2599 = vsel %vm1208, %v2563, %v2121
      %v2601 = vsel %vm1208, %v2565, %v2123
      %v2603 = vsel %vm1208, %v2567, %v2125
      %v2605 = vsel %vm1208, %v2569, %v2127
      %v2607 = vsel %vm1208, %v2571, %v2129
      %v2609 = vsel %vm1208, %v2573, %v2131
      %v2611 = vsel %vm1208, %v2575, %v2133
      %v2613 = vsel %vm1208, %v2577, %v2135
      %v2615 = vsel %vm1208, %v2579, %v2137
      %v2617 = vsel %vm1208, %v2581, %v2139
      %v2619 = vsel %vm1208, %v2583, %v2141
      %v2621 = vsel %vm1245, %v2585, %v2183
      %v2623 = vsel %vm1245, %v2587, %v2185
      %v2625 = vsel %vm1245, %v2589, %v2187
      %v2627 = vsel %vm1245, %v2591, %v2189
      %v2629 = vsel %vm1245, %v2593, %v2191
      %v2631 = vsel %vm1245, %v2595, %v2193
      %v2633 = vsel %vm1245, %v2597, %v2195
      %v2635 = vsel %vm1245, %v2599, %v2197
      %v2637 = vsel %vm1245, %v2601, %v2199
      %v2639 = vsel %vm1245, %v2603, %v2201
      %v2641 = vsel %vm1245, %v2605, %v2203
      %v2643 = vsel %vm1245, %v2607, %v2205
      %v2645 = vsel %vm1245, %v2609, %v2207
      %v2647 = vsel %vm1245, %v2611, %v2209
      %v2649 = vsel %vm1245, %v2613, %v2211
      %v2651 = vsel %vm1245, %v2615, %v2213
      %v2653 = vsel %vm1245, %v2617, %v2215
      %v2655 = vsel %vm1245, %v2619, %v2217
      %v2657 = vsel %vm1282, %v2621, %v2236
      %v2659 = vsel %vm1282, %v2623, %v2238
      %v2661 = vsel %vm1282, %v2625, %v2240
      %v2663 = vsel %vm1282, %v2627, %v2242
      %v2665 = vsel %vm1282, %v2629, %v2244
      %v2667 = vsel %vm1282, %v2631, %v2246
      %v2669 = vsel %vm1282, %v2633, %v2248
      %v2671 = vsel %vm1282, %v2635, %v2250
      %v2673 = vsel %vm1282, %v2637, %v2252
      %v2675 = vsel %vm1282, %v2639, %v2254
      %v2677 = vsel %vm1282, %v2641, %v2256
      %v2679 = vsel %vm1282, %v2643, %v2258
      %v2681 = vsel %vm1282, %v2645, %v2260
      %v2683 = vsel %vm1282, %v2647, %v2262
      %v2685 = vsel %vm1282, %v2649, %v2264
      %v2687 = vsel %vm1282, %v2651, %v2266
      %v2689 = vsel %vm1282, %v2653, %v2268
      %v2691 = vsel %vm1282, %v2655, %v2270
      %v2693 = vsel %vm1319, %v2657, %v2365
      %v2695 = vsel %vm1319, %v2659, %v2367
      %v2697 = vsel %vm1319, %v2661, %v2369
      %v2699 = vsel %vm1319, %v2663, %v2371
      %v2701 = vsel %vm1319, %v2665, %v2373
      %v2703 = vsel %vm1319, %v2667, %v2375
      %v2705 = vsel %vm1319, %v2669, %v2377
      %v2707 = vsel %vm1319, %v2671, %v2379
      %v2709 = vsel %vm1319, %v2673, %v2381
      %v2711 = vsel %vm1319, %v2675, %v2383
      %v2713 = vsel %vm1319, %v2677, %v2385
      %v2715 = vsel %vm1319, %v2679, %v2387
      %v2717 = vsel %vm1319, %v2681, %v2389
      %v2719 = vsel %vm1319, %v2683, %v2391
      %v2721 = vsel %vm1319, %v2685, %v2393
      %v2723 = vsel %vm1319, %v2687, %v2395
      %v2725 = vsel %vm1319, %v2689, %v2397
      %v2727 = vsel %vm1319, %v2691, %v2399
      %v2729 = vsel %vm1356, %v2693, %v2441
      %v2731 = vsel %vm1356, %v2695, %v2443
      %v2733 = vsel %vm1356, %v2697, %v2445
      %v2735 = vsel %vm1356, %v2699, %v2447
      %v2737 = vsel %vm1356, %v2701, %v2449
      %v2739 = vsel %vm1356, %v2703, %v2451
      %v2741 = vsel %vm1356, %v2705, %v2453
      %v2743 = vsel %vm1356, %v2707, %v2455
      %v2745 = vsel %vm1356, %v2709, %v2457
      %v2747 = vsel %vm1356, %v2711, %v2459
      %v2749 = vsel %vm1356, %v2713, %v2461
      %v2751 = vsel %vm1356, %v2715, %v2463
      %v2753 = vsel %vm1356, %v2717, %v2465
      %v2755 = vsel %vm1356, %v2719, %v2467
      %v2757 = vsel %vm1356, %v2721, %v2469
      %v2759 = vsel %vm1356, %v2723, %v2471
      %v2761 = vsel %vm1356, %v2725, %v2473
      %v2763 = vsel %vm1356, %v2727, %v2475
      %v2782 = vunpack.c.l.b16 %v2729
      %v2783 = vunpack.c.h.b16 %v2729
      %v2784 = vunpack.c.l.b16 %v2731
      %v2785 = vunpack.c.h.b16 %v2731
      %v2786 = vunpack.c.l.b16 %v2733
      %v2787 = vunpack.c.h.b16 %v2733
      %v2788 = vunpack.c.l.b16 %v2735
      %v2789 = vunpack.c.h.b16 %v2735
      %v2790 = vunpack.c.l.b16 %v2737
      %v2791 = vunpack.c.h.b16 %v2737
      %v2792 = vunpack.c.l.b16 %v2739
      %v2793 = vunpack.c.h.b16 %v2739
      %v2794 = vunpack.c.l.b16 %v2741
      %v2795 = vunpack.c.h.b16 %v2741
      %v2796 = vunpack.c.l.b16 %v2743
      %v2797 = vunpack.c.h.b16 %v2743
      %v2798 = vunpack.c.l.b16 %v2745
      %v2799 = vunpack.c.h.b16 %v2745
      %v2800 = vunpack.c.l.b16 %v2747
      %v2801 = vunpack.c.h.b16 %v2747
      %v2802 = vunpack.c.l.b16 %v2749
      %v2803 = vunpack.c.h.b16 %v2749
      %v2804 = vunpack.c.l.b16 %v2751
      %v2805 = vunpack.c.h.b16 %v2751
      %v2806 = vunpack.c.l.b16 %v2753
      %v2807 = vunpack.c.h.b16 %v2753
      %v2808 = vunpack.c.l.b16 %v2755
      %v2809 = vunpack.c.h.b16 %v2755
      %v2810 = vunpack.c.l.b16 %v2757
      %v2811 = vunpack.c.h.b16 %v2757
      %v2812 = vunpack.c.l.b16 %v2759
      %v2813 = vunpack.c.h.b16 %v2759
      %v2814 = vunpack.c.l.b16 %v2761
      %v2815 = vunpack.c.h.b16 %v2761
      %v2816 = vunpack.c.l.b16 %v2763
      %v2817 = vunpack.c.h.b16 %v2763
      %v2818 = vpack.c.b16 %v2782, %v2782
      %v2819 = vpack.c.b16 %v2783, %v2783
      %v2820 = vpack.c.b16 %v2784, %v2784
      %v2821 = vpack.c.b16 %v2785, %v2785
      %v2822 = vpack.c.b16 %v2786, %v2786
      %v2823 = vpack.c.b16 %v2787, %v2787
      %v2824 = vpack.c.b16 %v2788, %v2788
      %v2825 = vpack.c.b16 %v2789, %v2789
      %v2826 = vpack.c.b16 %v2790, %v2790
      %v2827 = vpack.c.b16 %v2791, %v2791
      %v2828 = vpack.c.b16 %v2792, %v2792
      %v2829 = vpack.c.b16 %v2793, %v2793
      %v2830 = vpack.c.b16 %v2794, %v2794
      %v2831 = vpack.c.b16 %v2795, %v2795
      %v2832 = vpack.c.b16 %v2796, %v2796
      %v2833 = vpack.c.b16 %v2797, %v2797
      %v2834 = vpack.c.b16 %v2798, %v2798
      %v2835 = vpack.c.b16 %v2799, %v2799
      %v2836 = vpack.c.b16 %v2800, %v2800
      %v2837 = vpack.c.b16 %v2801, %v2801
      %v2838 = vpack.c.b16 %v2802, %v2802
      %v2839 = vpack.c.b16 %v2803, %v2803
      %v2840 = vpack.c.b16 %v2804, %v2804
      %v2841 = vpack.c.b16 %v2805, %v2805
      %v2842 = vpack.c.b16 %v2806, %v2806
      %v2843 = vpack.c.b16 %v2807, %v2807
      %v2844 = vpack.c.b16 %v2808, %v2808
      %v2845 = vpack.c.b16 %v2809, %v2809
      %v2846 = vpack.c.b16 %v2810, %v2810
      %v2847 = vpack.c.b16 %v2811, %v2811
      %v2848 = vpack.c.b16 %v2812, %v2812
      %v2849 = vpack.c.b16 %v2813, %v2813
      %v2850 = vpack.c.b16 %v2814, %v2814
      %v2851 = vpack.c.b16 %v2815, %v2815
      %v2852 = vpack.c.b16 %v2816, %v2816
      %v2853 = vpack.c.b16 %v2817, %v2817
      %s2890 = scalar_lea.vmem [#allocation2], 144
      %2891 = vst.msk [vmem:[%s2890] sm:$0xf] %vm1519, %v2818
      %2892 = vst.msk [vmem:[%s2890 + $0x4] sm:$0xf] %vm1519, %v2819
      %2893 = vst.msk [vmem:[%s2890 + $0x8] sm:$0xf] %vm1519, %v2820
      %2894 = vst.msk [vmem:[%s2890 + $0xc] sm:$0xf] %vm1519, %v2821
      %2895 = vst.msk [vmem:[%s2890 + $0x10] sm:$0xf] %vm1519, %v2822
      %2896 = vst.msk [vmem:[%s2890 + $0x14] sm:$0xf] %vm1519, %v2823
      %2897 = vst.msk [vmem:[%s2890 + $0x18] sm:$0xf] %vm1519, %v2824
      %2898 = vst.msk [vmem:[%s2890 + $0x1c] sm:$0xf] %vm1519, %v2825
      %2899 = vst.msk [vmem:[%s2890 + $0x20] sm:$0xf] %vm1519, %v2826
      %2900 = vst.msk [vmem:[%s2890 + $0x24] sm:$0xf] %vm1519, %v2827
      %2901 = vst.msk [vmem:[%s2890 + $0x28] sm:$0xf] %vm1519, %v2828
      %2902 = vst.msk [vmem:[%s2890 + $0x2c] sm:$0xf] %vm1519, %v2829
      %2903 = vst.msk [vmem:[%s2890 + $0x30] sm:$0xf] %vm1519, %v2830
      %2904 = vst.msk [vmem:[%s2890 + $0x34] sm:$0xf] %vm1519, %v2831
      %2905 = vst.msk [vmem:[%s2890 + $0x38] sm:$0xf] %vm1519, %v2832
      %2906 = vst.msk [vmem:[%s2890 + $0x3c] sm:$0xf] %vm1519, %v2833
      %2907 = vst.msk [vmem:[%s2890 + $0x40] sm:$0xf] %vm1519, %v2834
      %2908 = vst.msk [vmem:[%s2890 + $0x44] sm:$0xf] %vm1519, %v2835
      %2909 = vst.msk [vmem:[%s2890 + $0x48] sm:$0xf] %vm1519, %v2836
      %2910 = vst.msk [vmem:[%s2890 + $0x4c] sm:$0xf] %vm1519, %v2837
      %2911 = vst.msk [vmem:[%s2890 + $0x50] sm:$0xf] %vm1519, %v2838
      %2912 = vst.msk [vmem:[%s2890 + $0x54] sm:$0xf] %vm1519, %v2839
      %2913 = vst.msk [vmem:[%s2890 + $0x58] sm:$0xf] %vm1519, %v2840
      %2914 = vst.msk [vmem:[%s2890 + $0x5c] sm:$0xf] %vm1519, %v2841
      %2915 = vst.msk [vmem:[%s2890 + $0x60] sm:$0xf] %vm1519, %v2842
      %2916 = vst.msk [vmem:[%s2890 + $0x64] sm:$0xf] %vm1519, %v2843
      %2917 = vst.msk [vmem:[%s2890 + $0x68] sm:$0xf] %vm1519, %v2844
      %2918 = vst.msk [vmem:[%s2890 + $0x6c] sm:$0xf] %vm1519, %v2845
      %2919 = vst.msk [vmem:[%s2890 + $0x70] sm:$0xf] %vm1519, %v2846
      %2920 = vst.msk [vmem:[%s2890 + $0x74] sm:$0xf] %vm1519, %v2847
      %2921 = vst.msk [vmem:[%s2890 + $0x78] sm:$0xf] %vm1519, %v2848
      %2922 = vst.msk [vmem:[%s2890 + $0x7c] sm:$0xf] %vm1519, %v2849
      %2923 = vst.msk [vmem:[%s2890 + $0x80] sm:$0xf] %vm1519, %v2850
      %2924 = vst.msk [vmem:[%s2890 + $0x84] sm:$0xf] %vm1519, %v2851
      %2925 = vst.msk [vmem:[%s2890 + $0x88] sm:$0xf] %vm1519, %v2852
      %2926 = vst.msk [vmem:[%s2890 + $0x8c] sm:$0xf] %vm1519, %v2853
      loop: start=0, step=1, limit=16
      $region33: #{tpu_custom_call.1} parent=31 // loop_pre_header
        _
      $region34: #{tpu_custom_call.1} parent=31 // loop_header
        %s2928 = sphi 0, %s2932
        %p2929 = scmp.ge.s32.totalorder %s2928, 16
        %v2933 = vphi 0.0, %v5871
        %v2934 = vphi 0.0, %v5985
      $region35: #{tpu_custom_call.1} parent=31 // loop_header_branch
        %2931 = sbr.rel (%p2929) target = $region39
      $region36: #{tpu_custom_call.1} parent=31 // loop_body
        %s2935 = sadd.s32 %s2928, 2
        %s2936 = smul.u32 %s2935, 41
        %s2937 = smul.addr %s2936, 4
        %s2938 = scalar_lea.vmem %s165, %s2937
        %v2939 = vld [vmem:[%s2938] sm:$0xf]
        %v2940 = vld [vmem:[%s2938 + $0x4] sm:$0xf]
        %v2941 = vld [vmem:[%s2938 + $0x8] sm:$0xf]
        %v2942 = vld [vmem:[%s2938 + $0xc] sm:$0xf]
        %v2943 = vld [vmem:[%s2938 + $0x10] sm:$0xf]
        %v2944 = vld [vmem:[%s2938 + $0x14] sm:$0xf]
        %v2945 = vld [vmem:[%s2938 + $0x18] sm:$0xf]
        %v2946 = vld [vmem:[%s2938 + $0x1c] sm:$0xf]
        %v2947 = vld [vmem:[%s2938 + $0x20] sm:$0xf]
        %v2948 = vld [vmem:[%s2938 + $0x24] sm:$0xf]
        %v2949 = vld [vmem:[%s2938 + $0x28] sm:$0xf]
        %v2950 = vld [vmem:[%s2938 + $0x2c] sm:$0xf]
        %v2951 = vld [vmem:[%s2938 + $0x30] sm:$0xf]
        %v2952 = vld [vmem:[%s2938 + $0x34] sm:$0xf]
        %v2953 = vld [vmem:[%s2938 + $0x38] sm:$0xf]
        %v2954 = vld [vmem:[%s2938 + $0x3c] sm:$0xf]
        %v2955 = vld [vmem:[%s2938 + $0x40] sm:$0xf]
        %v2956 = vld [vmem:[%s2938 + $0x44] sm:$0xf]
        %v2957 = vld [vmem:[%s2938 + $0x48] sm:$0xf]
        %v2958 = vld [vmem:[%s2938 + $0x4c] sm:$0xf]
        %v2959 = vld [vmem:[%s2938 + $0x50] sm:$0xf]
        %v2960 = vld [vmem:[%s2938 + $0x54] sm:$0xf]
        %v2961 = vld [vmem:[%s2938 + $0x58] sm:$0xf]
        %v2962 = vld [vmem:[%s2938 + $0x5c] sm:$0xf]
        %v2963 = vld [vmem:[%s2938 + $0x60] sm:$0xf]
        %v2964 = vld [vmem:[%s2938 + $0x64] sm:$0xf]
        %v2965 = vld [vmem:[%s2938 + $0x68] sm:$0xf]
        %v2966 = vld [vmem:[%s2938 + $0x6c] sm:$0xf]
        %v2967 = vld [vmem:[%s2938 + $0x70] sm:$0xf]
        %v2968 = vld [vmem:[%s2938 + $0x74] sm:$0xf]
        %v2969 = vld [vmem:[%s2938 + $0x78] sm:$0xf]
        %v2970 = vld [vmem:[%s2938 + $0x7c] sm:$0xf]
        %v2971 = vld [vmem:[%s2938 + $0x80] sm:$0xf]
        %v2972 = vld [vmem:[%s2938 + $0x84] sm:$0xf]
        %v2973 = vld [vmem:[%s2938 + $0x88] sm:$0xf]
        %v2974 = vld [vmem:[%s2938 + $0x8c] sm:$0xf]
        %v2975 = vld [vmem:[%s2938 + $0x90] sm:$0x1]
        %v2976 = vld [vmem:[%s2938] sm:$0xe]
        %v2977 = vld [vmem:[%s2938 + $0x8] sm:$0xe]
        %v2978 = vld [vmem:[%s2938 + $0x90] sm:$0xf]
        %v2979 = vld [vmem:[%s2938 + $0x94] sm:$0xf]
        %v2980 = vld [vmem:[%s2938 + $0x98] sm:$0x1]
        %v2981 = vld [vmem:[%s2938 + $0x98] sm:$0x3]
        %v2982 = vld [vmem:[%s2938 + $0x8] sm:$0xc]
        %v2983 = vld [vmem:[%s2938 + $0x10] sm:$0xc]
        %v2984 = vld [vmem:[%s2938 + $0x98] sm:$0xf]
        %v2985 = vld [vmem:[%s2938 + $0x9c] sm:$0xf]
        %v2986 = vld [vmem:[%s2938 + $0xa0] sm:$0x3]
        %v2987 = vld [vmem:[%s2938 + $0xa0] sm:$0x7]
        %v2988 = vld [vmem:[%s2938 + $0x10] sm:$0x8]
        %v3025 = vunpack.c.l.b16 %v2939
        %v3026 = vunpack.c.l.b16 %v2940
        %v3027 = vunpack.c.l.b16 %v2941
        %v3028 = vunpack.c.l.b16 %v2942
        %v3029 = vunpack.c.l.b16 %v2943
        %v3030 = vunpack.c.l.b16 %v2944
        %v3031 = vunpack.c.l.b16 %v2945
        %v3032 = vunpack.c.l.b16 %v2946
        %v3033 = vunpack.c.l.b16 %v2947
        %v3034 = vunpack.c.l.b16 %v2948
        %v3035 = vunpack.c.l.b16 %v2949
        %v3036 = vunpack.c.l.b16 %v2950
        %v3037 = vunpack.c.l.b16 %v2951
        %v3038 = vunpack.c.l.b16 %v2952
        %v3039 = vunpack.c.l.b16 %v2953
        %v3040 = vunpack.c.l.b16 %v2954
        %v3041 = vunpack.c.l.b16 %v2955
        %v3042 = vunpack.c.l.b16 %v2956
        %v3043 = vunpack.c.l.b16 %v2957
        %v3044 = vunpack.c.l.b16 %v2958
        %v3045 = vunpack.c.l.b16 %v2959
        %v3046 = vunpack.c.l.b16 %v2960
        %v3047 = vunpack.c.l.b16 %v2961
        %v3048 = vunpack.c.l.b16 %v2962
        %v3049 = vunpack.c.l.b16 %v2963
        %v3050 = vunpack.c.l.b16 %v2964
        %v3051 = vunpack.c.l.b16 %v2965
        %v3052 = vunpack.c.l.b16 %v2966
        %v3053 = vunpack.c.l.b16 %v2967
        %v3054 = vunpack.c.l.b16 %v2968
        %v3055 = vunpack.c.l.b16 %v2969
        %v3056 = vunpack.c.l.b16 %v2970
        %v3057 = vunpack.c.l.b16 %v2971
        %v3058 = vunpack.c.l.b16 %v2972
        %v3059 = vunpack.c.l.b16 %v2973
        %v3060 = vunpack.c.l.b16 %v2974
        %v3061 = vpack.c.b16 %v3026, %v3025
        %v3062 = vpack.c.b16 %v3028, %v3027
        %v3063 = vpack.c.b16 %v3030, %v3029
        %v3064 = vpack.c.b16 %v3032, %v3031
        %v3065 = vpack.c.b16 %v3034, %v3033
        %v3066 = vpack.c.b16 %v3036, %v3035
        %v3067 = vpack.c.b16 %v3038, %v3037
        %v3068 = vpack.c.b16 %v3040, %v3039
        %v3069 = vpack.c.b16 %v3042, %v3041
        %v3070 = vpack.c.b16 %v3044, %v3043
        %v3071 = vpack.c.b16 %v3046, %v3045
        %v3072 = vpack.c.b16 %v3048, %v3047
        %v3073 = vpack.c.b16 %v3050, %v3049
        %v3074 = vpack.c.b16 %v3052, %v3051
        %v3075 = vpack.c.b16 %v3054, %v3053
        %v3076 = vpack.c.b16 %v3056, %v3055
        %v3077 = vpack.c.b16 %v3058, %v3057
        %v3078 = vpack.c.b16 %v3060, %v3059
        %v3080 = vunpack.c.l.b16 %v2975
        %v3081 = vpack.c.b16 %v3080, %v3080
        %v3083 = vshrl.u32 %v3061, 16
        %v3085 = vshll.u32 %v3061, 16
        %v3087 = vrot.slane %v3085, 1
        %v3088 = vor.u32 %v3083, %v3087
        %v3090 = vshll.u32 %v3062, 16
        %v3092 = vrot.slane %v3090, 1
        %v3093 = vsel %vm315, %v3088, %v3092
        %v3094 = vshrl.u32 %v3062, 16
        %v3096 = vor.u32 %v3094, %v3092
        %v3098 = vshll.u32 %v3063, 16
        %v3100 = vrot.slane %v3098, 1
        %v3101 = vsel %vm315, %v3096, %v3100
        %v3102 = vshrl.u32 %v3063, 16
        %v3104 = vor.u32 %v3102, %v3100
        %v3106 = vshll.u32 %v3064, 16
        %v3108 = vrot.slane %v3106, 1
        %v3109 = vsel %vm315, %v3104, %v3108
        %v3110 = vshrl.u32 %v3064, 16
        %v3112 = vor.u32 %v3110, %v3108
        %v3114 = vshll.u32 %v3065, 16
        %v3116 = vrot.slane %v3114, 1
        %v3117 = vsel %vm315, %v3112, %v3116
        %v3118 = vshrl.u32 %v3065, 16
        %v3120 = vor.u32 %v3118, %v3116
        %v3122 = vshll.u32 %v3066, 16
        %v3124 = vrot.slane %v3122, 1
        %v3125 = vsel %vm315, %v3120, %v3124
        %v3126 = vshrl.u32 %v3066, 16
        %v3128 = vor.u32 %v3126, %v3124
        %v3130 = vshll.u32 %v3067, 16
        %v3132 = vrot.slane %v3130, 1
        %v3133 = vsel %vm315, %v3128, %v3132
        %v3134 = vshrl.u32 %v3067, 16
        %v3136 = vor.u32 %v3134, %v3132
        %v3138 = vshll.u32 %v3068, 16
        %v3140 = vrot.slane %v3138, 1
        %v3141 = vsel %vm315, %v3136, %v3140
        %v3142 = vshrl.u32 %v3068, 16
        %v3144 = vor.u32 %v3142, %v3140
        %v3146 = vshll.u32 %v3069, 16
        %v3148 = vrot.slane %v3146, 1
        %v3149 = vsel %vm315, %v3144, %v3148
        %v3150 = vshrl.u32 %v3069, 16
        %v3152 = vor.u32 %v3150, %v3148
        %v3154 = vshll.u32 %v3070, 16
        %v3156 = vrot.slane %v3154, 1
        %v3157 = vsel %vm315, %v3152, %v3156
        %v3158 = vshrl.u32 %v3070, 16
        %v3160 = vor.u32 %v3158, %v3156
        %v3162 = vshll.u32 %v3071, 16
        %v3164 = vrot.slane %v3162, 1
        %v3165 = vsel %vm315, %v3160, %v3164
        %v3166 = vshrl.u32 %v3071, 16
        %v3168 = vor.u32 %v3166, %v3164
        %v3170 = vshll.u32 %v3072, 16
        %v3172 = vrot.slane %v3170, 1
        %v3173 = vsel %vm315, %v3168, %v3172
        %v3174 = vshrl.u32 %v3072, 16
        %v3176 = vor.u32 %v3174, %v3172
        %v3178 = vshll.u32 %v3073, 16
        %v3180 = vrot.slane %v3178, 1
        %v3181 = vsel %vm315, %v3176, %v3180
        %v3182 = vshrl.u32 %v3073, 16
        %v3184 = vor.u32 %v3182, %v3180
        %v3186 = vshll.u32 %v3074, 16
        %v3188 = vrot.slane %v3186, 1
        %v3189 = vsel %vm315, %v3184, %v3188
        %v3190 = vshrl.u32 %v3074, 16
        %v3192 = vor.u32 %v3190, %v3188
        %v3194 = vshll.u32 %v3075, 16
        %v3196 = vrot.slane %v3194, 1
        %v3197 = vsel %vm315, %v3192, %v3196
        %v3198 = vshrl.u32 %v3075, 16
        %v3200 = vor.u32 %v3198, %v3196
        %v3202 = vshll.u32 %v3076, 16
        %v3204 = vrot.slane %v3202, 1
        %v3205 = vsel %vm315, %v3200, %v3204
        %v3206 = vshrl.u32 %v3076, 16
        %v3208 = vor.u32 %v3206, %v3204
        %v3210 = vshll.u32 %v3077, 16
        %v3212 = vrot.slane %v3210, 1
        %v3213 = vsel %vm315, %v3208, %v3212
        %v3214 = vshrl.u32 %v3077, 16
        %v3216 = vor.u32 %v3214, %v3212
        %v3218 = vshll.u32 %v3078, 16
        %v3220 = vrot.slane %v3218, 1
        %v3221 = vsel %vm315, %v3216, %v3220
        %v3222 = vshrl.u32 %v3078, 16
        %v3224 = vor.u32 %v3222, %v3220
        %v3226 = vshll.u32 %v3081, 16
        %v3228 = vrot.slane %v3226, 1
        %v3229 = vsel %vm315, %v3224, %v3228
        %3230 = vrot.lane.b32.xlu0 %v3093, 2
        %v3231 = vpop.permute.xlu0 %3230
        %3232 = vrot.lane.b32.xlu0 %v3101, 2
        %v3233 = vpop.permute.xlu0 %3232
        %3234 = vrot.lane.b32.xlu0 %v3109, 2
        %v3235 = vpop.permute.xlu0 %3234
        %3236 = vrot.lane.b32.xlu0 %v3117, 2
        %v3237 = vpop.permute.xlu0 %3236
        %3238 = vrot.lane.b32.xlu0 %v3125, 2
        %v3239 = vpop.permute.xlu0 %3238
        %3240 = vrot.lane.b32.xlu0 %v3133, 2
        %v3241 = vpop.permute.xlu0 %3240
        %3242 = vrot.lane.b32.xlu0 %v3141, 2
        %v3243 = vpop.permute.xlu0 %3242
        %3244 = vrot.lane.b32.xlu0 %v3149, 2
        %v3245 = vpop.permute.xlu0 %3244
        %3246 = vrot.lane.b32.xlu0 %v3157, 2
        %v3247 = vpop.permute.xlu0 %3246
        %3248 = vrot.lane.b32.xlu0 %v3165, 2
        %v3249 = vpop.permute.xlu0 %3248
        %3250 = vrot.lane.b32.xlu0 %v3173, 2
        %v3251 = vpop.permute.xlu0 %3250
        %3252 = vrot.lane.b32.xlu0 %v3181, 2
        %v3253 = vpop.permute.xlu0 %3252
        %3254 = vrot.lane.b32.xlu0 %v3189, 2
        %v3255 = vpop.permute.xlu0 %3254
        %3256 = vrot.lane.b32.xlu0 %v3197, 2
        %v3257 = vpop.permute.xlu0 %3256
        %3258 = vrot.lane.b32.xlu0 %v3205, 2
        %v3259 = vpop.permute.xlu0 %3258
        %3260 = vrot.lane.b32.xlu0 %v3213, 2
        %v3261 = vpop.permute.xlu0 %3260
        %3262 = vrot.lane.b32.xlu0 %v3221, 2
        %v3263 = vpop.permute.xlu0 %3262
        %3264 = vrot.lane.b32.xlu0 %v3229, 2
        %v3265 = vpop.permute.xlu0 %3264
        %v3267 = vunpack.c.l.b16 %v2976
        %v3268 = vpack.c.b16 %v3026, %v3267
        %v3269 = vrot.slane %v3268, 1
        %v3270 = vrot.slane %v3062, 1
        %v3271 = vsel %vm503, %v3269, %v3270
        %v3272 = vrot.slane %v3063, 1
        %v3273 = vsel %vm503, %v3270, %v3272
        %v3274 = vrot.slane %v3064, 1
        %v3275 = vsel %vm503, %v3272, %v3274
        %v3276 = vrot.slane %v3065, 1
        %v3277 = vsel %vm503, %v3274, %v3276
        %v3278 = vrot.slane %v3066, 1
        %v3279 = vsel %vm503, %v3276, %v3278
        %v3280 = vrot.slane %v3067, 1
        %v3281 = vsel %vm503, %v3278, %v3280
        %v3282 = vrot.slane %v3068, 1
        %v3283 = vsel %vm503, %v3280, %v3282
        %v3284 = vrot.slane %v3069, 1
        %v3285 = vsel %vm503, %v3282, %v3284
        %v3286 = vrot.slane %v3070, 1
        %v3287 = vsel %vm503, %v3284, %v3286
        %v3288 = vrot.slane %v3071, 1
        %v3289 = vsel %vm503, %v3286, %v3288
        %v3290 = vrot.slane %v3072, 1
        %v3291 = vsel %vm503, %v3288, %v3290
        %v3292 = vrot.slane %v3073, 1
        %v3293 = vsel %vm503, %v3290, %v3292
        %v3294 = vrot.slane %v3074, 1
        %v3295 = vsel %vm503, %v3292, %v3294
        %v3296 = vrot.slane %v3075, 1
        %v3297 = vsel %vm503, %v3294, %v3296
        %v3298 = vrot.slane %v3076, 1
        %v3299 = vsel %vm503, %v3296, %v3298
        %v3300 = vrot.slane %v3077, 1
        %v3301 = vsel %vm503, %v3298, %v3300
        %v3302 = vrot.slane %v3078, 1
        %v3303 = vsel %vm503, %v3300, %v3302
        %v3304 = vrot.slane %v3081, 1
        %v3305 = vsel %vm503, %v3302, %v3304
        %3306 = vrot.lane.b32.xlu0 %v3271, 4
        %v3307 = vpop.permute.xlu0 %3306
        %3308 = vrot.lane.b32.xlu0 %v3273, 4
        %v3309 = vpop.permute.xlu0 %3308
        %3310 = vrot.lane.b32.xlu0 %v3275, 4
        %v3311 = vpop.permute.xlu0 %3310
        %3312 = vrot.lane.b32.xlu0 %v3277, 4
        %v3313 = vpop.permute.xlu0 %3312
        %3314 = vrot.lane.b32.xlu0 %v3279, 4
        %v3315 = vpop.permute.xlu0 %3314
        %3316 = vrot.lane.b32.xlu0 %v3281, 4
        %v3317 = vpop.permute.xlu0 %3316
        %3318 = vrot.lane.b32.xlu0 %v3283, 4
        %v3319 = vpop.permute.xlu0 %3318
        %3320 = vrot.lane.b32.xlu0 %v3285, 4
        %v3321 = vpop.permute.xlu0 %3320
        %3322 = vrot.lane.b32.xlu0 %v3287, 4
        %v3323 = vpop.permute.xlu0 %3322
        %3324 = vrot.lane.b32.xlu0 %v3289, 4
        %v3325 = vpop.permute.xlu0 %3324
        %3326 = vrot.lane.b32.xlu0 %v3291, 4
        %v3327 = vpop.permute.xlu0 %3326
        %3328 = vrot.lane.b32.xlu0 %v3293, 4
        %v3329 = vpop.permute.xlu0 %3328
        %3330 = vrot.lane.b32.xlu0 %v3295, 4
        %v3331 = vpop.permute.xlu0 %3330
        %3332 = vrot.lane.b32.xlu0 %v3297, 4
        %v3333 = vpop.permute.xlu0 %3332
        %3334 = vrot.lane.b32.xlu0 %v3299, 4
        %v3335 = vpop.permute.xlu0 %3334
        %3336 = vrot.lane.b32.xlu0 %v3301, 4
        %v3337 = vpop.permute.xlu0 %3336
        %3338 = vrot.lane.b32.xlu0 %v3303, 4
        %v3339 = vpop.permute.xlu0 %3338
        %3340 = vrot.lane.b32.xlu0 %v3305, 4
        %v3341 = vpop.permute.xlu0 %3340
        %v3346 = vunpack.c.l.b16 %v2977
        %v3347 = vunpack.c.l.b16 %v2978
        %v3348 = vunpack.c.l.b16 %v2979
        %v3349 = vunpack.c.l.b16 %v2980
        %v3350 = vpack.c.b16 %v3028, %v3346
        %v3351 = vpack.c.b16 %v3348, %v3347
        %v3352 = vpack.c.b16 %v3349, %v3349
        %v3353 = vrot.slane %v3350, 1
        %v3354 = vsel %vm503, %v3353, %v3272
        %v3355 = vrot.slane %v3351, 1
        %v3356 = vsel %vm503, %v3302, %v3355
        %v3357 = vrot.slane %v3352, 1
        %v3358 = vsel %vm503, %v3355, %v3357
        %3359 = vrot.lane.b32.xlu0 %v3354, 6
        %v3360 = vpop.permute.xlu0 %3359
        %3361 = vrot.lane.b32.xlu0 %v3275, 6
        %v3362 = vpop.permute.xlu0 %3361
        %3363 = vrot.lane.b32.xlu0 %v3277, 6
        %v3364 = vpop.permute.xlu0 %3363
        %3365 = vrot.lane.b32.xlu0 %v3279, 6
        %v3366 = vpop.permute.xlu0 %3365
        %3367 = vrot.lane.b32.xlu0 %v3281, 6
        %v3368 = vpop.permute.xlu0 %3367
        %3369 = vrot.lane.b32.xlu0 %v3283, 6
        %v3370 = vpop.permute.xlu0 %3369
        %3371 = vrot.lane.b32.xlu0 %v3285, 6
        %v3372 = vpop.permute.xlu0 %3371
        %3373 = vrot.lane.b32.xlu0 %v3287, 6
        %v3374 = vpop.permute.xlu0 %3373
        %3375 = vrot.lane.b32.xlu0 %v3289, 6
        %v3376 = vpop.permute.xlu0 %3375
        %3377 = vrot.lane.b32.xlu0 %v3291, 6
        %v3378 = vpop.permute.xlu0 %3377
        %3379 = vrot.lane.b32.xlu0 %v3293, 6
        %v3380 = vpop.permute.xlu0 %3379
        %3381 = vrot.lane.b32.xlu0 %v3295, 6
        %v3382 = vpop.permute.xlu0 %3381
        %3383 = vrot.lane.b32.xlu0 %v3297, 6
        %v3384 = vpop.permute.xlu0 %3383
        %3385 = vrot.lane.b32.xlu0 %v3299, 6
        %v3386 = vpop.permute.xlu0 %3385
        %3387 = vrot.lane.b32.xlu0 %v3301, 6
        %v3388 = vpop.permute.xlu0 %3387
        %3389 = vrot.lane.b32.xlu0 %v3303, 6
        %v3390 = vpop.permute.xlu0 %3389
        %3391 = vrot.lane.b32.xlu0 %v3356, 6
        %v3392 = vpop.permute.xlu0 %3391
        %3393 = vrot.lane.b32.xlu0 %v3358, 6
        %v3394 = vpop.permute.xlu0 %3393
        %v3396 = vunpack.c.l.b16 %v2981
        %v3397 = vpack.c.b16 %v3396, %v3396
        %v3399 = vshrl.u32 %v3350, 16
        %v3401 = vrot.slane %v3399, 1
        %v3402 = vshll.u32 %v3350, 16
        %v3404 = vrot.slane %v3402, 2
        %v3405 = vor.u32 %v3401, %v3404
        %v3406 = vrot.slane %v3102, 1
        %v3407 = vrot.slane %v3098, 2
        %v3408 = vor.u32 %v3406, %v3407
        %v3409 = vsel %vm633, %v3405, %v3408
        %v3410 = vrot.slane %v3110, 1
        %v3411 = vrot.slane %v3106, 2
        %v3412 = vor.u32 %v3410, %v3411
        %v3413 = vsel %vm633, %v3408, %v3412
        %v3414 = vrot.slane %v3118, 1
        %v3415 = vrot.slane %v3114, 2
        %v3416 = vor.u32 %v3414, %v3415
        %v3417 = vsel %vm633, %v3412, %v3416
        %v3418 = vrot.slane %v3126, 1
        %v3419 = vrot.slane %v3122, 2
        %v3420 = vor.u32 %v3418, %v3419
        %v3421 = vsel %vm633, %v3416, %v3420
        %v3422 = vrot.slane %v3134, 1
        %v3423 = vrot.slane %v3130, 2
        %v3424 = vor.u32 %v3422, %v3423
        %v3425 = vsel %vm633, %v3420, %v3424
        %v3426 = vrot.slane %v3142, 1
        %v3427 = vrot.slane %v3138, 2
        %v3428 = vor.u32 %v3426, %v3427
        %v3429 = vsel %vm633, %v3424, %v3428
        %v3430 = vrot.slane %v3150, 1
        %v3431 = vrot.slane %v3146, 2
        %v3432 = vor.u32 %v3430, %v3431
        %v3433 = vsel %vm633, %v3428, %v3432
        %v3434 = vrot.slane %v3158, 1
        %v3435 = vrot.slane %v3154, 2
        %v3436 = vor.u32 %v3434, %v3435
        %v3437 = vsel %vm633, %v3432, %v3436
        %v3438 = vrot.slane %v3166, 1
        %v3439 = vrot.slane %v3162, 2
        %v3440 = vor.u32 %v3438, %v3439
        %v3441 = vsel %vm633, %v3436, %v3440
        %v3442 = vrot.slane %v3174, 1
        %v3443 = vrot.slane %v3170, 2
        %v3444 = vor.u32 %v3442, %v3443
        %v3445 = vsel %vm633, %v3440, %v3444
        %v3446 = vrot.slane %v3182, 1
        %v3447 = vrot.slane %v3178, 2
        %v3448 = vor.u32 %v3446, %v3447
        %v3449 = vsel %vm633, %v3444, %v3448
        %v3450 = vrot.slane %v3190, 1
        %v3451 = vrot.slane %v3186, 2
        %v3452 = vor.u32 %v3450, %v3451
        %v3453 = vsel %vm633, %v3448, %v3452
        %v3454 = vrot.slane %v3198, 1
        %v3455 = vrot.slane %v3194, 2
        %v3456 = vor.u32 %v3454, %v3455
        %v3457 = vsel %vm633, %v3452, %v3456
        %v3458 = vrot.slane %v3206, 1
        %v3459 = vrot.slane %v3202, 2
        %v3460 = vor.u32 %v3458, %v3459
        %v3461 = vsel %vm633, %v3456, %v3460
        %v3462 = vrot.slane %v3214, 1
        %v3463 = vrot.slane %v3210, 2
        %v3464 = vor.u32 %v3462, %v3463
        %v3465 = vsel %vm633, %v3460, %v3464
        %v3466 = vrot.slane %v3222, 1
        %v3467 = vrot.slane %v3218, 2
        %v3468 = vor.u32 %v3466, %v3467
        %v3469 = vsel %vm633, %v3464, %v3468
        %v3471 = vshrl.u32 %v3351, 16
        %v3473 = vrot.slane %v3471, 1
        %v3474 = vshll.u32 %v3351, 16
        %v3476 = vrot.slane %v3474, 2
        %v3477 = vor.u32 %v3473, %v3476
        %v3478 = vsel %vm633, %v3468, %v3477
        %v3480 = vshrl.u32 %v3397, 16
        %v3482 = vrot.slane %v3480, 1
        %v3483 = vshll.u32 %v3397, 16
        %v3485 = vrot.slane %v3483, 2
        %v3486 = vor.u32 %v3482, %v3485
        %v3487 = vsel %vm633, %v3477, %v3486
        %3488 = vrot.lane.b32.xlu0 %v3409, 8
        %v3489 = vpop.permute.xlu0 %3488
        %3490 = vrot.lane.b32.xlu0 %v3413, 8
        %v3491 = vpop.permute.xlu0 %3490
        %3492 = vrot.lane.b32.xlu0 %v3417, 8
        %v3493 = vpop.permute.xlu0 %3492
        %3494 = vrot.lane.b32.xlu0 %v3421, 8
        %v3495 = vpop.permute.xlu0 %3494
        %3496 = vrot.lane.b32.xlu0 %v3425, 8
        %v3497 = vpop.permute.xlu0 %3496
        %3498 = vrot.lane.b32.xlu0 %v3429, 8
        %v3499 = vpop.permute.xlu0 %3498
        %3500 = vrot.lane.b32.xlu0 %v3433, 8
        %v3501 = vpop.permute.xlu0 %3500
        %3502 = vrot.lane.b32.xlu0 %v3437, 8
        %v3503 = vpop.permute.xlu0 %3502
        %3504 = vrot.lane.b32.xlu0 %v3441, 8
        %v3505 = vpop.permute.xlu0 %3504
        %3506 = vrot.lane.b32.xlu0 %v3445, 8
        %v3507 = vpop.permute.xlu0 %3506
        %3508 = vrot.lane.b32.xlu0 %v3449, 8
        %v3509 = vpop.permute.xlu0 %3508
        %3510 = vrot.lane.b32.xlu0 %v3453, 8
        %v3511 = vpop.permute.xlu0 %3510
        %3512 = vrot.lane.b32.xlu0 %v3457, 8
        %v3513 = vpop.permute.xlu0 %3512
        %3514 = vrot.lane.b32.xlu0 %v3461, 8
        %v3515 = vpop.permute.xlu0 %3514
        %3516 = vrot.lane.b32.xlu0 %v3465, 8
        %v3517 = vpop.permute.xlu0 %3516
        %3518 = vrot.lane.b32.xlu0 %v3469, 8
        %v3519 = vpop.permute.xlu0 %3518
        %3520 = vrot.lane.b32.xlu0 %v3478, 8
        %v3521 = vpop.permute.xlu0 %3520
        %3522 = vrot.lane.b32.xlu0 %v3487, 8
        %v3523 = vpop.permute.xlu0 %3522
        %v3525 = vunpack.c.l.b16 %v2982
        %v3526 = vpack.c.b16 %v3028, %v3525
        %v3527 = vrot.slane %v3526, 2
        %v3528 = vrot.slane %v3063, 2
        %v3529 = vsel %vm763, %v3527, %v3528
        %v3530 = vrot.slane %v3064, 2
        %v3531 = vsel %vm763, %v3528, %v3530
        %v3532 = vrot.slane %v3065, 2
        %v3533 = vsel %vm763, %v3530, %v3532
        %v3534 = vrot.slane %v3066, 2
        %v3535 = vsel %vm763, %v3532, %v3534
        %v3536 = vrot.slane %v3067, 2
        %v3537 = vsel %vm763, %v3534, %v3536
        %v3538 = vrot.slane %v3068, 2
        %v3539 = vsel %vm763, %v3536, %v3538
        %v3540 = vrot.slane %v3069, 2
        %v3541 = vsel %vm763, %v3538, %v3540
        %v3542 = vrot.slane %v3070, 2
        %v3543 = vsel %vm763, %v3540, %v3542
        %v3544 = vrot.slane %v3071, 2
        %v3545 = vsel %vm763, %v3542, %v3544
        %v3546 = vrot.slane %v3072, 2
        %v3547 = vsel %vm763, %v3544, %v3546
        %v3548 = vrot.slane %v3073, 2
        %v3549 = vsel %vm763, %v3546, %v3548
        %v3550 = vrot.slane %v3074, 2
        %v3551 = vsel %vm763, %v3548, %v3550
        %v3552 = vrot.slane %v3075, 2
        %v3553 = vsel %vm763, %v3550, %v3552
        %v3554 = vrot.slane %v3076, 2
        %v3555 = vsel %vm763, %v3552, %v3554
        %v3556 = vrot.slane %v3077, 2
        %v3557 = vsel %vm763, %v3554, %v3556
        %v3558 = vrot.slane %v3078, 2
        %v3559 = vsel %vm763, %v3556, %v3558
        %v3560 = vrot.slane %v3351, 2
        %v3561 = vsel %vm763, %v3558, %v3560
        %v3562 = vrot.slane %v3397, 2
        %v3563 = vsel %vm763, %v3560, %v3562
        %3564 = vrot.lane.b32.xlu0 %v3529, 10
        %v3565 = vpop.permute.xlu0 %3564
        %3566 = vrot.lane.b32.xlu0 %v3531, 10
        %v3567 = vpop.permute.xlu0 %3566
        %3568 = vrot.lane.b32.xlu0 %v3533, 10
        %v3569 = vpop.permute.xlu0 %3568
        %3570 = vrot.lane.b32.xlu0 %v3535, 10
        %v3571 = vpop.permute.xlu0 %3570
        %3572 = vrot.lane.b32.xlu0 %v3537, 10
        %v3573 = vpop.permute.xlu0 %3572
        %3574 = vrot.lane.b32.xlu0 %v3539, 10
        %v3575 = vpop.permute.xlu0 %3574
        %3576 = vrot.lane.b32.xlu0 %v3541, 10
        %v3577 = vpop.permute.xlu0 %3576
        %3578 = vrot.lane.b32.xlu0 %v3543, 10
        %v3579 = vpop.permute.xlu0 %3578
        %3580 = vrot.lane.b32.xlu0 %v3545, 10
        %v3581 = vpop.permute.xlu0 %3580
        %3582 = vrot.lane.b32.xlu0 %v3547, 10
        %v3583 = vpop.permute.xlu0 %3582
        %3584 = vrot.lane.b32.xlu0 %v3549, 10
        %v3585 = vpop.permute.xlu0 %3584
        %3586 = vrot.lane.b32.xlu0 %v3551, 10
        %v3587 = vpop.permute.xlu0 %3586
        %3588 = vrot.lane.b32.xlu0 %v3553, 10
        %v3589 = vpop.permute.xlu0 %3588
        %3590 = vrot.lane.b32.xlu0 %v3555, 10
        %v3591 = vpop.permute.xlu0 %3590
        %3592 = vrot.lane.b32.xlu0 %v3557, 10
        %v3593 = vpop.permute.xlu0 %3592
        %3594 = vrot.lane.b32.xlu0 %v3559, 10
        %v3595 = vpop.permute.xlu0 %3594
        %3596 = vrot.lane.b32.xlu0 %v3561, 10
        %v3597 = vpop.permute.xlu0 %3596
        %3598 = vrot.lane.b32.xlu0 %v3563, 10
        %v3599 = vpop.permute.xlu0 %3598
        %v3604 = vunpack.c.l.b16 %v2983
        %v3605 = vunpack.c.l.b16 %v2984
        %v3606 = vunpack.c.l.b16 %v2985
        %v3607 = vunpack.c.l.b16 %v2986
        %v3608 = vpack.c.b16 %v3030, %v3604
        %v3609 = vpack.c.b16 %v3606, %v3605
        %v3610 = vpack.c.b16 %v3607, %v3607
        %v3611 = vrot.slane %v3608, 2
        %v3612 = vsel %vm763, %v3611, %v3530
        %v3613 = vrot.slane %v3609, 2
        %v3614 = vsel %vm763, %v3560, %v3613
        %v3615 = vrot.slane %v3610, 2
        %v3616 = vsel %vm763, %v3613, %v3615
        %3617 = vrot.lane.b32.xlu0 %v3612, 12
        %v3618 = vpop.permute.xlu0 %3617
        %3619 = vrot.lane.b32.xlu0 %v3533, 12
        %v3620 = vpop.permute.xlu0 %3619
        %3621 = vrot.lane.b32.xlu0 %v3535, 12
        %v3622 = vpop.permute.xlu0 %3621
        %3623 = vrot.lane.b32.xlu0 %v3537, 12
        %v3624 = vpop.permute.xlu0 %3623
        %3625 = vrot.lane.b32.xlu0 %v3539, 12
        %v3626 = vpop.permute.xlu0 %3625
        %3627 = vrot.lane.b32.xlu0 %v3541, 12
        %v3628 = vpop.permute.xlu0 %3627
        %3629 = vrot.lane.b32.xlu0 %v3543, 12
        %v3630 = vpop.permute.xlu0 %3629
        %3631 = vrot.lane.b32.xlu0 %v3545, 12
        %v3632 = vpop.permute.xlu0 %3631
        %3633 = vrot.lane.b32.xlu0 %v3547, 12
        %v3634 = vpop.permute.xlu0 %3633
        %3635 = vrot.lane.b32.xlu0 %v3549, 12
        %v3636 = vpop.permute.xlu0 %3635
        %3637 = vrot.lane.b32.xlu0 %v3551, 12
        %v3638 = vpop.permute.xlu0 %3637
        %3639 = vrot.lane.b32.xlu0 %v3553, 12
        %v3640 = vpop.permute.xlu0 %3639
        %3641 = vrot.lane.b32.xlu0 %v3555, 12
        %v3642 = vpop.permute.xlu0 %3641
        %3643 = vrot.lane.b32.xlu0 %v3557, 12
        %v3644 = vpop.permute.xlu0 %3643
        %3645 = vrot.lane.b32.xlu0 %v3559, 12
        %v3646 = vpop.permute.xlu0 %3645
        %3647 = vrot.lane.b32.xlu0 %v3561, 12
        %v3648 = vpop.permute.xlu0 %3647
        %3649 = vrot.lane.b32.xlu0 %v3614, 12
        %v3650 = vpop.permute.xlu0 %3649
        %3651 = vrot.lane.b32.xlu0 %v3616, 12
        %v3652 = vpop.permute.xlu0 %3651
        %v3654 = vunpack.c.l.b16 %v2987
        %v3655 = vpack.c.b16 %v3654, %v3654
        %v3657 = vshrl.u32 %v3608, 16
        %v3659 = vrot.slane %v3657, 2
        %v3660 = vshll.u32 %v3608, 16
        %v3662 = vrot.slane %v3660, 3
        %v3663 = vor.u32 %v3659, %v3662
        %v3664 = vrot.slane %v3110, 2
        %v3665 = vrot.slane %v3106, 3
        %v3666 = vor.u32 %v3664, %v3665
        %v3667 = vsel %vm893, %v3663, %v3666
        %v3668 = vrot.slane %v3118, 2
        %v3669 = vrot.slane %v3114, 3
        %v3670 = vor.u32 %v3668, %v3669
        %v3671 = vsel %vm893, %v3666, %v3670
        %v3672 = vrot.slane %v3126, 2
        %v3673 = vrot.slane %v3122, 3
        %v3674 = vor.u32 %v3672, %v3673
        %v3675 = vsel %vm893, %v3670, %v3674
        %v3676 = vrot.slane %v3134, 2
        %v3677 = vrot.slane %v3130, 3
        %v3678 = vor.u32 %v3676, %v3677
        %v3679 = vsel %vm893, %v3674, %v3678
        %v3680 = vrot.slane %v3142, 2
        %v3681 = vrot.slane %v3138, 3
        %v3682 = vor.u32 %v3680, %v3681
        %v3683 = vsel %vm893, %v3678, %v3682
        %v3684 = vrot.slane %v3150, 2
        %v3685 = vrot.slane %v3146, 3
        %v3686 = vor.u32 %v3684, %v3685
        %v3687 = vsel %vm893, %v3682, %v3686
        %v3688 = vrot.slane %v3158, 2
        %v3689 = vrot.slane %v3154, 3
        %v3690 = vor.u32 %v3688, %v3689
        %v3691 = vsel %vm893, %v3686, %v3690
        %v3692 = vrot.slane %v3166, 2
        %v3693 = vrot.slane %v3162, 3
        %v3694 = vor.u32 %v3692, %v3693
        %v3695 = vsel %vm893, %v3690, %v3694
        %v3696 = vrot.slane %v3174, 2
        %v3697 = vrot.slane %v3170, 3
        %v3698 = vor.u32 %v3696, %v3697
        %v3699 = vsel %vm893, %v3694, %v3698
        %v3700 = vrot.slane %v3182, 2
        %v3701 = vrot.slane %v3178, 3
        %v3702 = vor.u32 %v3700, %v3701
        %v3703 = vsel %vm893, %v3698, %v3702
        %v3704 = vrot.slane %v3190, 2
        %v3705 = vrot.slane %v3186, 3
        %v3706 = vor.u32 %v3704, %v3705
        %v3707 = vsel %vm893, %v3702, %v3706
        %v3708 = vrot.slane %v3198, 2
        %v3709 = vrot.slane %v3194, 3
        %v3710 = vor.u32 %v3708, %v3709
        %v3711 = vsel %vm893, %v3706, %v3710
        %v3712 = vrot.slane %v3206, 2
        %v3713 = vrot.slane %v3202, 3
        %v3714 = vor.u32 %v3712, %v3713
        %v3715 = vsel %vm893, %v3710, %v3714
        %v3716 = vrot.slane %v3214, 2
        %v3717 = vrot.slane %v3210, 3
        %v3718 = vor.u32 %v3716, %v3717
        %v3719 = vsel %vm893, %v3714, %v3718
        %v3720 = vrot.slane %v3222, 2
        %v3721 = vrot.slane %v3218, 3
        %v3722 = vor.u32 %v3720, %v3721
        %v3723 = vsel %vm893, %v3718, %v3722
        %v3724 = vrot.slane %v3471, 2
        %v3725 = vrot.slane %v3474, 3
        %v3726 = vor.u32 %v3724, %v3725
        %v3727 = vsel %vm893, %v3722, %v3726
        %v3729 = vshrl.u32 %v3609, 16
        %v3731 = vrot.slane %v3729, 2
        %v3732 = vshll.u32 %v3609, 16
        %v3734 = vrot.slane %v3732, 3
        %v3735 = vor.u32 %v3731, %v3734
        %v3736 = vsel %vm893, %v3726, %v3735
        %v3738 = vshrl.u32 %v3655, 16
        %v3740 = vrot.slane %v3738, 2
        %v3741 = vshll.u32 %v3655, 16
        %v3743 = vrot.slane %v3741, 3
        %v3744 = vor.u32 %v3740, %v3743
        %v3745 = vsel %vm893, %v3735, %v3744
        %3746 = vrot.lane.b32.xlu0 %v3667, 14
        %v3747 = vpop.permute.xlu0 %3746
        %3748 = vrot.lane.b32.xlu0 %v3671, 14
        %v3749 = vpop.permute.xlu0 %3748
        %3750 = vrot.lane.b32.xlu0 %v3675, 14
        %v3751 = vpop.permute.xlu0 %3750
        %3752 = vrot.lane.b32.xlu0 %v3679, 14
        %v3753 = vpop.permute.xlu0 %3752
        %3754 = vrot.lane.b32.xlu0 %v3683, 14
        %v3755 = vpop.permute.xlu0 %3754
        %3756 = vrot.lane.b32.xlu0 %v3687, 14
        %v3757 = vpop.permute.xlu0 %3756
        %3758 = vrot.lane.b32.xlu0 %v3691, 14
        %v3759 = vpop.permute.xlu0 %3758
        %3760 = vrot.lane.b32.xlu0 %v3695, 14
        %v3761 = vpop.permute.xlu0 %3760
        %3762 = vrot.lane.b32.xlu0 %v3699, 14
        %v3763 = vpop.permute.xlu0 %3762
        %3764 = vrot.lane.b32.xlu0 %v3703, 14
        %v3765 = vpop.permute.xlu0 %3764
        %3766 = vrot.lane.b32.xlu0 %v3707, 14
        %v3767 = vpop.permute.xlu0 %3766
        %3768 = vrot.lane.b32.xlu0 %v3711, 14
        %v3769 = vpop.permute.xlu0 %3768
        %3770 = vrot.lane.b32.xlu0 %v3715, 14
        %v3771 = vpop.permute.xlu0 %3770
        %3772 = vrot.lane.b32.xlu0 %v3719, 14
        %v3773 = vpop.permute.xlu0 %3772
        %3774 = vrot.lane.b32.xlu0 %v3723, 14
        %v3775 = vpop.permute.xlu0 %3774
        %3776 = vrot.lane.b32.xlu0 %v3727, 14
        %v3777 = vpop.permute.xlu0 %3776
        %3778 = vrot.lane.b32.xlu0 %v3736, 14
        %v3779 = vpop.permute.xlu0 %3778
        %3780 = vrot.lane.b32.xlu0 %v3745, 14
        %v3781 = vpop.permute.xlu0 %3780
        %v3783 = vunpack.c.l.b16 %v2988
        %v3784 = vpack.c.b16 %v3030, %v3783
        %v3785 = vrot.slane %v3784, 3
        %v3786 = vrot.slane %v3064, 3
        %v3787 = vsel %vm1023, %v3785, %v3786
        %v3788 = vrot.slane %v3065, 3
        %v3789 = vsel %vm1023, %v3786, %v3788
        %v3790 = vrot.slane %v3066, 3
        %v3791 = vsel %vm1023, %v3788, %v3790
        %v3792 = vrot.slane %v3067, 3
        %v3793 = vsel %vm1023, %v3790, %v3792
        %v3794 = vrot.slane %v3068, 3
        %v3795 = vsel %vm1023, %v3792, %v3794
        %v3796 = vrot.slane %v3069, 3
        %v3797 = vsel %vm1023, %v3794, %v3796
        %v3798 = vrot.slane %v3070, 3
        %v3799 = vsel %vm1023, %v3796, %v3798
        %v3800 = vrot.slane %v3071, 3
        %v3801 = vsel %vm1023, %v3798, %v3800
        %v3802 = vrot.slane %v3072, 3
        %v3803 = vsel %vm1023, %v3800, %v3802
        %v3804 = vrot.slane %v3073, 3
        %v3805 = vsel %vm1023, %v3802, %v3804
        %v3806 = vrot.slane %v3074, 3
        %v3807 = vsel %vm1023, %v3804, %v3806
        %v3808 = vrot.slane %v3075, 3
        %v3809 = vsel %vm1023, %v3806, %v3808
        %v3810 = vrot.slane %v3076, 3
        %v3811 = vsel %vm1023, %v3808, %v3810
        %v3812 = vrot.slane %v3077, 3
        %v3813 = vsel %vm1023, %v3810, %v3812
        %v3814 = vrot.slane %v3078, 3
        %v3815 = vsel %vm1023, %v3812, %v3814
        %v3816 = vrot.slane %v3351, 3
        %v3817 = vsel %vm1023, %v3814, %v3816
        %v3818 = vrot.slane %v3609, 3
        %v3819 = vsel %vm1023, %v3816, %v3818
        %v3820 = vrot.slane %v3655, 3
        %v3821 = vsel %vm1023, %v3818, %v3820
        %3822 = vrot.lane.b32.xlu0 %v3787, 16
        %v3823 = vpop.permute.xlu0 %3822
        %3824 = vrot.lane.b32.xlu0 %v3789, 16
        %v3825 = vpop.permute.xlu0 %3824
        %3826 = vrot.lane.b32.xlu0 %v3791, 16
        %v3827 = vpop.permute.xlu0 %3826
        %3828 = vrot.lane.b32.xlu0 %v3793, 16
        %v3829 = vpop.permute.xlu0 %3828
        %3830 = vrot.lane.b32.xlu0 %v3795, 16
        %v3831 = vpop.permute.xlu0 %3830
        %3832 = vrot.lane.b32.xlu0 %v3797, 16
        %v3833 = vpop.permute.xlu0 %3832
        %3834 = vrot.lane.b32.xlu0 %v3799, 16
        %v3835 = vpop.permute.xlu0 %3834
        %3836 = vrot.lane.b32.xlu0 %v3801, 16
        %v3837 = vpop.permute.xlu0 %3836
        %3838 = vrot.lane.b32.xlu0 %v3803, 16
        %v3839 = vpop.permute.xlu0 %3838
        %3840 = vrot.lane.b32.xlu0 %v3805, 16
        %v3841 = vpop.permute.xlu0 %3840
        %3842 = vrot.lane.b32.xlu0 %v3807, 16
        %v3843 = vpop.permute.xlu0 %3842
        %3844 = vrot.lane.b32.xlu0 %v3809, 16
        %v3845 = vpop.permute.xlu0 %3844
        %3846 = vrot.lane.b32.xlu0 %v3811, 16
        %v3847 = vpop.permute.xlu0 %3846
        %3848 = vrot.lane.b32.xlu0 %v3813, 16
        %v3849 = vpop.permute.xlu0 %3848
        %3850 = vrot.lane.b32.xlu0 %v3815, 16
        %v3851 = vpop.permute.xlu0 %3850
        %3852 = vrot.lane.b32.xlu0 %v3817, 16
        %v3853 = vpop.permute.xlu0 %3852
        %3854 = vrot.lane.b32.xlu0 %v3819, 16
        %v3855 = vpop.permute.xlu0 %3854
        %3856 = vrot.lane.b32.xlu0 %v3821, 16
        %v3857 = vpop.permute.xlu0 %3856
        %v3859 = vsel %vm1097, %v3061, %v3231
        %v3861 = vsel %vm1097, %v3062, %v3233
        %v3863 = vsel %vm1097, %v3063, %v3235
        %v3865 = vsel %vm1097, %v3064, %v3237
        %v3867 = vsel %vm1097, %v3065, %v3239
        %v3869 = vsel %vm1097, %v3066, %v3241
        %v3871 = vsel %vm1097, %v3067, %v3243
        %v3873 = vsel %vm1097, %v3068, %v3245
        %v3875 = vsel %vm1097, %v3069, %v3247
        %v3877 = vsel %vm1097, %v3070, %v3249
        %v3879 = vsel %vm1097, %v3071, %v3251
        %v3881 = vsel %vm1097, %v3072, %v3253
        %v3883 = vsel %vm1097, %v3073, %v3255
        %v3885 = vsel %vm1097, %v3074, %v3257
        %v3887 = vsel %vm1097, %v3075, %v3259
        %v3889 = vsel %vm1097, %v3076, %v3261
        %v3891 = vsel %vm1097, %v3077, %v3263
        %v3893 = vsel %vm1097, %v3078, %v3265
        %v3895 = vsel %vm1134, %v3859, %v3307
        %v3897 = vsel %vm1134, %v3861, %v3309
        %v3899 = vsel %vm1134, %v3863, %v3311
        %v3901 = vsel %vm1134, %v3865, %v3313
        %v3903 = vsel %vm1134, %v3867, %v3315
        %v3905 = vsel %vm1134, %v3869, %v3317
        %v3907 = vsel %vm1134, %v3871, %v3319
        %v3909 = vsel %vm1134, %v3873, %v3321
        %v3911 = vsel %vm1134, %v3875, %v3323
        %v3913 = vsel %vm1134, %v3877, %v3325
        %v3915 = vsel %vm1134, %v3879, %v3327
        %v3917 = vsel %vm1134, %v3881, %v3329
        %v3919 = vsel %vm1134, %v3883, %v3331
        %v3921 = vsel %vm1134, %v3885, %v3333
        %v3923 = vsel %vm1134, %v3887, %v3335
        %v3925 = vsel %vm1134, %v3889, %v3337
        %v3927 = vsel %vm1134, %v3891, %v3339
        %v3929 = vsel %vm1134, %v3893, %v3341
        %v3931 = vsel %vm1171, %v3895, %v3360
        %v3933 = vsel %vm1171, %v3897, %v3362
        %v3935 = vsel %vm1171, %v3899, %v3364
        %v3937 = vsel %vm1171, %v3901, %v3366
        %v3939 = vsel %vm1171, %v3903, %v3368
        %v3941 = vsel %vm1171, %v3905, %v3370
        %v3943 = vsel %vm1171, %v3907, %v3372
        %v3945 = vsel %vm1171, %v3909, %v3374
        %v3947 = vsel %vm1171, %v3911, %v3376
        %v3949 = vsel %vm1171, %v3913, %v3378
        %v3951 = vsel %vm1171, %v3915, %v3380
        %v3953 = vsel %vm1171, %v3917, %v3382
        %v3955 = vsel %vm1171, %v3919, %v3384
        %v3957 = vsel %vm1171, %v3921, %v3386
        %v3959 = vsel %vm1171, %v3923, %v3388
        %v3961 = vsel %vm1171, %v3925, %v3390
        %v3963 = vsel %vm1171, %v3927, %v3392
        %v3965 = vsel %vm1171, %v3929, %v3394
        %v3967 = vsel %vm1208, %v3931, %v3489
        %v3969 = vsel %vm1208, %v3933, %v3491
        %v3971 = vsel %vm1208, %v3935, %v3493
        %v3973 = vsel %vm1208, %v3937, %v3495
        %v3975 = vsel %vm1208, %v3939, %v3497
        %v3977 = vsel %vm1208, %v3941, %v3499
        %v3979 = vsel %vm1208, %v3943, %v3501
        %v3981 = vsel %vm1208, %v3945, %v3503
        %v3983 = vsel %vm1208, %v3947, %v3505
        %v3985 = vsel %vm1208, %v3949, %v3507
        %v3987 = vsel %vm1208, %v3951, %v3509
        %v3989 = vsel %vm1208, %v3953, %v3511
        %v3991 = vsel %vm1208, %v3955, %v3513
        %v3993 = vsel %vm1208, %v3957, %v3515
        %v3995 = vsel %vm1208, %v3959, %v3517
        %v3997 = vsel %vm1208, %v3961, %v3519
        %v3999 = vsel %vm1208, %v3963, %v3521
        %v4001 = vsel %vm1208, %v3965, %v3523
        %v4003 = vsel %vm1245, %v3967, %v3565
        %v4005 = vsel %vm1245, %v3969, %v3567
        %v4007 = vsel %vm1245, %v3971, %v3569
        %v4009 = vsel %vm1245, %v3973, %v3571
        %v4011 = vsel %vm1245, %v3975, %v3573
        %v4013 = vsel %vm1245, %v3977, %v3575
        %v4015 = vsel %vm1245, %v3979, %v3577
        %v4017 = vsel %vm1245, %v3981, %v3579
        %v4019 = vsel %vm1245, %v3983, %v3581
        %v4021 = vsel %vm1245, %v3985, %v3583
        %v4023 = vsel %vm1245, %v3987, %v3585
        %v4025 = vsel %vm1245, %v3989, %v3587
        %v4027 = vsel %vm1245, %v3991, %v3589
        %v4029 = vsel %vm1245, %v3993, %v3591
        %v4031 = vsel %vm1245, %v3995, %v3593
        %v4033 = vsel %vm1245, %v3997, %v3595
        %v4035 = vsel %vm1245, %v3999, %v3597
        %v4037 = vsel %vm1245, %v4001, %v3599
        %v4039 = vsel %vm1282, %v4003, %v3618
        %v4041 = vsel %vm1282, %v4005, %v3620
        %v4043 = vsel %vm1282, %v4007, %v3622
        %v4045 = vsel %vm1282, %v4009, %v3624
        %v4047 = vsel %vm1282, %v4011, %v3626
        %v4049 = vsel %vm1282, %v4013, %v3628
        %v4051 = vsel %vm1282, %v4015, %v3630
        %v4053 = vsel %vm1282, %v4017, %v3632
        %v4055 = vsel %vm1282, %v4019, %v3634
        %v4057 = vsel %vm1282, %v4021, %v3636
        %v4059 = vsel %vm1282, %v4023, %v3638
        %v4061 = vsel %vm1282, %v4025, %v3640
        %v4063 = vsel %vm1282, %v4027, %v3642
        %v4065 = vsel %vm1282, %v4029, %v3644
        %v4067 = vsel %vm1282, %v4031, %v3646
        %v4069 = vsel %vm1282, %v4033, %v3648
        %v4071 = vsel %vm1282, %v4035, %v3650
        %v4073 = vsel %vm1282, %v4037, %v3652
        %v4075 = vsel %vm1319, %v4039, %v3747
        %v4077 = vsel %vm1319, %v4041, %v3749
        %v4079 = vsel %vm1319, %v4043, %v3751
        %v4081 = vsel %vm1319, %v4045, %v3753
        %v4083 = vsel %vm1319, %v4047, %v3755
        %v4085 = vsel %vm1319, %v4049, %v3757
        %v4087 = vsel %vm1319, %v4051, %v3759
        %v4089 = vsel %vm1319, %v4053, %v3761
        %v4091 = vsel %vm1319, %v4055, %v3763
        %v4093 = vsel %vm1319, %v4057, %v3765
        %v4095 = vsel %vm1319, %v4059, %v3767
        %v4097 = vsel %vm1319, %v4061, %v3769
        %v4099 = vsel %vm1319, %v4063, %v3771
        %v4101 = vsel %vm1319, %v4065, %v3773
        %v4103 = vsel %vm1319, %v4067, %v3775
        %v4105 = vsel %vm1319, %v4069, %v3777
        %v4107 = vsel %vm1319, %v4071, %v3779
        %v4109 = vsel %vm1319, %v4073, %v3781
        %v4111 = vsel %vm1356, %v4075, %v3823
        %v4113 = vsel %vm1356, %v4077, %v3825
        %v4115 = vsel %vm1356, %v4079, %v3827
        %v4117 = vsel %vm1356, %v4081, %v3829
        %v4119 = vsel %vm1356, %v4083, %v3831
        %v4121 = vsel %vm1356, %v4085, %v3833
        %v4123 = vsel %vm1356, %v4087, %v3835
        %v4125 = vsel %vm1356, %v4089, %v3837
        %v4127 = vsel %vm1356, %v4091, %v3839
        %v4129 = vsel %vm1356, %v4093, %v3841
        %v4131 = vsel %vm1356, %v4095, %v3843
        %v4133 = vsel %vm1356, %v4097, %v3845
        %v4135 = vsel %vm1356, %v4099, %v3847
        %v4137 = vsel %vm1356, %v4101, %v3849
        %v4139 = vsel %vm1356, %v4103, %v3851
        %v4141 = vsel %vm1356, %v4105, %v3853
        %v4143 = vsel %vm1356, %v4107, %v3855
        %v4145 = vsel %vm1356, %v4109, %v3857
        %p4146 = scmp.lt.s32.totalorder %s2935, 0
        %s4147 = ssub.s32 0, %s2935
        %s4148 = scalar_select %p4146, %s4147, %s2935
        %s4149 = sdiv.u32.pop %s4148, 3
        %s4150 = srem.u32.pop %s4148, 3
        %s4151 = ssub.s32 0, %s4150
        %s4152 = scalar_select %p4146, %s4151, %s4150
        %p4153 = scmp.ne.s32.totalorder %s4152, 0
        %p4154 = scmp.lt.s32.totalorder %s4152, 0
        %p4155 = pnand %p4154, %p4153
        %p4156 = pneg %p4155
        %s4157 = sadd.s32 %s4152, 3
        %s4158 = scalar_select %p4156, %s4157, %s4152
        %v4177 = vunpack.c.l.b16 %v4111
        %v4178 = vunpack.c.h.b16 %v4111
        %v4179 = vunpack.c.l.b16 %v4113
        %v4180 = vunpack.c.h.b16 %v4113
        %v4181 = vunpack.c.l.b16 %v4115
        %v4182 = vunpack.c.h.b16 %v4115
        %v4183 = vunpack.c.l.b16 %v4117
        %v4184 = vunpack.c.h.b16 %v4117
        %v4185 = vunpack.c.l.b16 %v4119
        %v4186 = vunpack.c.h.b16 %v4119
        %v4187 = vunpack.c.l.b16 %v4121
        %v4188 = vunpack.c.h.b16 %v4121
        %v4189 = vunpack.c.l.b16 %v4123
        %v4190 = vunpack.c.h.b16 %v4123
        %v4191 = vunpack.c.l.b16 %v4125
        %v4192 = vunpack.c.h.b16 %v4125
        %v4193 = vunpack.c.l.b16 %v4127
        %v4194 = vunpack.c.h.b16 %v4127
        %v4195 = vunpack.c.l.b16 %v4129
        %v4196 = vunpack.c.h.b16 %v4129
        %v4197 = vunpack.c.l.b16 %v4131
        %v4198 = vunpack.c.h.b16 %v4131
        %v4199 = vunpack.c.l.b16 %v4133
        %v4200 = vunpack.c.h.b16 %v4133
        %v4201 = vunpack.c.l.b16 %v4135
        %v4202 = vunpack.c.h.b16 %v4135
        %v4203 = vunpack.c.l.b16 %v4137
        %v4204 = vunpack.c.h.b16 %v4137
        %v4205 = vunpack.c.l.b16 %v4139
        %v4206 = vunpack.c.h.b16 %v4139
        %v4207 = vunpack.c.l.b16 %v4141
        %v4208 = vunpack.c.h.b16 %v4141
        %v4209 = vunpack.c.l.b16 %v4143
        %v4210 = vunpack.c.h.b16 %v4143
        %v4211 = vunpack.c.l.b16 %v4145
        %v4212 = vunpack.c.h.b16 %v4145
        %v4213 = vpack.c.b16 %v4177, %v4177
        %v4214 = vpack.c.b16 %v4178, %v4178
        %v4215 = vpack.c.b16 %v4179, %v4179
        %v4216 = vpack.c.b16 %v4180, %v4180
        %v4217 = vpack.c.b16 %v4181, %v4181
        %v4218 = vpack.c.b16 %v4182, %v4182
        %v4219 = vpack.c.b16 %v4183, %v4183
        %v4220 = vpack.c.b16 %v4184, %v4184
        %v4221 = vpack.c.b16 %v4185, %v4185
        %v4222 = vpack.c.b16 %v4186, %v4186
        %v4223 = vpack.c.b16 %v4187, %v4187
        %v4224 = vpack.c.b16 %v4188, %v4188
        %v4225 = vpack.c.b16 %v4189, %v4189
        %v4226 = vpack.c.b16 %v4190, %v4190
        %v4227 = vpack.c.b16 %v4191, %v4191
        %v4228 = vpack.c.b16 %v4192, %v4192
        %v4229 = vpack.c.b16 %v4193, %v4193
        %v4230 = vpack.c.b16 %v4194, %v4194
        %v4231 = vpack.c.b16 %v4195, %v4195
        %v4232 = vpack.c.b16 %v4196, %v4196
        %v4233 = vpack.c.b16 %v4197, %v4197
        %v4234 = vpack.c.b16 %v4198, %v4198
        %v4235 = vpack.c.b16 %v4199, %v4199
        %v4236 = vpack.c.b16 %v4200, %v4200
        %v4237 = vpack.c.b16 %v4201, %v4201
        %v4238 = vpack.c.b16 %v4202, %v4202
        %v4239 = vpack.c.b16 %v4203, %v4203
        %v4240 = vpack.c.b16 %v4204, %v4204
        %v4241 = vpack.c.b16 %v4205, %v4205
        %v4242 = vpack.c.b16 %v4206, %v4206
        %v4243 = vpack.c.b16 %v4207, %v4207
        %v4244 = vpack.c.b16 %v4208, %v4208
        %v4245 = vpack.c.b16 %v4209, %v4209
        %v4246 = vpack.c.b16 %v4210, %v4210
        %v4247 = vpack.c.b16 %v4211, %v4211
        %v4248 = vpack.c.b16 %v4212, %v4212
        %s4285 = smul.u32 %s4158, 36
        %s4286 = smul.addr %s4285, 4
        %s4287 = scalar_lea.vmem [#allocation2], %s4286
        %4288 = vst.msk [vmem:[%s4287] sm:$0xf] %vm1519, %v4213
        %4289 = vst.msk [vmem:[%s4287 + $0x4] sm:$0xf] %vm1519, %v4214
        %4290 = vst.msk [vmem:[%s4287 + $0x8] sm:$0xf] %vm1519, %v4215
        %4291 = vst.msk [vmem:[%s4287 + $0xc] sm:$0xf] %vm1519, %v4216
        %4292 = vst.msk [vmem:[%s4287 + $0x10] sm:$0xf] %vm1519, %v4217
        %4293 = vst.msk [vmem:[%s4287 + $0x14] sm:$0xf] %vm1519, %v4218
        %4294 = vst.msk [vmem:[%s4287 + $0x18] sm:$0xf] %vm1519, %v4219
        %4295 = vst.msk [vmem:[%s4287 + $0x1c] sm:$0xf] %vm1519, %v4220
        %4296 = vst.msk [vmem:[%s4287 + $0x20] sm:$0xf] %vm1519, %v4221
        %4297 = vst.msk [vmem:[%s4287 + $0x24] sm:$0xf] %vm1519, %v4222
        %4298 = vst.msk [vmem:[%s4287 + $0x28] sm:$0xf] %vm1519, %v4223
        %4299 = vst.msk [vmem:[%s4287 + $0x2c] sm:$0xf] %vm1519, %v4224
        %4300 = vst.msk [vmem:[%s4287 + $0x30] sm:$0xf] %vm1519, %v4225
        %4301 = vst.msk [vmem:[%s4287 + $0x34] sm:$0xf] %vm1519, %v4226
        %4302 = vst.msk [vmem:[%s4287 + $0x38] sm:$0xf] %vm1519, %v4227
        %4303 = vst.msk [vmem:[%s4287 + $0x3c] sm:$0xf] %vm1519, %v4228
        %4304 = vst.msk [vmem:[%s4287 + $0x40] sm:$0xf] %vm1519, %v4229
        %4305 = vst.msk [vmem:[%s4287 + $0x44] sm:$0xf] %vm1519, %v4230
        %4306 = vst.msk [vmem:[%s4287 + $0x48] sm:$0xf] %vm1519, %v4231
        %4307 = vst.msk [vmem:[%s4287 + $0x4c] sm:$0xf] %vm1519, %v4232
        %4308 = vst.msk [vmem:[%s4287 + $0x50] sm:$0xf] %vm1519, %v4233
        %4309 = vst.msk [vmem:[%s4287 + $0x54] sm:$0xf] %vm1519, %v4234
        %4310 = vst.msk [vmem:[%s4287 + $0x58] sm:$0xf] %vm1519, %v4235
        %4311 = vst.msk [vmem:[%s4287 + $0x5c] sm:$0xf] %vm1519, %v4236
        %4312 = vst.msk [vmem:[%s4287 + $0x60] sm:$0xf] %vm1519, %v4237
        %4313 = vst.msk [vmem:[%s4287 + $0x64] sm:$0xf] %vm1519, %v4238
        %4314 = vst.msk [vmem:[%s4287 + $0x68] sm:$0xf] %vm1519, %v4239
        %4315 = vst.msk [vmem:[%s4287 + $0x6c] sm:$0xf] %vm1519, %v4240
        %4316 = vst.msk [vmem:[%s4287 + $0x70] sm:$0xf] %vm1519, %v4241
        %4317 = vst.msk [vmem:[%s4287 + $0x74] sm:$0xf] %vm1519, %v4242
        %4318 = vst.msk [vmem:[%s4287 + $0x78] sm:$0xf] %vm1519, %v4243
        %4319 = vst.msk [vmem:[%s4287 + $0x7c] sm:$0xf] %vm1519, %v4244
        %4320 = vst.msk [vmem:[%s4287 + $0x80] sm:$0xf] %vm1519, %v4245
        %4321 = vst.msk [vmem:[%s4287 + $0x84] sm:$0xf] %vm1519, %v4246
        %4322 = vst.msk [vmem:[%s4287 + $0x88] sm:$0xf] %vm1519, %v4247
        %4323 = vst.msk [vmem:[%s4287 + $0x8c] sm:$0xf] %vm1519, %v4248
        %p4324 = scmp.lt.s32.totalorder %s2928, 0
        %s4325 = ssub.s32 0, %s2928
        %s4326 = scalar_select %p4324, %s4325, %s2928
        %s4327 = sdiv.u32.pop %s4326, 3
        %s4328 = srem.u32.pop %s4326, 3
        %s4329 = ssub.s32 0, %s4328
        %s4330 = scalar_select %p4324, %s4329, %s4328
        %s4331 = smul.u32 %s4330, 36
        %s4332 = smul.addr %s4331, 4
        %s4333 = scalar_lea.vmem [#allocation2], %s4332
        %v4334 = vld [vmem:[%s4333] sm:$0xf]
        %v4335 = vld [vmem:[%s4333 + $0x4] sm:$0xf]
        %v4336 = vld [vmem:[%s4333 + $0x8] sm:$0xf]
        %v4337 = vld [vmem:[%s4333 + $0xc] sm:$0xf]
        %v4338 = vld [vmem:[%s4333 + $0x10] sm:$0xf]
        %v4339 = vld [vmem:[%s4333 + $0x14] sm:$0xf]
        %v4340 = vld [vmem:[%s4333 + $0x18] sm:$0xf]
        %v4341 = vld [vmem:[%s4333 + $0x1c] sm:$0xf]
        %v4342 = vld [vmem:[%s4333 + $0x20] sm:$0xf]
        %v4343 = vld [vmem:[%s4333 + $0x24] sm:$0xf]
        %v4344 = vld [vmem:[%s4333 + $0x28] sm:$0xf]
        %v4345 = vld [vmem:[%s4333 + $0x2c] sm:$0xf]
        %v4346 = vld [vmem:[%s4333 + $0x30] sm:$0xf]
        %v4347 = vld [vmem:[%s4333 + $0x34] sm:$0xf]
        %v4348 = vld [vmem:[%s4333 + $0x38] sm:$0xf]
        %v4349 = vld [vmem:[%s4333 + $0x3c] sm:$0xf]
        %v4350 = vld [vmem:[%s4333 + $0x40] sm:$0xf]
        %v4351 = vld [vmem:[%s4333 + $0x44] sm:$0xf]
        %v4352 = vld [vmem:[%s4333 + $0x48] sm:$0xf]
        %v4353 = vld [vmem:[%s4333 + $0x4c] sm:$0xf]
        %v4354 = vld [vmem:[%s4333 + $0x50] sm:$0xf]
        %v4355 = vld [vmem:[%s4333 + $0x54] sm:$0xf]
        %v4356 = vld [vmem:[%s4333 + $0x58] sm:$0xf]
        %v4357 = vld [vmem:[%s4333 + $0x5c] sm:$0xf]
        %v4358 = vld [vmem:[%s4333 + $0x60] sm:$0xf]
        %v4359 = vld [vmem:[%s4333 + $0x64] sm:$0xf]
        %v4360 = vld [vmem:[%s4333 + $0x68] sm:$0xf]
        %v4361 = vld [vmem:[%s4333 + $0x6c] sm:$0xf]
        %v4362 = vld [vmem:[%s4333 + $0x70] sm:$0xf]
        %v4363 = vld [vmem:[%s4333 + $0x74] sm:$0xf]
        %v4364 = vld [vmem:[%s4333 + $0x78] sm:$0xf]
        %v4365 = vld [vmem:[%s4333 + $0x7c] sm:$0xf]
        %v4366 = vld [vmem:[%s4333 + $0x80] sm:$0xf]
        %v4367 = vld [vmem:[%s4333 + $0x84] sm:$0xf]
        %v4368 = vld [vmem:[%s4333 + $0x88] sm:$0xf]
        %v4369 = vld [vmem:[%s4333 + $0x8c] sm:$0xf]
        %v4370 = vld [vmem:[%s1] sm:$0xf]
        %v4371 = vld [vmem:[%s1 + $0x4] sm:$0xf]
        %v4372 = vld [vmem:[%s1 + $0x8] sm:$0x1]
        %s4373 = sadd.s32 %s2928, 1
        %p4374 = scmp.lt.s32.totalorder %s4373, 0
        %s4375 = ssub.s32 0, %s4373
        %s4376 = scalar_select %p4374, %s4375, %s4373
        %s4377 = sdiv.u32.pop %s4376, 3
        %s4378 = srem.u32.pop %s4376, 3
        %s4379 = ssub.s32 0, %s4378
        %s4380 = scalar_select %p4374, %s4379, %s4378
        %s4381 = smul.u32 %s4380, 36
        %s4382 = smul.addr %s4381, 4
        %s4383 = scalar_lea.vmem [#allocation2], %s4382
        %v4384 = vld [vmem:[%s4383] sm:$0xf]
        %v4385 = vld [vmem:[%s4383 + $0x4] sm:$0xf]
        %v4386 = vld [vmem:[%s4383 + $0x8] sm:$0xf]
        %v4387 = vld [vmem:[%s4383 + $0xc] sm:$0xf]
        %v4388 = vld [vmem:[%s4383 + $0x10] sm:$0xf]
        %v4389 = vld [vmem:[%s4383 + $0x14] sm:$0xf]
        %v4390 = vld [vmem:[%s4383 + $0x18] sm:$0xf]
        %v4391 = vld [vmem:[%s4383 + $0x1c] sm:$0xf]
        %v4392 = vld [vmem:[%s4383 + $0x20] sm:$0xf]
        %v4393 = vld [vmem:[%s4383 + $0x24] sm:$0xf]
        %v4394 = vld [vmem:[%s4383 + $0x28] sm:$0xf]
        %v4395 = vld [vmem:[%s4383 + $0x2c] sm:$0xf]
        %v4396 = vld [vmem:[%s4383 + $0x30] sm:$0xf]
        %v4397 = vld [vmem:[%s4383 + $0x34] sm:$0xf]
        %v4398 = vld [vmem:[%s4383 + $0x38] sm:$0xf]
        %v4399 = vld [vmem:[%s4383 + $0x3c] sm:$0xf]
        %v4400 = vld [vmem:[%s4383 + $0x40] sm:$0xf]
        %v4401 = vld [vmem:[%s4383 + $0x44] sm:$0xf]
        %v4402 = vld [vmem:[%s4383 + $0x48] sm:$0xf]
        %v4403 = vld [vmem:[%s4383 + $0x4c] sm:$0xf]
        %v4404 = vld [vmem:[%s4383 + $0x50] sm:$0xf]
        %v4405 = vld [vmem:[%s4383 + $0x54] sm:$0xf]
        %v4406 = vld [vmem:[%s4383 + $0x58] sm:$0xf]
        %v4407 = vld [vmem:[%s4383 + $0x5c] sm:$0xf]
        %v4408 = vld [vmem:[%s4383 + $0x60] sm:$0xf]
        %v4409 = vld [vmem:[%s4383 + $0x64] sm:$0xf]
        %v4410 = vld [vmem:[%s4383 + $0x68] sm:$0xf]
        %v4411 = vld [vmem:[%s4383 + $0x6c] sm:$0xf]
        %v4412 = vld [vmem:[%s4383 + $0x70] sm:$0xf]
        %v4413 = vld [vmem:[%s4383 + $0x74] sm:$0xf]
        %v4414 = vld [vmem:[%s4383 + $0x78] sm:$0xf]
        %v4415 = vld [vmem:[%s4383 + $0x7c] sm:$0xf]
        %v4416 = vld [vmem:[%s4383 + $0x80] sm:$0xf]
        %v4417 = vld [vmem:[%s4383 + $0x84] sm:$0xf]
        %v4418 = vld [vmem:[%s4383 + $0x88] sm:$0xf]
        %v4419 = vld [vmem:[%s4383 + $0x8c] sm:$0xf]
        %s4420 = scalar_lea.vmem %s1, 12
        %v4421 = vld [vmem:[%s4420] sm:$0xf]
        %v4422 = vld [vmem:[%s4420 + $0x4] sm:$0xf]
        %v4423 = vld [vmem:[%s4420 + $0x8] sm:$0x1]
        %v4460 = vunpack.c.l.b16 %v4384
        %v4461 = vunpack.c.l.b16 %v4385
        %v4462 = vunpack.c.l.b16 %v4386
        %v4463 = vunpack.c.l.b16 %v4387
        %v4464 = vunpack.c.l.b16 %v4388
        %v4465 = vunpack.c.l.b16 %v4389
        %v4466 = vunpack.c.l.b16 %v4390
        %v4467 = vunpack.c.l.b16 %v4391
        %v4468 = vunpack.c.l.b16 %v4392
        %v4469 = vunpack.c.l.b16 %v4393
        %v4470 = vunpack.c.l.b16 %v4394
        %v4471 = vunpack.c.l.b16 %v4395
        %v4472 = vunpack.c.l.b16 %v4396
        %v4473 = vunpack.c.l.b16 %v4397
        %v4474 = vunpack.c.l.b16 %v4398
        %v4475 = vunpack.c.l.b16 %v4399
        %v4476 = vunpack.c.l.b16 %v4400
        %v4477 = vunpack.c.l.b16 %v4401
        %v4478 = vunpack.c.l.b16 %v4402
        %v4479 = vunpack.c.l.b16 %v4403
        %v4480 = vunpack.c.l.b16 %v4404
        %v4481 = vunpack.c.l.b16 %v4405
        %v4482 = vunpack.c.l.b16 %v4406
        %v4483 = vunpack.c.l.b16 %v4407
        %v4484 = vunpack.c.l.b16 %v4408
        %v4485 = vunpack.c.l.b16 %v4409
        %v4486 = vunpack.c.l.b16 %v4410
        %v4487 = vunpack.c.l.b16 %v4411
        %v4488 = vunpack.c.l.b16 %v4412
        %v4489 = vunpack.c.l.b16 %v4413
        %v4490 = vunpack.c.l.b16 %v4414
        %v4491 = vunpack.c.l.b16 %v4415
        %v4492 = vunpack.c.l.b16 %v4416
        %v4493 = vunpack.c.l.b16 %v4417
        %v4494 = vunpack.c.l.b16 %v4418
        %v4495 = vunpack.c.l.b16 %v4419
        %v4496 = vpack.c.b16 %v4461, %v4460
        %v4497 = vpack.c.b16 %v4463, %v4462
        %v4498 = vpack.c.b16 %v4465, %v4464
        %v4499 = vpack.c.b16 %v4467, %v4466
        %v4500 = vpack.c.b16 %v4469, %v4468
        %v4501 = vpack.c.b16 %v4471, %v4470
        %v4502 = vpack.c.b16 %v4473, %v4472
        %v4503 = vpack.c.b16 %v4475, %v4474
        %v4504 = vpack.c.b16 %v4477, %v4476
        %v4505 = vpack.c.b16 %v4479, %v4478
        %v4506 = vpack.c.b16 %v4481, %v4480
        %v4507 = vpack.c.b16 %v4483, %v4482
        %v4508 = vpack.c.b16 %v4485, %v4484
        %v4509 = vpack.c.b16 %v4487, %v4486
        %v4510 = vpack.c.b16 %v4489, %v4488
        %v4511 = vpack.c.b16 %v4491, %v4490
        %v4512 = vpack.c.b16 %v4493, %v4492
        %v4513 = vpack.c.b16 %v4495, %v4494
        %v4517 = vunpack.c.l.b16 %v4421
        %v4518 = vunpack.c.l.b16 %v4422
        %v4519 = vunpack.c.l.b16 %v4423
        %v4520 = vpack.c.b16 %v4518, %v4517
        %v4521 = vpack.c.b16 %v4519, %v4519
        %vm4523 = vcmask 146432
        %v4525 = vsel %vm4523, %v4496, 0
        %v4528 = vsel %vm4523, %v4497, 0
        %v4531 = vsel %vm4523, %v4498, 0
        %v4534 = vsel %vm4523, %v4499, 0
        %v4537 = vsel %vm4523, %v4500, 0
        %v4540 = vsel %vm4523, %v4501, 0
        %v4543 = vsel %vm4523, %v4502, 0
        %v4546 = vsel %vm4523, %v4503, 0
        %v4549 = vsel %vm4523, %v4504, 0
        %v4552 = vsel %vm4523, %v4505, 0
        %v4555 = vsel %vm4523, %v4506, 0
        %v4558 = vsel %vm4523, %v4507, 0
        %v4561 = vsel %vm4523, %v4508, 0
        %v4564 = vsel %vm4523, %v4509, 0
        %v4567 = vsel %vm4523, %v4510, 0
        %v4570 = vsel %vm4523, %v4511, 0
        %v4573 = vsel %vm4523, %v4512, 0
        %v4576 = vsel %vm4523, %v4513, 0
        %vm4578 = vcmask 1040384
        %v4580 = vsel %vm4578, %v4521, 0
        %4582 = vmatprep.subr.bf16.mxu0 0
        %4583 = vmatpush1.bf16.msra.mxu0 0
        %4584 = vmatprep.subr.bf16.mxu0 0
        %4585 = vmatpush1.bf16.msra.mxu0 0
        %4586 = vmatprep.subr.bf16.mxu0 0
        %4587 = vmatpush1.bf16.msra.mxu0 0
        %4588 = vmatprep.subr.bf16.mxu0 0
        %4589 = vmatpush1.bf16.msra.mxu0 0
        %4590 = vmatprep.subr.bf16.mxu0 0
        %4591 = vmatpush1.bf16.msra.mxu0 0
        %4592 = vmatprep.subr.bf16.mxu0 0
        %4593 = vmatpush1.bf16.msra.mxu0 0
        %4594 = vmatprep.subr.bf16.mxu0 0
        %4595 = vmatpush1.bf16.msra.mxu0 %v4580
        %4596 = vmatprep.subr.bf16.mxu0 0
        %4597 = vmatpush1.bf16.msra.mxu0 %v4520
        %4598 = vmatprep.subr.bf16.mxu0 0
        %4599 = vmatpush2.bf16.msra.mxu0 0
        %4600 = vmatprep.subr.bf16.mxu0 0
        %4601 = vmatpush2.bf16.msra.mxu0 0
        %4602 = vmatprep.subr.bf16.mxu0 0
        %4603 = vmatpush2.bf16.msra.mxu0 0
        %4604 = vmatprep.subr.bf16.mxu0 0
        %4605 = vmatpush2.bf16.msra.mxu0 0
        %4606 = vmatprep.subr.bf16.mxu0 0
        %4607 = vmatpush2.bf16.msra.mxu0 0
        %4608 = vmatprep.subr.bf16.mxu0 0
        %4609 = vmatpush2.bf16.msra.mxu0 0
        %4610 = vmatprep.subr.bf16.mxu0 0
        %4611 = vmatpush2.bf16.msra.mxu0 0
        %4612 = vmatprep.subr.bf16.mxu0 0
        %4613 = vmatpush2.bf16.msra.mxu0 0
        %4614 = vmatprep.mubr.bf16.mxu0 0
        %4615 = vmatmul.mubr.bf16.gmra.mxu0 %v4525
        %v4616 = vpop.f32.mrf.mxu0
        %v4617 = vadd.f32 0.0, %v4616
        %v4618 = vpop.f32.mrf.mxu0
        %v4619 = vpop.f32.mrf.mxu0
        %v4620 = vadd.f32 0.0, %v4619
        %v4621 = vpop.f32.mrf.mxu0
        %4622 = vmatprep.mubr.bf16.mxu0 0
        %4623 = vmatmul.mubr.bf16.gmra.mxu0 %v4528
        %v4624 = vpop.f32.mrf.mxu0
        %v4625 = vadd.f32 0.0, %v4624
        %v4626 = vpop.f32.mrf.mxu0
        %v4627 = vpop.f32.mrf.mxu0
        %v4628 = vadd.f32 0.0, %v4627
        %v4629 = vpop.f32.mrf.mxu0
        %4630 = vmatprep.mubr.bf16.mxu0 0
        %4631 = vmatmul.mubr.bf16.gmra.mxu0 %v4531
        %v4632 = vpop.f32.mrf.mxu0
        %v4633 = vadd.f32 0.0, %v4632
        %v4634 = vpop.f32.mrf.mxu0
        %v4635 = vpop.f32.mrf.mxu0
        %v4636 = vadd.f32 0.0, %v4635
        %v4637 = vpop.f32.mrf.mxu0
        %4638 = vmatprep.mubr.bf16.mxu0 0
        %4639 = vmatmul.mubr.bf16.gmra.mxu0 %v4534
        %v4640 = vpop.f32.mrf.mxu0
        %v4641 = vadd.f32 0.0, %v4640
        %v4642 = vpop.f32.mrf.mxu0
        %v4643 = vpop.f32.mrf.mxu0
        %v4644 = vadd.f32 0.0, %v4643
        %v4645 = vpop.f32.mrf.mxu0
        %4646 = vmatprep.mubr.bf16.mxu0 0
        %4647 = vmatmul.mubr.bf16.gmra.mxu0 %v4537
        %v4648 = vpop.f32.mrf.mxu0
        %v4649 = vadd.f32 0.0, %v4648
        %v4650 = vpop.f32.mrf.mxu0
        %v4651 = vpop.f32.mrf.mxu0
        %v4652 = vadd.f32 0.0, %v4651
        %v4653 = vpop.f32.mrf.mxu0
        %4654 = vmatprep.mubr.bf16.mxu0 0
        %4655 = vmatmul.mubr.bf16.gmra.mxu0 %v4540
        %v4656 = vpop.f32.mrf.mxu0
        %v4657 = vadd.f32 0.0, %v4656
        %v4658 = vpop.f32.mrf.mxu0
        %v4659 = vpop.f32.mrf.mxu0
        %v4660 = vadd.f32 0.0, %v4659
        %v4661 = vpop.f32.mrf.mxu0
        %4662 = vmatprep.mubr.bf16.mxu0 0
        %4663 = vmatmul.mubr.bf16.gmra.mxu0 %v4543
        %v4664 = vpop.f32.mrf.mxu0
        %v4665 = vadd.f32 0.0, %v4664
        %v4666 = vpop.f32.mrf.mxu0
        %v4667 = vpop.f32.mrf.mxu0
        %v4668 = vadd.f32 0.0, %v4667
        %v4669 = vpop.f32.mrf.mxu0
        %4670 = vmatprep.mubr.bf16.mxu0 0
        %4671 = vmatmul.mubr.bf16.gmra.mxu0 %v4546
        %v4672 = vpop.f32.mrf.mxu0
        %v4673 = vadd.f32 0.0, %v4672
        %v4674 = vpop.f32.mrf.mxu0
        %v4675 = vpop.f32.mrf.mxu0
        %v4676 = vadd.f32 0.0, %v4675
        %v4677 = vpop.f32.mrf.mxu0
        %4678 = vmatprep.mubr.bf16.mxu0 0
        %4679 = vmatmul.mubr.bf16.gmra.mxu0 %v4549
        %v4680 = vpop.f32.mrf.mxu0
        %v4681 = vadd.f32 0.0, %v4680
        %v4682 = vpop.f32.mrf.mxu0
        %v4683 = vpop.f32.mrf.mxu0
        %v4684 = vadd.f32 0.0, %v4683
        %v4685 = vpop.f32.mrf.mxu0
        %4686 = vmatprep.mubr.bf16.mxu0 0
        %4687 = vmatmul.mubr.bf16.gmra.mxu0 %v4552
        %v4688 = vpop.f32.mrf.mxu0
        %v4689 = vadd.f32 0.0, %v4688
        %v4690 = vpop.f32.mrf.mxu0
        %v4691 = vpop.f32.mrf.mxu0
        %v4692 = vadd.f32 0.0, %v4691
        %v4693 = vpop.f32.mrf.mxu0
        %4694 = vmatprep.mubr.bf16.mxu0 0
        %4695 = vmatmul.mubr.bf16.gmra.mxu0 %v4555
        %v4696 = vpop.f32.mrf.mxu0
        %v4697 = vadd.f32 0.0, %v4696
        %v4698 = vpop.f32.mrf.mxu0
        %v4699 = vpop.f32.mrf.mxu0
        %v4700 = vadd.f32 0.0, %v4699
        %v4701 = vpop.f32.mrf.mxu0
        %4702 = vmatprep.mubr.bf16.mxu0 0
        %4703 = vmatmul.mubr.bf16.gmra.mxu0 %v4558
        %v4704 = vpop.f32.mrf.mxu0
        %v4705 = vadd.f32 0.0, %v4704
        %v4706 = vpop.f32.mrf.mxu0
        %v4707 = vpop.f32.mrf.mxu0
        %v4708 = vadd.f32 0.0, %v4707
        %v4709 = vpop.f32.mrf.mxu0
        %4710 = vmatprep.mubr.bf16.mxu0 0
        %4711 = vmatmul.mubr.bf16.gmra.mxu0 %v4561
        %v4712 = vpop.f32.mrf.mxu0
        %v4713 = vadd.f32 0.0, %v4712
        %v4714 = vpop.f32.mrf.mxu0
        %v4715 = vpop.f32.mrf.mxu0
        %v4716 = vadd.f32 0.0, %v4715
        %v4717 = vpop.f32.mrf.mxu0
        %4718 = vmatprep.mubr.bf16.mxu0 0
        %4719 = vmatmul.mubr.bf16.gmra.mxu0 %v4564
        %v4720 = vpop.f32.mrf.mxu0
        %v4721 = vadd.f32 0.0, %v4720
        %v4722 = vpop.f32.mrf.mxu0
        %v4723 = vpop.f32.mrf.mxu0
        %v4724 = vadd.f32 0.0, %v4723
        %v4725 = vpop.f32.mrf.mxu0
        %4726 = vmatprep.mubr.bf16.mxu0 0
        %4727 = vmatmul.mubr.bf16.gmra.mxu0 %v4567
        %v4728 = vpop.f32.mrf.mxu0
        %v4729 = vadd.f32 0.0, %v4728
        %v4730 = vpop.f32.mrf.mxu0
        %v4731 = vpop.f32.mrf.mxu0
        %v4732 = vadd.f32 0.0, %v4731
        %v4733 = vpop.f32.mrf.mxu0
        %4734 = vmatprep.mubr.bf16.mxu0 0
        %4735 = vmatmul.mubr.bf16.gmra.mxu0 %v4570
        %v4736 = vpop.f32.mrf.mxu0
        %v4737 = vadd.f32 0.0, %v4736
        %v4738 = vpop.f32.mrf.mxu0
        %v4739 = vpop.f32.mrf.mxu0
        %v4740 = vadd.f32 0.0, %v4739
        %v4741 = vpop.f32.mrf.mxu0
        %4742 = vmatprep.mubr.bf16.mxu0 0
        %4743 = vmatmul.mubr.bf16.gmra.mxu0 %v4573
        %v4744 = vpop.f32.mrf.mxu0
        %v4745 = vadd.f32 0.0, %v4744
        %v4746 = vpop.f32.mrf.mxu0
        %v4747 = vpop.f32.mrf.mxu0
        %v4748 = vadd.f32 0.0, %v4747
        %v4749 = vpop.f32.mrf.mxu0
        %4750 = vmatprep.mubr.bf16.mxu0 0
        %4751 = vmatmul.mubr.bf16.gmra.mxu0 %v4576
        %v4752 = vpop.f32.mrf.mxu0
        %v4753 = vadd.f32 0.0, %v4752
        %v4754 = vpop.f32.mrf.mxu0
        %v4755 = vpop.f32.mrf.mxu0
        %v4756 = vadd.f32 0.0, %v4755
        %v4757 = vpop.f32.mrf.mxu0
        %4758 = vdwg.mxu0
        %v4795 = vunpack.c.l.b16 %v4334
        %v4796 = vunpack.c.l.b16 %v4335
        %v4797 = vunpack.c.l.b16 %v4336
        %v4798 = vunpack.c.l.b16 %v4337
        %v4799 = vunpack.c.l.b16 %v4338
        %v4800 = vunpack.c.l.b16 %v4339
        %v4801 = vunpack.c.l.b16 %v4340
        %v4802 = vunpack.c.l.b16 %v4341
        %v4803 = vunpack.c.l.b16 %v4342
        %v4804 = vunpack.c.l.b16 %v4343
        %v4805 = vunpack.c.l.b16 %v4344
        %v4806 = vunpack.c.l.b16 %v4345
        %v4807 = vunpack.c.l.b16 %v4346
        %v4808 = vunpack.c.l.b16 %v4347
        %v4809 = vunpack.c.l.b16 %v4348
        %v4810 = vunpack.c.l.b16 %v4349
        %v4811 = vunpack.c.l.b16 %v4350
        %v4812 = vunpack.c.l.b16 %v4351
        %v4813 = vunpack.c.l.b16 %v4352
        %v4814 = vunpack.c.l.b16 %v4353
        %v4815 = vunpack.c.l.b16 %v4354
        %v4816 = vunpack.c.l.b16 %v4355
        %v4817 = vunpack.c.l.b16 %v4356
        %v4818 = vunpack.c.l.b16 %v4357
        %v4819 = vunpack.c.l.b16 %v4358
        %v4820 = vunpack.c.l.b16 %v4359
        %v4821 = vunpack.c.l.b16 %v4360
        %v4822 = vunpack.c.l.b16 %v4361
        %v4823 = vunpack.c.l.b16 %v4362
        %v4824 = vunpack.c.l.b16 %v4363
        %v4825 = vunpack.c.l.b16 %v4364
        %v4826 = vunpack.c.l.b16 %v4365
        %v4827 = vunpack.c.l.b16 %v4366
        %v4828 = vunpack.c.l.b16 %v4367
        %v4829 = vunpack.c.l.b16 %v4368
        %v4830 = vunpack.c.l.b16 %v4369
        %v4831 = vpack.c.b16 %v4796, %v4795
        %v4832 = vpack.c.b16 %v4798, %v4797
        %v4833 = vpack.c.b16 %v4800, %v4799
        %v4834 = vpack.c.b16 %v4802, %v4801
        %v4835 = vpack.c.b16 %v4804, %v4803
        %v4836 = vpack.c.b16 %v4806, %v4805
        %v4837 = vpack.c.b16 %v4808, %v4807
        %v4838 = vpack.c.b16 %v4810, %v4809
        %v4839 = vpack.c.b16 %v4812, %v4811
        %v4840 = vpack.c.b16 %v4814, %v4813
        %v4841 = vpack.c.b16 %v4816, %v4815
        %v4842 = vpack.c.b16 %v4818, %v4817
        %v4843 = vpack.c.b16 %v4820, %v4819
        %v4844 = vpack.c.b16 %v4822, %v4821
        %v4845 = vpack.c.b16 %v4824, %v4823
        %v4846 = vpack.c.b16 %v4826, %v4825
        %v4847 = vpack.c.b16 %v4828, %v4827
        %v4848 = vpack.c.b16 %v4830, %v4829
        %v4852 = vunpack.c.l.b16 %v4370
        %v4853 = vunpack.c.l.b16 %v4371
        %v4854 = vunpack.c.l.b16 %v4372
        %v4855 = vpack.c.b16 %v4853, %v4852
        %v4856 = vpack.c.b16 %v4854, %v4854
        %v4859 = vsel %vm4523, %v4831, 0
        %v4862 = vsel %vm4523, %v4832, 0
        %v4865 = vsel %vm4523, %v4833, 0
        %v4868 = vsel %vm4523, %v4834, 0
        %v4871 = vsel %vm4523, %v4835, 0
        %v4874 = vsel %vm4523, %v4836, 0
        %v4877 = vsel %vm4523, %v4837, 0
        %v4880 = vsel %vm4523, %v4838, 0
        %v4883 = vsel %vm4523, %v4839, 0
        %v4886 = vsel %vm4523, %v4840, 0
        %v4889 = vsel %vm4523, %v4841, 0
        %v4892 = vsel %vm4523, %v4842, 0
        %v4895 = vsel %vm4523, %v4843, 0
        %v4898 = vsel %vm4523, %v4844, 0
        %v4901 = vsel %vm4523, %v4845, 0
        %v4904 = vsel %vm4523, %v4846, 0
        %v4907 = vsel %vm4523, %v4847, 0
        %v4910 = vsel %vm4523, %v4848, 0
        %v4913 = vsel %vm4578, %v4856, 0
        %4915 = vmatprep.subr.bf16.mxu0 0
        %4916 = vmatpush1.bf16.msra.mxu0 0
        %4917 = vmatprep.subr.bf16.mxu0 0
        %4918 = vmatpush1.bf16.msra.mxu0 0
        %4919 = vmatprep.subr.bf16.mxu0 0
        %4920 = vmatpush1.bf16.msra.mxu0 0
        %4921 = vmatprep.subr.bf16.mxu0 0
        %4922 = vmatpush1.bf16.msra.mxu0 0
        %4923 = vmatprep.subr.bf16.mxu0 0
        %4924 = vmatpush1.bf16.msra.mxu0 0
        %4925 = vmatprep.subr.bf16.mxu0 0
        %4926 = vmatpush1.bf16.msra.mxu0 0
        %4927 = vmatprep.subr.bf16.mxu0 0
        %4928 = vmatpush1.bf16.msra.mxu0 %v4913
        %4929 = vmatprep.subr.bf16.mxu0 0
        %4930 = vmatpush1.bf16.msra.mxu0 %v4855
        %4931 = vmatprep.subr.bf16.mxu0 0
        %4932 = vmatpush2.bf16.msra.mxu0 0
        %4933 = vmatprep.subr.bf16.mxu0 0
        %4934 = vmatpush2.bf16.msra.mxu0 0
        %4935 = vmatprep.subr.bf16.mxu0 0
        %4936 = vmatpush2.bf16.msra.mxu0 0
        %4937 = vmatprep.subr.bf16.mxu0 0
        %4938 = vmatpush2.bf16.msra.mxu0 0
        %4939 = vmatprep.subr.bf16.mxu0 0
        %4940 = vmatpush2.bf16.msra.mxu0 0
        %4941 = vmatprep.subr.bf16.mxu0 0
        %4942 = vmatpush2.bf16.msra.mxu0 0
        %4943 = vmatprep.subr.bf16.mxu0 0
        %4944 = vmatpush2.bf16.msra.mxu0 0
        %4945 = vmatprep.subr.bf16.mxu0 0
        %4946 = vmatpush2.bf16.msra.mxu0 0
        %4947 = vmatprep.mubr.bf16.mxu0 0
        %4948 = vmatmul.mubr.bf16.gmra.mxu0 %v4859
        %v4949 = vpop.f32.mrf.mxu0
        %v4950 = vadd.f32 %v4617, %v4949
        %v4951 = vpop.f32.mrf.mxu0
        %v4952 = vpop.f32.mrf.mxu0
        %v4953 = vadd.f32 %v4620, %v4952
        %v4954 = vpop.f32.mrf.mxu0
        %4955 = vmatprep.mubr.bf16.mxu0 0
        %4956 = vmatmul.mubr.bf16.gmra.mxu0 %v4862
        %v4957 = vpop.f32.mrf.mxu0
        %v4958 = vadd.f32 %v4625, %v4957
        %v4959 = vpop.f32.mrf.mxu0
        %v4960 = vpop.f32.mrf.mxu0
        %v4961 = vadd.f32 %v4628, %v4960
        %v4962 = vpop.f32.mrf.mxu0
        %4963 = vmatprep.mubr.bf16.mxu0 0
        %4964 = vmatmul.mubr.bf16.gmra.mxu0 %v4865
        %v4965 = vpop.f32.mrf.mxu0
        %v4966 = vadd.f32 %v4633, %v4965
        %v4967 = vpop.f32.mrf.mxu0
        %v4968 = vpop.f32.mrf.mxu0
        %v4969 = vadd.f32 %v4636, %v4968
        %v4970 = vpop.f32.mrf.mxu0
        %4971 = vmatprep.mubr.bf16.mxu0 0
        %4972 = vmatmul.mubr.bf16.gmra.mxu0 %v4868
        %v4973 = vpop.f32.mrf.mxu0
        %v4974 = vadd.f32 %v4641, %v4973
        %v4975 = vpop.f32.mrf.mxu0
        %v4976 = vpop.f32.mrf.mxu0
        %v4977 = vadd.f32 %v4644, %v4976
        %v4978 = vpop.f32.mrf.mxu0
        %4979 = vmatprep.mubr.bf16.mxu0 0
        %4980 = vmatmul.mubr.bf16.gmra.mxu0 %v4871
        %v4981 = vpop.f32.mrf.mxu0
        %v4982 = vadd.f32 %v4649, %v4981
        %v4983 = vpop.f32.mrf.mxu0
        %v4984 = vpop.f32.mrf.mxu0
        %v4985 = vadd.f32 %v4652, %v4984
        %v4986 = vpop.f32.mrf.mxu0
        %4987 = vmatprep.mubr.bf16.mxu0 0
        %4988 = vmatmul.mubr.bf16.gmra.mxu0 %v4874
        %v4989 = vpop.f32.mrf.mxu0
        %v4990 = vadd.f32 %v4657, %v4989
        %v4991 = vpop.f32.mrf.mxu0
        %v4992 = vpop.f32.mrf.mxu0
        %v4993 = vadd.f32 %v4660, %v4992
        %v4994 = vpop.f32.mrf.mxu0
        %4995 = vmatprep.mubr.bf16.mxu0 0
        %4996 = vmatmul.mubr.bf16.gmra.mxu0 %v4877
        %v4997 = vpop.f32.mrf.mxu0
        %v4998 = vadd.f32 %v4665, %v4997
        %v4999 = vpop.f32.mrf.mxu0
        %v5000 = vpop.f32.mrf.mxu0
        %v5001 = vadd.f32 %v4668, %v5000
        %v5002 = vpop.f32.mrf.mxu0
        %5003 = vmatprep.mubr.bf16.mxu0 0
        %5004 = vmatmul.mubr.bf16.gmra.mxu0 %v4880
        %v5005 = vpop.f32.mrf.mxu0
        %v5006 = vadd.f32 %v4673, %v5005
        %v5007 = vpop.f32.mrf.mxu0
        %v5008 = vpop.f32.mrf.mxu0
        %v5009 = vadd.f32 %v4676, %v5008
        %v5010 = vpop.f32.mrf.mxu0
        %5011 = vmatprep.mubr.bf16.mxu0 0
        %5012 = vmatmul.mubr.bf16.gmra.mxu0 %v4883
        %v5013 = vpop.f32.mrf.mxu0
        %v5014 = vadd.f32 %v4681, %v5013
        %v5015 = vpop.f32.mrf.mxu0
        %v5016 = vpop.f32.mrf.mxu0
        %v5017 = vadd.f32 %v4684, %v5016
        %v5018 = vpop.f32.mrf.mxu0
        %5019 = vmatprep.mubr.bf16.mxu0 0
        %5020 = vmatmul.mubr.bf16.gmra.mxu0 %v4886
        %v5021 = vpop.f32.mrf.mxu0
        %v5022 = vadd.f32 %v4689, %v5021
        %v5023 = vpop.f32.mrf.mxu0
        %v5024 = vpop.f32.mrf.mxu0
        %v5025 = vadd.f32 %v4692, %v5024
        %v5026 = vpop.f32.mrf.mxu0
        %5027 = vmatprep.mubr.bf16.mxu0 0
        %5028 = vmatmul.mubr.bf16.gmra.mxu0 %v4889
        %v5029 = vpop.f32.mrf.mxu0
        %v5030 = vadd.f32 %v4697, %v5029
        %v5031 = vpop.f32.mrf.mxu0
        %v5032 = vpop.f32.mrf.mxu0
        %v5033 = vadd.f32 %v4700, %v5032
        %v5034 = vpop.f32.mrf.mxu0
        %5035 = vmatprep.mubr.bf16.mxu0 0
        %5036 = vmatmul.mubr.bf16.gmra.mxu0 %v4892
        %v5037 = vpop.f32.mrf.mxu0
        %v5038 = vadd.f32 %v4705, %v5037
        %v5039 = vpop.f32.mrf.mxu0
        %v5040 = vpop.f32.mrf.mxu0
        %v5041 = vadd.f32 %v4708, %v5040
        %v5042 = vpop.f32.mrf.mxu0
        %5043 = vmatprep.mubr.bf16.mxu0 0
        %5044 = vmatmul.mubr.bf16.gmra.mxu0 %v4895
        %v5045 = vpop.f32.mrf.mxu0
        %v5046 = vadd.f32 %v4713, %v5045
        %v5047 = vpop.f32.mrf.mxu0
        %v5048 = vpop.f32.mrf.mxu0
        %v5049 = vadd.f32 %v4716, %v5048
        %v5050 = vpop.f32.mrf.mxu0
        %5051 = vmatprep.mubr.bf16.mxu0 0
        %5052 = vmatmul.mubr.bf16.gmra.mxu0 %v4898
        %v5053 = vpop.f32.mrf.mxu0
        %v5054 = vadd.f32 %v4721, %v5053
        %v5055 = vpop.f32.mrf.mxu0
        %v5056 = vpop.f32.mrf.mxu0
        %v5057 = vadd.f32 %v4724, %v5056
        %v5058 = vpop.f32.mrf.mxu0
        %5059 = vmatprep.mubr.bf16.mxu0 0
        %5060 = vmatmul.mubr.bf16.gmra.mxu0 %v4901
        %v5061 = vpop.f32.mrf.mxu0
        %v5062 = vadd.f32 %v4729, %v5061
        %v5063 = vpop.f32.mrf.mxu0
        %v5064 = vpop.f32.mrf.mxu0
        %v5065 = vadd.f32 %v4732, %v5064
        %v5066 = vpop.f32.mrf.mxu0
        %5067 = vmatprep.mubr.bf16.mxu0 0
        %5068 = vmatmul.mubr.bf16.gmra.mxu0 %v4904
        %v5069 = vpop.f32.mrf.mxu0
        %v5070 = vadd.f32 %v4737, %v5069
        %v5071 = vpop.f32.mrf.mxu0
        %v5072 = vpop.f32.mrf.mxu0
        %v5073 = vadd.f32 %v4740, %v5072
        %v5074 = vpop.f32.mrf.mxu0
        %5075 = vmatprep.mubr.bf16.mxu0 0
        %5076 = vmatmul.mubr.bf16.gmra.mxu0 %v4907
        %v5077 = vpop.f32.mrf.mxu0
        %v5078 = vadd.f32 %v4745, %v5077
        %v5079 = vpop.f32.mrf.mxu0
        %v5080 = vpop.f32.mrf.mxu0
        %v5081 = vadd.f32 %v4748, %v5080
        %v5082 = vpop.f32.mrf.mxu0
        %5083 = vmatprep.mubr.bf16.mxu0 0
        %5084 = vmatmul.mubr.bf16.gmra.mxu0 %v4910
        %v5085 = vpop.f32.mrf.mxu0
        %v5086 = vadd.f32 %v4753, %v5085
        %v5087 = vpop.f32.mrf.mxu0
        %v5088 = vpop.f32.mrf.mxu0
        %v5089 = vadd.f32 %v4756, %v5088
        %v5090 = vpop.f32.mrf.mxu0
        %5091 = vdwg.mxu0
        %s5092 = smul.u32 %s4152, 36
        %s5093 = smul.addr %s5092, 4
        %s5094 = scalar_lea.vmem [#allocation2], %s5093
        %v5095 = vld [vmem:[%s5094] sm:$0xf]
        %v5096 = vld [vmem:[%s5094 + $0x4] sm:$0xf]
        %v5097 = vld [vmem:[%s5094 + $0x8] sm:$0xf]
        %v5098 = vld [vmem:[%s5094 + $0xc] sm:$0xf]
        %v5099 = vld [vmem:[%s5094 + $0x10] sm:$0xf]
        %v5100 = vld [vmem:[%s5094 + $0x14] sm:$0xf]
        %v5101 = vld [vmem:[%s5094 + $0x18] sm:$0xf]
        %v5102 = vld [vmem:[%s5094 + $0x1c] sm:$0xf]
        %v5103 = vld [vmem:[%s5094 + $0x20] sm:$0xf]
        %v5104 = vld [vmem:[%s5094 + $0x24] sm:$0xf]
        %v5105 = vld [vmem:[%s5094 + $0x28] sm:$0xf]
        %v5106 = vld [vmem:[%s5094 + $0x2c] sm:$0xf]
        %v5107 = vld [vmem:[%s5094 + $0x30] sm:$0xf]
        %v5108 = vld [vmem:[%s5094 + $0x34] sm:$0xf]
        %v5109 = vld [vmem:[%s5094 + $0x38] sm:$0xf]
        %v5110 = vld [vmem:[%s5094 + $0x3c] sm:$0xf]
        %v5111 = vld [vmem:[%s5094 + $0x40] sm:$0xf]
        %v5112 = vld [vmem:[%s5094 + $0x44] sm:$0xf]
        %v5113 = vld [vmem:[%s5094 + $0x48] sm:$0xf]
        %v5114 = vld [vmem:[%s5094 + $0x4c] sm:$0xf]
        %v5115 = vld [vmem:[%s5094 + $0x50] sm:$0xf]
        %v5116 = vld [vmem:[%s5094 + $0x54] sm:$0xf]
        %v5117 = vld [vmem:[%s5094 + $0x58] sm:$0xf]
        %v5118 = vld [vmem:[%s5094 + $0x5c] sm:$0xf]
        %v5119 = vld [vmem:[%s5094 + $0x60] sm:$0xf]
        %v5120 = vld [vmem:[%s5094 + $0x64] sm:$0xf]
        %v5121 = vld [vmem:[%s5094 + $0x68] sm:$0xf]
        %v5122 = vld [vmem:[%s5094 + $0x6c] sm:$0xf]
        %v5123 = vld [vmem:[%s5094 + $0x70] sm:$0xf]
        %v5124 = vld [vmem:[%s5094 + $0x74] sm:$0xf]
        %v5125 = vld [vmem:[%s5094 + $0x78] sm:$0xf]
        %v5126 = vld [vmem:[%s5094 + $0x7c] sm:$0xf]
        %v5127 = vld [vmem:[%s5094 + $0x80] sm:$0xf]
        %v5128 = vld [vmem:[%s5094 + $0x84] sm:$0xf]
        %v5129 = vld [vmem:[%s5094 + $0x88] sm:$0xf]
        %v5130 = vld [vmem:[%s5094 + $0x8c] sm:$0xf]
        %s5131 = scalar_lea.vmem %s1, 24
        %v5132 = vld [vmem:[%s5131] sm:$0xf]
        %v5133 = vld [vmem:[%s5131 + $0x4] sm:$0xf]
        %v5134 = vld [vmem:[%s5131 + $0x8] sm:$0x1]
        %v5171 = vunpack.c.l.b16 %v5095
        %v5172 = vunpack.c.l.b16 %v5096
        %v5173 = vunpack.c.l.b16 %v5097
        %v5174 = vunpack.c.l.b16 %v5098
        %v5175 = vunpack.c.l.b16 %v5099
        %v5176 = vunpack.c.l.b16 %v5100
        %v5177 = vunpack.c.l.b16 %v5101
        %v5178 = vunpack.c.l.b16 %v5102
        %v5179 = vunpack.c.l.b16 %v5103
        %v5180 = vunpack.c.l.b16 %v5104
        %v5181 = vunpack.c.l.b16 %v5105
        %v5182 = vunpack.c.l.b16 %v5106
        %v5183 = vunpack.c.l.b16 %v5107
        %v5184 = vunpack.c.l.b16 %v5108
        %v5185 = vunpack.c.l.b16 %v5109
        %v5186 = vunpack.c.l.b16 %v5110
        %v5187 = vunpack.c.l.b16 %v5111
        %v5188 = vunpack.c.l.b16 %v5112
        %v5189 = vunpack.c.l.b16 %v5113
        %v5190 = vunpack.c.l.b16 %v5114
        %v5191 = vunpack.c.l.b16 %v5115
        %v5192 = vunpack.c.l.b16 %v5116
        %v5193 = vunpack.c.l.b16 %v5117
        %v5194 = vunpack.c.l.b16 %v5118
        %v5195 = vunpack.c.l.b16 %v5119
        %v5196 = vunpack.c.l.b16 %v5120
        %v5197 = vunpack.c.l.b16 %v5121
        %v5198 = vunpack.c.l.b16 %v5122
        %v5199 = vunpack.c.l.b16 %v5123
        %v5200 = vunpack.c.l.b16 %v5124
        %v5201 = vunpack.c.l.b16 %v5125
        %v5202 = vunpack.c.l.b16 %v5126
        %v5203 = vunpack.c.l.b16 %v5127
        %v5204 = vunpack.c.l.b16 %v5128
        %v5205 = vunpack.c.l.b16 %v5129
        %v5206 = vunpack.c.l.b16 %v5130
        %v5207 = vpack.c.b16 %v5172, %v5171
        %v5208 = vpack.c.b16 %v5174, %v5173
        %v5209 = vpack.c.b16 %v5176, %v5175
        %v5210 = vpack.c.b16 %v5178, %v5177
        %v5211 = vpack.c.b16 %v5180, %v5179
        %v5212 = vpack.c.b16 %v5182, %v5181
        %v5213 = vpack.c.b16 %v5184, %v5183
        %v5214 = vpack.c.b16 %v5186, %v5185
        %v5215 = vpack.c.b16 %v5188, %v5187
        %v5216 = vpack.c.b16 %v5190, %v5189
        %v5217 = vpack.c.b16 %v5192, %v5191
        %v5218 = vpack.c.b16 %v5194, %v5193
        %v5219 = vpack.c.b16 %v5196, %v5195
        %v5220 = vpack.c.b16 %v5198, %v5197
        %v5221 = vpack.c.b16 %v5200, %v5199
        %v5222 = vpack.c.b16 %v5202, %v5201
        %v5223 = vpack.c.b16 %v5204, %v5203
        %v5224 = vpack.c.b16 %v5206, %v5205
        %v5228 = vunpack.c.l.b16 %v5132
        %v5229 = vunpack.c.l.b16 %v5133
        %v5230 = vunpack.c.l.b16 %v5134
        %v5231 = vpack.c.b16 %v5229, %v5228
        %v5232 = vpack.c.b16 %v5230, %v5230
        %v5235 = vsel %vm4523, %v5207, 0
        %v5238 = vsel %vm4523, %v5208, 0
        %v5241 = vsel %vm4523, %v5209, 0
        %v5244 = vsel %vm4523, %v5210, 0
        %v5247 = vsel %vm4523, %v5211, 0
        %v5250 = vsel %vm4523, %v5212, 0
        %v5253 = vsel %vm4523, %v5213, 0
        %v5256 = vsel %vm4523, %v5214, 0
        %v5259 = vsel %vm4523, %v5215, 0
        %v5262 = vsel %vm4523, %v5216, 0
        %v5265 = vsel %vm4523, %v5217, 0
        %v5268 = vsel %vm4523, %v5218, 0
        %v5271 = vsel %vm4523, %v5219, 0
        %v5274 = vsel %vm4523, %v5220, 0
        %v5277 = vsel %vm4523, %v5221, 0
        %v5280 = vsel %vm4523, %v5222, 0
        %v5283 = vsel %vm4523, %v5223, 0
        %v5286 = vsel %vm4523, %v5224, 0
        %v5289 = vsel %vm4578, %v5232, 0
        %5291 = vmatprep.subr.bf16.mxu0 0
        %5292 = vmatpush1.bf16.msra.mxu0 0
        %5293 = vmatprep.subr.bf16.mxu0 0
        %5294 = vmatpush1.bf16.msra.mxu0 0
        %5295 = vmatprep.subr.bf16.mxu0 0
        %5296 = vmatpush1.bf16.msra.mxu0 0
        %5297 = vmatprep.subr.bf16.mxu0 0
        %5298 = vmatpush1.bf16.msra.mxu0 0
        %5299 = vmatprep.subr.bf16.mxu0 0
        %5300 = vmatpush1.bf16.msra.mxu0 0
        %5301 = vmatprep.subr.bf16.mxu0 0
        %5302 = vmatpush1.bf16.msra.mxu0 0
        %5303 = vmatprep.subr.bf16.mxu0 0
        %5304 = vmatpush1.bf16.msra.mxu0 %v5289
        %5305 = vmatprep.subr.bf16.mxu0 0
        %5306 = vmatpush1.bf16.msra.mxu0 %v5231
        %5307 = vmatprep.subr.bf16.mxu0 0
        %5308 = vmatpush2.bf16.msra.mxu0 0
        %5309 = vmatprep.subr.bf16.mxu0 0
        %5310 = vmatpush2.bf16.msra.mxu0 0
        %5311 = vmatprep.subr.bf16.mxu0 0
        %5312 = vmatpush2.bf16.msra.mxu0 0
        %5313 = vmatprep.subr.bf16.mxu0 0
        %5314 = vmatpush2.bf16.msra.mxu0 0
        %5315 = vmatprep.subr.bf16.mxu0 0
        %5316 = vmatpush2.bf16.msra.mxu0 0
        %5317 = vmatprep.subr.bf16.mxu0 0
        %5318 = vmatpush2.bf16.msra.mxu0 0
        %5319 = vmatprep.subr.bf16.mxu0 0
        %5320 = vmatpush2.bf16.msra.mxu0 0
        %5321 = vmatprep.subr.bf16.mxu0 0
        %5322 = vmatpush2.bf16.msra.mxu0 0
        %5323 = vmatprep.mubr.bf16.mxu0 0
        %5324 = vmatmul.mubr.bf16.gmra.mxu0 %v5235
        %v5325 = vpop.f32.mrf.mxu0
        %v5326 = vadd.f32 0.0, %v5325
        %v5327 = vpop.f32.mrf.mxu0
        %v5328 = vpop.f32.mrf.mxu0
        %v5329 = vadd.f32 0.0, %v5328
        %v5330 = vpop.f32.mrf.mxu0
        %5331 = vmatprep.mubr.bf16.mxu0 0
        %5332 = vmatmul.mubr.bf16.gmra.mxu0 %v5238
        %v5333 = vpop.f32.mrf.mxu0
        %v5334 = vadd.f32 0.0, %v5333
        %v5335 = vpop.f32.mrf.mxu0
        %v5336 = vpop.f32.mrf.mxu0
        %v5337 = vadd.f32 0.0, %v5336
        %v5338 = vpop.f32.mrf.mxu0
        %5339 = vmatprep.mubr.bf16.mxu0 0
        %5340 = vmatmul.mubr.bf16.gmra.mxu0 %v5241
        %v5341 = vpop.f32.mrf.mxu0
        %v5342 = vadd.f32 0.0, %v5341
        %v5343 = vpop.f32.mrf.mxu0
        %v5344 = vpop.f32.mrf.mxu0
        %v5345 = vadd.f32 0.0, %v5344
        %v5346 = vpop.f32.mrf.mxu0
        %5347 = vmatprep.mubr.bf16.mxu0 0
        %5348 = vmatmul.mubr.bf16.gmra.mxu0 %v5244
        %v5349 = vpop.f32.mrf.mxu0
        %v5350 = vadd.f32 0.0, %v5349
        %v5351 = vpop.f32.mrf.mxu0
        %v5352 = vpop.f32.mrf.mxu0
        %v5353 = vadd.f32 0.0, %v5352
        %v5354 = vpop.f32.mrf.mxu0
        %5355 = vmatprep.mubr.bf16.mxu0 0
        %5356 = vmatmul.mubr.bf16.gmra.mxu0 %v5247
        %v5357 = vpop.f32.mrf.mxu0
        %v5358 = vadd.f32 0.0, %v5357
        %v5359 = vpop.f32.mrf.mxu0
        %v5360 = vpop.f32.mrf.mxu0
        %v5361 = vadd.f32 0.0, %v5360
        %v5362 = vpop.f32.mrf.mxu0
        %5363 = vmatprep.mubr.bf16.mxu0 0
        %5364 = vmatmul.mubr.bf16.gmra.mxu0 %v5250
        %v5365 = vpop.f32.mrf.mxu0
        %v5366 = vadd.f32 0.0, %v5365
        %v5367 = vpop.f32.mrf.mxu0
        %v5368 = vpop.f32.mrf.mxu0
        %v5369 = vadd.f32 0.0, %v5368
        %v5370 = vpop.f32.mrf.mxu0
        %5371 = vmatprep.mubr.bf16.mxu0 0
        %5372 = vmatmul.mubr.bf16.gmra.mxu0 %v5253
        %v5373 = vpop.f32.mrf.mxu0
        %v5374 = vadd.f32 0.0, %v5373
        %v5375 = vpop.f32.mrf.mxu0
        %v5376 = vpop.f32.mrf.mxu0
        %v5377 = vadd.f32 0.0, %v5376
        %v5378 = vpop.f32.mrf.mxu0
        %5379 = vmatprep.mubr.bf16.mxu0 0
        %5380 = vmatmul.mubr.bf16.gmra.mxu0 %v5256
        %v5381 = vpop.f32.mrf.mxu0
        %v5382 = vadd.f32 0.0, %v5381
        %v5383 = vpop.f32.mrf.mxu0
        %v5384 = vpop.f32.mrf.mxu0
        %v5385 = vadd.f32 0.0, %v5384
        %v5386 = vpop.f32.mrf.mxu0
        %5387 = vmatprep.mubr.bf16.mxu0 0
        %5388 = vmatmul.mubr.bf16.gmra.mxu0 %v5259
        %v5389 = vpop.f32.mrf.mxu0
        %v5390 = vadd.f32 0.0, %v5389
        %v5391 = vpop.f32.mrf.mxu0
        %v5392 = vpop.f32.mrf.mxu0
        %v5393 = vadd.f32 0.0, %v5392
        %v5394 = vpop.f32.mrf.mxu0
        %5395 = vmatprep.mubr.bf16.mxu0 0
        %5396 = vmatmul.mubr.bf16.gmra.mxu0 %v5262
        %v5397 = vpop.f32.mrf.mxu0
        %v5398 = vadd.f32 0.0, %v5397
        %v5399 = vpop.f32.mrf.mxu0
        %v5400 = vpop.f32.mrf.mxu0
        %v5401 = vadd.f32 0.0, %v5400
        %v5402 = vpop.f32.mrf.mxu0
        %5403 = vmatprep.mubr.bf16.mxu0 0
        %5404 = vmatmul.mubr.bf16.gmra.mxu0 %v5265
        %v5405 = vpop.f32.mrf.mxu0
        %v5406 = vadd.f32 0.0, %v5405
        %v5407 = vpop.f32.mrf.mxu0
        %v5408 = vpop.f32.mrf.mxu0
        %v5409 = vadd.f32 0.0, %v5408
        %v5410 = vpop.f32.mrf.mxu0
        %5411 = vmatprep.mubr.bf16.mxu0 0
        %5412 = vmatmul.mubr.bf16.gmra.mxu0 %v5268
        %v5413 = vpop.f32.mrf.mxu0
        %v5414 = vadd.f32 0.0, %v5413
        %v5415 = vpop.f32.mrf.mxu0
        %v5416 = vpop.f32.mrf.mxu0
        %v5417 = vadd.f32 0.0, %v5416
        %v5418 = vpop.f32.mrf.mxu0
        %5419 = vmatprep.mubr.bf16.mxu0 0
        %5420 = vmatmul.mubr.bf16.gmra.mxu0 %v5271
        %v5421 = vpop.f32.mrf.mxu0
        %v5422 = vadd.f32 0.0, %v5421
        %v5423 = vpop.f32.mrf.mxu0
        %v5424 = vpop.f32.mrf.mxu0
        %v5425 = vadd.f32 0.0, %v5424
        %v5426 = vpop.f32.mrf.mxu0
        %5427 = vmatprep.mubr.bf16.mxu0 0
        %5428 = vmatmul.mubr.bf16.gmra.mxu0 %v5274
        %v5429 = vpop.f32.mrf.mxu0
        %v5430 = vadd.f32 0.0, %v5429
        %v5431 = vpop.f32.mrf.mxu0
        %v5432 = vpop.f32.mrf.mxu0
        %v5433 = vadd.f32 0.0, %v5432
        %v5434 = vpop.f32.mrf.mxu0
        %5435 = vmatprep.mubr.bf16.mxu0 0
        %5436 = vmatmul.mubr.bf16.gmra.mxu0 %v5277
        %v5437 = vpop.f32.mrf.mxu0
        %v5438 = vadd.f32 0.0, %v5437
        %v5439 = vpop.f32.mrf.mxu0
        %v5440 = vpop.f32.mrf.mxu0
        %v5441 = vadd.f32 0.0, %v5440
        %v5442 = vpop.f32.mrf.mxu0
        %5443 = vmatprep.mubr.bf16.mxu0 0
        %5444 = vmatmul.mubr.bf16.gmra.mxu0 %v5280
        %v5445 = vpop.f32.mrf.mxu0
        %v5446 = vadd.f32 0.0, %v5445
        %v5447 = vpop.f32.mrf.mxu0
        %v5448 = vpop.f32.mrf.mxu0
        %v5449 = vadd.f32 0.0, %v5448
        %v5450 = vpop.f32.mrf.mxu0
        %5451 = vmatprep.mubr.bf16.mxu0 0
        %5452 = vmatmul.mubr.bf16.gmra.mxu0 %v5283
        %v5453 = vpop.f32.mrf.mxu0
        %v5454 = vadd.f32 0.0, %v5453
        %v5455 = vpop.f32.mrf.mxu0
        %v5456 = vpop.f32.mrf.mxu0
        %v5457 = vadd.f32 0.0, %v5456
        %v5458 = vpop.f32.mrf.mxu0
        %5459 = vmatprep.mubr.bf16.mxu0 0
        %5460 = vmatmul.mubr.bf16.gmra.mxu0 %v5286
        %v5461 = vpop.f32.mrf.mxu0
        %v5462 = vadd.f32 0.0, %v5461
        %v5463 = vpop.f32.mrf.mxu0
        %v5464 = vpop.f32.mrf.mxu0
        %v5465 = vadd.f32 0.0, %v5464
        %v5466 = vpop.f32.mrf.mxu0
        %5467 = vdwg.mxu0
        %v5468 = vadd.f32 %v4950, %v5326
        %v5469 = vadd.f32 %v4953, %v5329
        %v5470 = vadd.f32 %v4958, %v5334
        %v5471 = vadd.f32 %v4961, %v5337
        %v5472 = vadd.f32 %v4966, %v5342
        %v5473 = vadd.f32 %v4969, %v5345
        %v5474 = vadd.f32 %v4974, %v5350
        %v5475 = vadd.f32 %v4977, %v5353
        %v5476 = vadd.f32 %v4982, %v5358
        %v5477 = vadd.f32 %v4985, %v5361
        %v5478 = vadd.f32 %v4990, %v5366
        %v5479 = vadd.f32 %v4993, %v5369
        %v5480 = vadd.f32 %v4998, %v5374
        %v5481 = vadd.f32 %v5001, %v5377
        %v5482 = vadd.f32 %v5006, %v5382
        %v5483 = vadd.f32 %v5009, %v5385
        %v5484 = vadd.f32 %v5014, %v5390
        %v5485 = vadd.f32 %v5017, %v5393
        %v5486 = vadd.f32 %v5022, %v5398
        %v5487 = vadd.f32 %v5025, %v5401
        %v5488 = vadd.f32 %v5030, %v5406
        %v5489 = vadd.f32 %v5033, %v5409
        %v5490 = vadd.f32 %v5038, %v5414
        %v5491 = vadd.f32 %v5041, %v5417
        %v5492 = vadd.f32 %v5046, %v5422
        %v5493 = vadd.f32 %v5049, %v5425
        %v5494 = vadd.f32 %v5054, %v5430
        %v5495 = vadd.f32 %v5057, %v5433
        %v5496 = vadd.f32 %v5062, %v5438
        %v5497 = vadd.f32 %v5065, %v5441
        %v5498 = vadd.f32 %v5070, %v5446
        %v5499 = vadd.f32 %v5073, %v5449
        %v5500 = vadd.f32 %v5078, %v5454
        %v5501 = vadd.f32 %v5081, %v5457
        %v5502 = vadd.f32 %v5086, %v5462
        %v5503 = vadd.f32 %v5089, %v5465
        %s5504 = smul.u32 %s2928, 288
        %s5505 = scalar_lea.vmem [#allocation3], %s5504
        %5506 = vst.msk [vmem:[%s5505] sm:$0xff] %vm1134, %v5468
        %5507 = vst.msk [vmem:[%s5505 + $0x8] sm:$0xff] %vm1134, %v5469
        %5508 = vst.msk [vmem:[%s5505 + $0x10] sm:$0xff] %vm1134, %v5470
        %5509 = vst.msk [vmem:[%s5505 + $0x18] sm:$0xff] %vm1134, %v5471
        %5510 = vst.msk [vmem:[%s5505 + $0x20] sm:$0xff] %vm1134, %v5472
        %5511 = vst.msk [vmem:[%s5505 + $0x28] sm:$0xff] %vm1134, %v5473
        %5512 = vst.msk [vmem:[%s5505 + $0x30] sm:$0xff] %vm1134, %v5474
        %5513 = vst.msk [vmem:[%s5505 + $0x38] sm:$0xff] %vm1134, %v5475
        %5514 = vst.msk [vmem:[%s5505 + $0x40] sm:$0xff] %vm1134, %v5476
        %5515 = vst.msk [vmem:[%s5505 + $0x48] sm:$0xff] %vm1134, %v5477
        %5516 = vst.msk [vmem:[%s5505 + $0x50] sm:$0xff] %vm1134, %v5478
        %5517 = vst.msk [vmem:[%s5505 + $0x58] sm:$0xff] %vm1134, %v5479
        %5518 = vst.msk [vmem:[%s5505 + $0x60] sm:$0xff] %vm1134, %v5480
        %5519 = vst.msk [vmem:[%s5505 + $0x68] sm:$0xff] %vm1134, %v5481
        %5520 = vst.msk [vmem:[%s5505 + $0x70] sm:$0xff] %vm1134, %v5482
        %5521 = vst.msk [vmem:[%s5505 + $0x78] sm:$0xff] %vm1134, %v5483
        %5522 = vst.msk [vmem:[%s5505 + $0x80] sm:$0xff] %vm1134, %v5484
        %5523 = vst.msk [vmem:[%s5505 + $0x88] sm:$0xff] %vm1134, %v5485
        %5524 = vst.msk [vmem:[%s5505 + $0x90] sm:$0xff] %vm1134, %v5486
        %5525 = vst.msk [vmem:[%s5505 + $0x98] sm:$0xff] %vm1134, %v5487
        %5526 = vst.msk [vmem:[%s5505 + $0xa0] sm:$0xff] %vm1134, %v5488
        %5527 = vst.msk [vmem:[%s5505 + $0xa8] sm:$0xff] %vm1134, %v5489
        %5528 = vst.msk [vmem:[%s5505 + $0xb0] sm:$0xff] %vm1134, %v5490
        %5529 = vst.msk [vmem:[%s5505 + $0xb8] sm:$0xff] %vm1134, %v5491
        %5530 = vst.msk [vmem:[%s5505 + $0xc0] sm:$0xff] %vm1134, %v5492
        %5531 = vst.msk [vmem:[%s5505 + $0xc8] sm:$0xff] %vm1134, %v5493
        %5532 = vst.msk [vmem:[%s5505 + $0xd0] sm:$0xff] %vm1134, %v5494
        %5533 = vst.msk [vmem:[%s5505 + $0xd8] sm:$0xff] %vm1134, %v5495
        %5534 = vst.msk [vmem:[%s5505 + $0xe0] sm:$0xff] %vm1134, %v5496
        %5535 = vst.msk [vmem:[%s5505 + $0xe8] sm:$0xff] %vm1134, %v5497
        %5536 = vst.msk [vmem:[%s5505 + $0xf0] sm:$0xff] %vm1134, %v5498
        %5537 = vst.msk [vmem:[%s5505 + $0xf8] sm:$0xff] %vm1134, %v5499
        %5538 = vst.msk [vmem:[%s5505 + $0x100] sm:$0xff] %vm1134, %v5500
        %5539 = vst.msk [vmem:[%s5505 + $0x108] sm:$0xff] %vm1134, %v5501
        %5540 = vst.msk [vmem:[%s5505 + $0x110] sm:$0xff] %vm1134, %v5502
        %5541 = vst.msk [vmem:[%s5505 + $0x118] sm:$0xff] %vm1134, %v5503
        %v5542 = vld [vmem:[%s2] sm:$0xff]
        %v5543 = vld [vmem:[%s2 + $0x8] sm:$0xff]
        %v5544 = vld [vmem:[%s2 + $0x10] sm:$0xff]
        %v5545 = vld [vmem:[%s2 + $0x18] sm:$0xff]
        %v5546 = vld [vmem:[%s2 + $0x20] sm:$0xff]
        %v5547 = vld [vmem:[%s2 + $0x28] sm:$0xff]
        %v5548 = vld [vmem:[%s2 + $0x30] sm:$0xff]
        %v5549 = vld [vmem:[%s2 + $0x38] sm:$0xff]
        %v5550 = vld [vmem:[%s2 + $0x40] sm:$0xff]
        %v5551 = vld [vmem:[%s2 + $0x48] sm:$0xff]
        %v5552 = vld [vmem:[%s2 + $0x50] sm:$0xff]
        %v5553 = vld [vmem:[%s2 + $0x58] sm:$0xff]
        %v5554 = vld [vmem:[%s2 + $0x60] sm:$0xff]
        %v5555 = vld [vmem:[%s2 + $0x68] sm:$0xff]
        %v5556 = vld [vmem:[%s2 + $0x70] sm:$0xff]
        %v5557 = vld [vmem:[%s2 + $0x78] sm:$0xff]
        %v5558 = vld [vmem:[%s2 + $0x80] sm:$0xff]
        %v5559 = vld [vmem:[%s2 + $0x88] sm:$0xff]
        %v5560 = vld [vmem:[%s2 + $0x90] sm:$0xff]
        %v5561 = vld [vmem:[%s2 + $0x98] sm:$0xff]
        %v5562 = vld [vmem:[%s2 + $0xa0] sm:$0xff]
        %v5563 = vld [vmem:[%s2 + $0xa8] sm:$0xff]
        %v5564 = vld [vmem:[%s2 + $0xb0] sm:$0xff]
        %v5565 = vld [vmem:[%s2 + $0xb8] sm:$0xff]
        %v5566 = vld [vmem:[%s2 + $0xc0] sm:$0xff]
        %v5567 = vld [vmem:[%s2 + $0xc8] sm:$0xff]
        %v5568 = vld [vmem:[%s2 + $0xd0] sm:$0xff]
        %v5569 = vld [vmem:[%s2 + $0xd8] sm:$0xff]
        %v5570 = vld [vmem:[%s2 + $0xe0] sm:$0xff]
        %v5571 = vld [vmem:[%s2 + $0xe8] sm:$0xff]
        %v5572 = vld [vmem:[%s2 + $0xf0] sm:$0xff]
        %v5573 = vld [vmem:[%s2 + $0xf8] sm:$0xff]
        %v5574 = vld [vmem:[%s2 + $0x100] sm:$0xff]
        %v5575 = vld [vmem:[%s2 + $0x108] sm:$0xff]
        %v5576 = vld [vmem:[%s2 + $0x110] sm:$0xff]
        %v5577 = vld [vmem:[%s2 + $0x118] sm:$0xff]
        %5579 = vset.pattern.permute.xlu0 0
        %5580 = vperm.xlu0 %5579, %v5542
        %v5581 = vpop.permute.xlu0 %5580
        %5584 = vset.pattern.permute.xlu0 0
        %5585 = vperm.xlu0 %5584, %v5543
        %v5586 = vpop.permute.xlu0 %5585
        %5589 = vset.pattern.permute.xlu0 0
        %5590 = vperm.xlu0 %5589, %v5544
        %v5591 = vpop.permute.xlu0 %5590
        %5594 = vset.pattern.permute.xlu0 0
        %5595 = vperm.xlu0 %5594, %v5545
        %v5596 = vpop.permute.xlu0 %5595
        %5599 = vset.pattern.permute.xlu0 0
        %5600 = vperm.xlu0 %5599, %v5546
        %v5601 = vpop.permute.xlu0 %5600
        %5604 = vset.pattern.permute.xlu0 0
        %5605 = vperm.xlu0 %5604, %v5547
        %v5606 = vpop.permute.xlu0 %5605
        %5609 = vset.pattern.permute.xlu0 0
        %5610 = vperm.xlu0 %5609, %v5548
        %v5611 = vpop.permute.xlu0 %5610
        %5614 = vset.pattern.permute.xlu0 0
        %5615 = vperm.xlu0 %5614, %v5549
        %v5616 = vpop.permute.xlu0 %5615
        %5619 = vset.pattern.permute.xlu0 0
        %5620 = vperm.xlu0 %5619, %v5550
        %v5621 = vpop.permute.xlu0 %5620
        %5624 = vset.pattern.permute.xlu0 0
        %5625 = vperm.xlu0 %5624, %v5551
        %v5626 = vpop.permute.xlu0 %5625
        %5629 = vset.pattern.permute.xlu0 0
        %5630 = vperm.xlu0 %5629, %v5552
        %v5631 = vpop.permute.xlu0 %5630
        %5634 = vset.pattern.permute.xlu0 0
        %5635 = vperm.xlu0 %5634, %v5553
        %v5636 = vpop.permute.xlu0 %5635
        %5639 = vset.pattern.permute.xlu0 0
        %5640 = vperm.xlu0 %5639, %v5554
        %v5641 = vpop.permute.xlu0 %5640
        %5644 = vset.pattern.permute.xlu0 0
        %5645 = vperm.xlu0 %5644, %v5555
        %v5646 = vpop.permute.xlu0 %5645
        %5649 = vset.pattern.permute.xlu0 0
        %5650 = vperm.xlu0 %5649, %v5556
        %v5651 = vpop.permute.xlu0 %5650
        %5654 = vset.pattern.permute.xlu0 0
        %5655 = vperm.xlu0 %5654, %v5557
        %v5656 = vpop.permute.xlu0 %5655
        %5659 = vset.pattern.permute.xlu0 0
        %5660 = vperm.xlu0 %5659, %v5558
        %v5661 = vpop.permute.xlu0 %5660
        %5664 = vset.pattern.permute.xlu0 0
        %5665 = vperm.xlu0 %5664, %v5559
        %v5666 = vpop.permute.xlu0 %5665
        %5669 = vset.pattern.permute.xlu0 0
        %5670 = vperm.xlu0 %5669, %v5560
        %v5671 = vpop.permute.xlu0 %5670
        %5674 = vset.pattern.permute.xlu0 0
        %5675 = vperm.xlu0 %5674, %v5561
        %v5676 = vpop.permute.xlu0 %5675
        %5679 = vset.pattern.permute.xlu0 0
        %5680 = vperm.xlu0 %5679, %v5562
        %v5681 = vpop.permute.xlu0 %5680
        %5684 = vset.pattern.permute.xlu0 0
        %5685 = vperm.xlu0 %5684, %v5563
        %v5686 = vpop.permute.xlu0 %5685
        %5689 = vset.pattern.permute.xlu0 0
        %5690 = vperm.xlu0 %5689, %v5564
        %v5691 = vpop.permute.xlu0 %5690
        %5694 = vset.pattern.permute.xlu0 0
        %5695 = vperm.xlu0 %5694, %v5565
        %v5696 = vpop.permute.xlu0 %5695
        %5699 = vset.pattern.permute.xlu0 0
        %5700 = vperm.xlu0 %5699, %v5566
        %v5701 = vpop.permute.xlu0 %5700
        %5704 = vset.pattern.permute.xlu0 0
        %5705 = vperm.xlu0 %5704, %v5567
        %v5706 = vpop.permute.xlu0 %5705
        %5709 = vset.pattern.permute.xlu0 0
        %5710 = vperm.xlu0 %5709, %v5568
        %v5711 = vpop.permute.xlu0 %5710
        %5714 = vset.pattern.permute.xlu0 0
        %5715 = vperm.xlu0 %5714, %v5569
        %v5716 = vpop.permute.xlu0 %5715
        %5719 = vset.pattern.permute.xlu0 0
        %5720 = vperm.xlu0 %5719, %v5570
        %v5721 = vpop.permute.xlu0 %5720
        %5724 = vset.pattern.permute.xlu0 0
        %5725 = vperm.xlu0 %5724, %v5571
        %v5726 = vpop.permute.xlu0 %5725
        %5729 = vset.pattern.permute.xlu0 0
        %5730 = vperm.xlu0 %5729, %v5572
        %v5731 = vpop.permute.xlu0 %5730
        %5734 = vset.pattern.permute.xlu0 0
        %5735 = vperm.xlu0 %5734, %v5573
        %v5736 = vpop.permute.xlu0 %5735
        %5739 = vset.pattern.permute.xlu0 0
        %5740 = vperm.xlu0 %5739, %v5574
        %v5741 = vpop.permute.xlu0 %5740
        %5744 = vset.pattern.permute.xlu0 0
        %5745 = vperm.xlu0 %5744, %v5575
        %v5746 = vpop.permute.xlu0 %5745
        %5749 = vset.pattern.permute.xlu0 0
        %5750 = vperm.xlu0 %5749, %v5576
        %v5751 = vpop.permute.xlu0 %5750
        %5754 = vset.pattern.permute.xlu0 0
        %5755 = vperm.xlu0 %5754, %v5577
        %v5756 = vpop.permute.xlu0 %5755
        %v5758 = vmul.f32 %v5468, %v5581
        %v5759 = vmul.f32 %v5469, %v5586
        %v5760 = vmul.f32 %v5470, %v5591
        %v5761 = vmul.f32 %v5471, %v5596
        %v5762 = vmul.f32 %v5472, %v5601
        %v5763 = vmul.f32 %v5473, %v5606
        %v5764 = vmul.f32 %v5474, %v5611
        %v5765 = vmul.f32 %v5475, %v5616
        %v5766 = vmul.f32 %v5476, %v5621
        %v5767 = vmul.f32 %v5477, %v5626
        %v5768 = vmul.f32 %v5478, %v5631
        %v5769 = vmul.f32 %v5479, %v5636
        %v5770 = vmul.f32 %v5480, %v5641
        %v5771 = vmul.f32 %v5481, %v5646
        %v5772 = vmul.f32 %v5482, %v5651
        %v5773 = vmul.f32 %v5483, %v5656
        %v5774 = vmul.f32 %v5484, %v5661
        %v5775 = vmul.f32 %v5485, %v5666
        %v5776 = vmul.f32 %v5486, %v5671
        %v5777 = vmul.f32 %v5487, %v5676
        %v5778 = vmul.f32 %v5488, %v5681
        %v5779 = vmul.f32 %v5489, %v5686
        %v5780 = vmul.f32 %v5490, %v5691
        %v5781 = vmul.f32 %v5491, %v5696
        %v5782 = vmul.f32 %v5492, %v5701
        %v5783 = vmul.f32 %v5493, %v5706
        %v5784 = vmul.f32 %v5494, %v5711
        %v5785 = vmul.f32 %v5495, %v5716
        %v5786 = vmul.f32 %v5496, %v5721
        %v5787 = vmul.f32 %v5497, %v5726
        %v5788 = vmul.f32 %v5498, %v5731
        %v5789 = vmul.f32 %v5499, %v5736
        %v5790 = vmul.f32 %v5500, %v5741
        %v5791 = vmul.f32 %v5501, %v5746
        %v5792 = vmul.f32 %v5502, %v5751
        %v5793 = vmul.f32 %v5503, %v5756
        %v5794 = vsel %vm1134, %v5758, 0.0
        %v5795 = vsel %vm1134, %v5759, 0.0
        %v5796 = vadd.f32 %v5794, %v5795
        %v5797 = vsel %vm1134, %v5760, 0.0
        %v5798 = vadd.f32 %v5796, %v5797
        %v5799 = vsel %vm1134, %v5761, 0.0
        %v5800 = vadd.f32 %v5798, %v5799
        %v5801 = vsel %vm1134, %v5762, 0.0
        %v5802 = vadd.f32 %v5800, %v5801
        %v5803 = vsel %vm1134, %v5763, 0.0
        %v5804 = vadd.f32 %v5802, %v5803
        %v5805 = vsel %vm1134, %v5764, 0.0
        %v5806 = vadd.f32 %v5804, %v5805
        %v5807 = vsel %vm1134, %v5765, 0.0
        %v5808 = vadd.f32 %v5806, %v5807
        %v5809 = vsel %vm1134, %v5766, 0.0
        %v5810 = vadd.f32 %v5808, %v5809
        %v5811 = vsel %vm1134, %v5767, 0.0
        %v5812 = vadd.f32 %v5810, %v5811
        %v5813 = vsel %vm1134, %v5768, 0.0
        %v5814 = vadd.f32 %v5812, %v5813
        %v5815 = vsel %vm1134, %v5769, 0.0
        %v5816 = vadd.f32 %v5814, %v5815
        %v5817 = vsel %vm1134, %v5770, 0.0
        %v5818 = vadd.f32 %v5816, %v5817
        %v5819 = vsel %vm1134, %v5771, 0.0
        %v5820 = vadd.f32 %v5818, %v5819
        %v5821 = vsel %vm1134, %v5772, 0.0
        %v5822 = vadd.f32 %v5820, %v5821
        %v5823 = vsel %vm1134, %v5773, 0.0
        %v5824 = vadd.f32 %v5822, %v5823
        %v5825 = vsel %vm1134, %v5774, 0.0
        %v5826 = vadd.f32 %v5824, %v5825
        %v5827 = vsel %vm1134, %v5775, 0.0
        %v5828 = vadd.f32 %v5826, %v5827
        %v5829 = vsel %vm1134, %v5776, 0.0
        %v5830 = vadd.f32 %v5828, %v5829
        %v5831 = vsel %vm1134, %v5777, 0.0
        %v5832 = vadd.f32 %v5830, %v5831
        %v5833 = vsel %vm1134, %v5778, 0.0
        %v5834 = vadd.f32 %v5832, %v5833
        %v5835 = vsel %vm1134, %v5779, 0.0
        %v5836 = vadd.f32 %v5834, %v5835
        %v5837 = vsel %vm1134, %v5780, 0.0
        %v5838 = vadd.f32 %v5836, %v5837
        %v5839 = vsel %vm1134, %v5781, 0.0
        %v5840 = vadd.f32 %v5838, %v5839
        %v5841 = vsel %vm1134, %v5782, 0.0
        %v5842 = vadd.f32 %v5840, %v5841
        %v5843 = vsel %vm1134, %v5783, 0.0
        %v5844 = vadd.f32 %v5842, %v5843
        %v5845 = vsel %vm1134, %v5784, 0.0
        %v5846 = vadd.f32 %v5844, %v5845
        %v5847 = vsel %vm1134, %v5785, 0.0
        %v5848 = vadd.f32 %v5846, %v5847
        %v5849 = vsel %vm1134, %v5786, 0.0
        %v5850 = vadd.f32 %v5848, %v5849
        %v5851 = vsel %vm1134, %v5787, 0.0
        %v5852 = vadd.f32 %v5850, %v5851
        %v5853 = vsel %vm1134, %v5788, 0.0
        %v5854 = vadd.f32 %v5852, %v5853
        %v5855 = vsel %vm1134, %v5789, 0.0
        %v5856 = vadd.f32 %v5854, %v5855
        %v5857 = vsel %vm1134, %v5790, 0.0
        %v5858 = vadd.f32 %v5856, %v5857
        %v5859 = vsel %vm1134, %v5791, 0.0
        %v5860 = vadd.f32 %v5858, %v5859
        %v5861 = vsel %vm1134, %v5792, 0.0
        %v5862 = vadd.f32 %v5860, %v5861
        %v5863 = vsel %vm1134, %v5793, 0.0
        %v5864 = vadd.f32 %v5862, %v5863
        %v5865 = vrot.slane %v5864, 4
        %v5866 = vadd.f32 %v5864, %v5865
        %v5867 = vrot.slane %v5866, 2
        %v5868 = vadd.f32 %v5866, %v5867
        %v5869 = vrot.slane %v5868, 1
        %v5870 = vadd.f32 %v5868, %v5869
        %v5871 = vadd.f32 %v2933, %v5870
        %v5872 = vmul.f32 %v5758, %v5468
        %v5873 = vmul.f32 %v5759, %v5469
        %v5874 = vmul.f32 %v5760, %v5470
        %v5875 = vmul.f32 %v5761, %v5471
        %v5876 = vmul.f32 %v5762, %v5472
        %v5877 = vmul.f32 %v5763, %v5473
        %v5878 = vmul.f32 %v5764, %v5474
        %v5879 = vmul.f32 %v5765, %v5475
        %v5880 = vmul.f32 %v5766, %v5476
        %v5881 = vmul.f32 %v5767, %v5477
        %v5882 = vmul.f32 %v5768, %v5478
        %v5883 = vmul.f32 %v5769, %v5479
        %v5884 = vmul.f32 %v5770, %v5480
        %v5885 = vmul.f32 %v5771, %v5481
        %v5886 = vmul.f32 %v5772, %v5482
        %v5887 = vmul.f32 %v5773, %v5483
        %v5888 = vmul.f32 %v5774, %v5484
        %v5889 = vmul.f32 %v5775, %v5485
        %v5890 = vmul.f32 %v5776, %v5486
        %v5891 = vmul.f32 %v5777, %v5487
        %v5892 = vmul.f32 %v5778, %v5488
        %v5893 = vmul.f32 %v5779, %v5489
        %v5894 = vmul.f32 %v5780, %v5490
        %v5895 = vmul.f32 %v5781, %v5491
        %v5896 = vmul.f32 %v5782, %v5492
        %v5897 = vmul.f32 %v5783, %v5493
        %v5898 = vmul.f32 %v5784, %v5494
        %v5899 = vmul.f32 %v5785, %v5495
        %v5900 = vmul.f32 %v5786, %v5496
        %v5901 = vmul.f32 %v5787, %v5497
        %v5902 = vmul.f32 %v5788, %v5498
        %v5903 = vmul.f32 %v5789, %v5499
        %v5904 = vmul.f32 %v5790, %v5500
        %v5905 = vmul.f32 %v5791, %v5501
        %v5906 = vmul.f32 %v5792, %v5502
        %v5907 = vmul.f32 %v5793, %v5503
        %v5908 = vsel %vm1134, %v5872, 0.0
        %v5909 = vsel %vm1134, %v5873, 0.0
        %v5910 = vadd.f32 %v5908, %v5909
        %v5911 = vsel %vm1134, %v5874, 0.0
        %v5912 = vadd.f32 %v5910, %v5911
        %v5913 = vsel %vm1134, %v5875, 0.0
        %v5914 = vadd.f32 %v5912, %v5913
        %v5915 = vsel %vm1134, %v5876, 0.0
        %v5916 = vadd.f32 %v5914, %v5915
        %v5917 = vsel %vm1134, %v5877, 0.0
        %v5918 = vadd.f32 %v5916, %v5917
        %v5919 = vsel %vm1134, %v5878, 0.0
        %v5920 = vadd.f32 %v5918, %v5919
        %v5921 = vsel %vm1134, %v5879, 0.0
        %v5922 = vadd.f32 %v5920, %v5921
        %v5923 = vsel %vm1134, %v5880, 0.0
        %v5924 = vadd.f32 %v5922, %v5923
        %v5925 = vsel %vm1134, %v5881, 0.0
        %v5926 = vadd.f32 %v5924, %v5925
        %v5927 = vsel %vm1134, %v5882, 0.0
        %v5928 = vadd.f32 %v5926, %v5927
        %v5929 = vsel %vm1134, %v5883, 0.0
        %v5930 = vadd.f32 %v5928, %v5929
        %v5931 = vsel %vm1134, %v5884, 0.0
        %v5932 = vadd.f32 %v5930, %v5931
        %v5933 = vsel %vm1134, %v5885, 0.0
        %v5934 = vadd.f32 %v5932, %v5933
        %v5935 = vsel %vm1134, %v5886, 0.0
        %v5936 = vadd.f32 %v5934, %v5935
        %v5937 = vsel %vm1134, %v5887, 0.0
        %v5938 = vadd.f32 %v5936, %v5937
        %v5939 = vsel %vm1134, %v5888, 0.0
        %v5940 = vadd.f32 %v5938, %v5939
        %v5941 = vsel %vm1134, %v5889, 0.0
        %v5942 = vadd.f32 %v5940, %v5941
        %v5943 = vsel %vm1134, %v5890, 0.0
        %v5944 = vadd.f32 %v5942, %v5943
        %v5945 = vsel %vm1134, %v5891, 0.0
        %v5946 = vadd.f32 %v5944, %v5945
        %v5947 = vsel %vm1134, %v5892, 0.0
        %v5948 = vadd.f32 %v5946, %v5947
        %v5949 = vsel %vm1134, %v5893, 0.0
        %v5950 = vadd.f32 %v5948, %v5949
        %v5951 = vsel %vm1134, %v5894, 0.0
        %v5952 = vadd.f32 %v5950, %v5951
        %v5953 = vsel %vm1134, %v5895, 0.0
        %v5954 = vadd.f32 %v5952, %v5953
        %v5955 = vsel %vm1134, %v5896, 0.0
        %v5956 = vadd.f32 %v5954, %v5955
        %v5957 = vsel %vm1134, %v5897, 0.0
        %v5958 = vadd.f32 %v5956, %v5957
        %v5959 = vsel %vm1134, %v5898, 0.0
        %v5960 = vadd.f32 %v5958, %v5959
        %v5961 = vsel %vm1134, %v5899, 0.0
        %v5962 = vadd.f32 %v5960, %v5961
        %v5963 = vsel %vm1134, %v5900, 0.0
        %v5964 = vadd.f32 %v5962, %v5963
        %v5965 = vsel %vm1134, %v5901, 0.0
        %v5966 = vadd.f32 %v5964, %v5965
        %v5967 = vsel %vm1134, %v5902, 0.0
        %v5968 = vadd.f32 %v5966, %v5967
        %v5969 = vsel %vm1134, %v5903, 0.0
        %v5970 = vadd.f32 %v5968, %v5969
        %v5971 = vsel %vm1134, %v5904, 0.0
        %v5972 = vadd.f32 %v5970, %v5971
        %v5973 = vsel %vm1134, %v5905, 0.0
        %v5974 = vadd.f32 %v5972, %v5973
        %v5975 = vsel %vm1134, %v5906, 0.0
        %v5976 = vadd.f32 %v5974, %v5975
        %v5977 = vsel %vm1134, %v5907, 0.0
        %v5978 = vadd.f32 %v5976, %v5977
        %v5979 = vrot.slane %v5978, 4
        %v5980 = vadd.f32 %v5978, %v5979
        %v5981 = vrot.slane %v5980, 2
        %v5982 = vadd.f32 %v5980, %v5981
        %v5983 = vrot.slane %v5982, 1
        %v5984 = vadd.f32 %v5982, %v5983
        %v5985 = vadd.f32 %v2934, %v5984
      $region37: #{tpu_custom_call.1} parent=31 // loop_footer
        %s2932 = sadd.s32 1, %s2928
      $region38: #{tpu_custom_call.1} parent=31 // loop_footer_branch
        %2927 = sbr.rel target = $region34
      $region39: #{tpu_custom_call.1} parent=31 // loop_exit
        _
      %v5986 = vmul.f32 %v2933, 0.00024414063
      %v5987 = vmul.f32 %v2934, 0.00024414063
      %v5988 = vmul.f32 %v5986, %v5986
      %v5989 = vsub.f32 %v5987, %v5988
      %v5990 = vmax.f32 %v5989, 0.0
      %v5991 = vadd.f32 %v5990, 1e-05
      %v5992 = vrsqrt.pop %v5991
      loop: start=0, step=1, limit=16
      $region40: #{tpu_custom_call.1} parent=31 // loop_pre_header
        _
      $region41: #{tpu_custom_call.1} parent=31 // loop_header
        %s5994 = sphi 0, %s5998
        %p5995 = scmp.ge.s32.totalorder %s5994, 16
      $region42: #{tpu_custom_call.1} parent=31 // loop_header_branch
        %5997 = sbr.rel (%p5995) target = $region46
      $region43: #{tpu_custom_call.1} parent=31 // loop_body
        %s5999 = smul.u32 %s5994, 288
        %s6000 = scalar_lea.vmem [#allocation3], %s5999
        %v6001 = vld [vmem:[%s6000] sm:$0xff]
        %v6002 = vld [vmem:[%s6000 + $0x8] sm:$0xff]
        %v6003 = vld [vmem:[%s6000 + $0x10] sm:$0xff]
        %v6004 = vld [vmem:[%s6000 + $0x18] sm:$0xff]
        %v6005 = vld [vmem:[%s6000 + $0x20] sm:$0xff]
        %v6006 = vld [vmem:[%s6000 + $0x28] sm:$0xff]
        %v6007 = vld [vmem:[%s6000 + $0x30] sm:$0xff]
        %v6008 = vld [vmem:[%s6000 + $0x38] sm:$0xff]
        %v6009 = vld [vmem:[%s6000 + $0x40] sm:$0xff]
        %v6010 = vld [vmem:[%s6000 + $0x48] sm:$0xff]
        %v6011 = vld [vmem:[%s6000 + $0x50] sm:$0xff]
        %v6012 = vld [vmem:[%s6000 + $0x58] sm:$0xff]
        %v6013 = vld [vmem:[%s6000 + $0x60] sm:$0xff]
        %v6014 = vld [vmem:[%s6000 + $0x68] sm:$0xff]
        %v6015 = vld [vmem:[%s6000 + $0x70] sm:$0xff]
        %v6016 = vld [vmem:[%s6000 + $0x78] sm:$0xff]
        %v6017 = vld [vmem:[%s6000 + $0x80] sm:$0xff]
        %v6018 = vld [vmem:[%s6000 + $0x88] sm:$0xff]
        %v6019 = vld [vmem:[%s6000 + $0x90] sm:$0xff]
        %v6020 = vld [vmem:[%s6000 + $0x98] sm:$0xff]
        %v6021 = vld [vmem:[%s6000 + $0xa0] sm:$0xff]
        %v6022 = vld [vmem:[%s6000 + $0xa8] sm:$0xff]
        %v6023 = vld [vmem:[%s6000 + $0xb0] sm:$0xff]
        %v6024 = vld [vmem:[%s6000 + $0xb8] sm:$0xff]
        %v6025 = vld [vmem:[%s6000 + $0xc0] sm:$0xff]
        %v6026 = vld [vmem:[%s6000 + $0xc8] sm:$0xff]
        %v6027 = vld [vmem:[%s6000 + $0xd0] sm:$0xff]
        %v6028 = vld [vmem:[%s6000 + $0xd8] sm:$0xff]
        %v6029 = vld [vmem:[%s6000 + $0xe0] sm:$0xff]
        %v6030 = vld [vmem:[%s6000 + $0xe8] sm:$0xff]
        %v6031 = vld [vmem:[%s6000 + $0xf0] sm:$0xff]
        %v6032 = vld [vmem:[%s6000 + $0xf8] sm:$0xff]
        %v6033 = vld [vmem:[%s6000 + $0x100] sm:$0xff]
        %v6034 = vld [vmem:[%s6000 + $0x108] sm:$0xff]
        %v6035 = vld [vmem:[%s6000 + $0x110] sm:$0xff]
        %v6036 = vld [vmem:[%s6000 + $0x118] sm:$0xff]
        %v6037 = vsub.f32 %v6001, %v5986
        %v6038 = vsub.f32 %v6002, %v5986
        %v6039 = vsub.f32 %v6003, %v5986
        %v6040 = vsub.f32 %v6004, %v5986
        %v6041 = vsub.f32 %v6005, %v5986
        %v6042 = vsub.f32 %v6006, %v5986
        %v6043 = vsub.f32 %v6007, %v5986
        %v6044 = vsub.f32 %v6008, %v5986
        %v6045 = vsub.f32 %v6009, %v5986
        %v6046 = vsub.f32 %v6010, %v5986
        %v6047 = vsub.f32 %v6011, %v5986
        %v6048 = vsub.f32 %v6012, %v5986
        %v6049 = vsub.f32 %v6013, %v5986
        %v6050 = vsub.f32 %v6014, %v5986
        %v6051 = vsub.f32 %v6015, %v5986
        %v6052 = vsub.f32 %v6016, %v5986
        %v6053 = vsub.f32 %v6017, %v5986
        %v6054 = vsub.f32 %v6018, %v5986
        %v6055 = vsub.f32 %v6019, %v5986
        %v6056 = vsub.f32 %v6020, %v5986
        %v6057 = vsub.f32 %v6021, %v5986
        %v6058 = vsub.f32 %v6022, %v5986
        %v6059 = vsub.f32 %v6023, %v5986
        %v6060 = vsub.f32 %v6024, %v5986
        %v6061 = vsub.f32 %v6025, %v5986
        %v6062 = vsub.f32 %v6026, %v5986
        %v6063 = vsub.f32 %v6027, %v5986
        %v6064 = vsub.f32 %v6028, %v5986
        %v6065 = vsub.f32 %v6029, %v5986
        %v6066 = vsub.f32 %v6030, %v5986
        %v6067 = vsub.f32 %v6031, %v5986
        %v6068 = vsub.f32 %v6032, %v5986
        %v6069 = vsub.f32 %v6033, %v5986
        %v6070 = vsub.f32 %v6034, %v5986
        %v6071 = vsub.f32 %v6035, %v5986
        %v6072 = vsub.f32 %v6036, %v5986
        %v6073 = vmul.f32 %v6037, %v5992
        %v6074 = vmul.f32 %v6038, %v5992
        %v6075 = vmul.f32 %v6039, %v5992
        %v6076 = vmul.f32 %v6040, %v5992
        %v6077 = vmul.f32 %v6041, %v5992
        %v6078 = vmul.f32 %v6042, %v5992
        %v6079 = vmul.f32 %v6043, %v5992
        %v6080 = vmul.f32 %v6044, %v5992
        %v6081 = vmul.f32 %v6045, %v5992
        %v6082 = vmul.f32 %v6046, %v5992
        %v6083 = vmul.f32 %v6047, %v5992
        %v6084 = vmul.f32 %v6048, %v5992
        %v6085 = vmul.f32 %v6049, %v5992
        %v6086 = vmul.f32 %v6050, %v5992
        %v6087 = vmul.f32 %v6051, %v5992
        %v6088 = vmul.f32 %v6052, %v5992
        %v6089 = vmul.f32 %v6053, %v5992
        %v6090 = vmul.f32 %v6054, %v5992
        %v6091 = vmul.f32 %v6055, %v5992
        %v6092 = vmul.f32 %v6056, %v5992
        %v6093 = vmul.f32 %v6057, %v5992
        %v6094 = vmul.f32 %v6058, %v5992
        %v6095 = vmul.f32 %v6059, %v5992
        %v6096 = vmul.f32 %v6060, %v5992
        %v6097 = vmul.f32 %v6061, %v5992
        %v6098 = vmul.f32 %v6062, %v5992
        %v6099 = vmul.f32 %v6063, %v5992
        %v6100 = vmul.f32 %v6064, %v5992
        %v6101 = vmul.f32 %v6065, %v5992
        %v6102 = vmul.f32 %v6066, %v5992
        %v6103 = vmul.f32 %v6067, %v5992
        %v6104 = vmul.f32 %v6068, %v5992
        %v6105 = vmul.f32 %v6069, %v5992
        %v6106 = vmul.f32 %v6070, %v5992
        %v6107 = vmul.f32 %v6071, %v5992
        %v6108 = vmul.f32 %v6072, %v5992
        %vm6109 = vcmp.ge.f32.partialorder %v6073, 0.0
        %vm6110 = vcmp.ge.f32.partialorder %v6074, 0.0
        %vm6111 = vcmp.ge.f32.partialorder %v6075, 0.0
        %vm6112 = vcmp.ge.f32.partialorder %v6076, 0.0
        %vm6113 = vcmp.ge.f32.partialorder %v6077, 0.0
        %vm6114 = vcmp.ge.f32.partialorder %v6078, 0.0
        %vm6115 = vcmp.ge.f32.partialorder %v6079, 0.0
        %vm6116 = vcmp.ge.f32.partialorder %v6080, 0.0
        %vm6117 = vcmp.ge.f32.partialorder %v6081, 0.0
        %vm6118 = vcmp.ge.f32.partialorder %v6082, 0.0
        %vm6119 = vcmp.ge.f32.partialorder %v6083, 0.0
        %vm6120 = vcmp.ge.f32.partialorder %v6084, 0.0
        %vm6121 = vcmp.ge.f32.partialorder %v6085, 0.0
        %vm6122 = vcmp.ge.f32.partialorder %v6086, 0.0
        %vm6123 = vcmp.ge.f32.partialorder %v6087, 0.0
        %vm6124 = vcmp.ge.f32.partialorder %v6088, 0.0
        %vm6125 = vcmp.ge.f32.partialorder %v6089, 0.0
        %vm6126 = vcmp.ge.f32.partialorder %v6090, 0.0
        %vm6127 = vcmp.ge.f32.partialorder %v6091, 0.0
        %vm6128 = vcmp.ge.f32.partialorder %v6092, 0.0
        %vm6129 = vcmp.ge.f32.partialorder %v6093, 0.0
        %vm6130 = vcmp.ge.f32.partialorder %v6094, 0.0
        %vm6131 = vcmp.ge.f32.partialorder %v6095, 0.0
        %vm6132 = vcmp.ge.f32.partialorder %v6096, 0.0
        %vm6133 = vcmp.ge.f32.partialorder %v6097, 0.0
        %vm6134 = vcmp.ge.f32.partialorder %v6098, 0.0
        %vm6135 = vcmp.ge.f32.partialorder %v6099, 0.0
        %vm6136 = vcmp.ge.f32.partialorder %v6100, 0.0
        %vm6137 = vcmp.ge.f32.partialorder %v6101, 0.0
        %vm6138 = vcmp.ge.f32.partialorder %v6102, 0.0
        %vm6139 = vcmp.ge.f32.partialorder %v6103, 0.0
        %vm6140 = vcmp.ge.f32.partialorder %v6104, 0.0
        %vm6141 = vcmp.ge.f32.partialorder %v6105, 0.0
        %vm6142 = vcmp.ge.f32.partialorder %v6106, 0.0
        %vm6143 = vcmp.ge.f32.partialorder %v6107, 0.0
        %vm6144 = vcmp.ge.f32.partialorder %v6108, 0.0
        %v6145 = vmul.f32 %v6073, 0.2
        %v6146 = vmul.f32 %v6074, 0.2
        %v6147 = vmul.f32 %v6075, 0.2
        %v6148 = vmul.f32 %v6076, 0.2
        %v6149 = vmul.f32 %v6077, 0.2
        %v6150 = vmul.f32 %v6078, 0.2
        %v6151 = vmul.f32 %v6079, 0.2
        %v6152 = vmul.f32 %v6080, 0.2
        %v6153 = vmul.f32 %v6081, 0.2
        %v6154 = vmul.f32 %v6082, 0.2
        %v6155 = vmul.f32 %v6083, 0.2
        %v6156 = vmul.f32 %v6084, 0.2
        %v6157 = vmul.f32 %v6085, 0.2
        %v6158 = vmul.f32 %v6086, 0.2
        %v6159 = vmul.f32 %v6087, 0.2
        %v6160 = vmul.f32 %v6088, 0.2
        %v6161 = vmul.f32 %v6089, 0.2
        %v6162 = vmul.f32 %v6090, 0.2
        %v6163 = vmul.f32 %v6091, 0.2
        %v6164 = vmul.f32 %v6092, 0.2
        %v6165 = vmul.f32 %v6093, 0.2
        %v6166 = vmul.f32 %v6094, 0.2
        %v6167 = vmul.f32 %v6095, 0.2
        %v6168 = vmul.f32 %v6096, 0.2
        %v6169 = vmul.f32 %v6097, 0.2
        %v6170 = vmul.f32 %v6098, 0.2
        %v6171 = vmul.f32 %v6099, 0.2
        %v6172 = vmul.f32 %v6100, 0.2
        %v6173 = vmul.f32 %v6101, 0.2
        %v6174 = vmul.f32 %v6102, 0.2
        %v6175 = vmul.f32 %v6103, 0.2
        %v6176 = vmul.f32 %v6104, 0.2
        %v6177 = vmul.f32 %v6105, 0.2
        %v6178 = vmul.f32 %v6106, 0.2
        %v6179 = vmul.f32 %v6107, 0.2
        %v6180 = vmul.f32 %v6108, 0.2
        %v6181 = vsel %vm6109, %v6073, %v6145
        %v6182 = vsel %vm6110, %v6074, %v6146
        %v6183 = vsel %vm6111, %v6075, %v6147
        %v6184 = vsel %vm6112, %v6076, %v6148
        %v6185 = vsel %vm6113, %v6077, %v6149
        %v6186 = vsel %vm6114, %v6078, %v6150
        %v6187 = vsel %vm6115, %v6079, %v6151
        %v6188 = vsel %vm6116, %v6080, %v6152
        %v6189 = vsel %vm6117, %v6081, %v6153
        %v6190 = vsel %vm6118, %v6082, %v6154
        %v6191 = vsel %vm6119, %v6083, %v6155
        %v6192 = vsel %vm6120, %v6084, %v6156
        %v6193 = vsel %vm6121, %v6085, %v6157
        %v6194 = vsel %vm6122, %v6086, %v6158
        %v6195 = vsel %vm6123, %v6087, %v6159
        %v6196 = vsel %vm6124, %v6088, %v6160
        %v6197 = vsel %vm6125, %v6089, %v6161
        %v6198 = vsel %vm6126, %v6090, %v6162
        %v6199 = vsel %vm6127, %v6091, %v6163
        %v6200 = vsel %vm6128, %v6092, %v6164
        %v6201 = vsel %vm6129, %v6093, %v6165
        %v6202 = vsel %vm6130, %v6094, %v6166
        %v6203 = vsel %vm6131, %v6095, %v6167
        %v6204 = vsel %vm6132, %v6096, %v6168
        %v6205 = vsel %vm6133, %v6097, %v6169
        %v6206 = vsel %vm6134, %v6098, %v6170
        %v6207 = vsel %vm6135, %v6099, %v6171
        %v6208 = vsel %vm6136, %v6100, %v6172
        %v6209 = vsel %vm6137, %v6101, %v6173
        %v6210 = vsel %vm6138, %v6102, %v6174
        %v6211 = vsel %vm6139, %v6103, %v6175
        %v6212 = vsel %vm6140, %v6104, %v6176
        %v6213 = vsel %vm6141, %v6105, %v6177
        %v6214 = vsel %vm6142, %v6106, %v6178
        %v6215 = vsel %vm6143, %v6107, %v6179
        %v6216 = vsel %vm6144, %v6108, %v6180
        %v6217 = vpack.c.bf16 %v6182, %v6181
        %v6218 = vpack.c.bf16 %v6184, %v6183
        %v6219 = vpack.c.bf16 %v6186, %v6185
        %v6220 = vpack.c.bf16 %v6188, %v6187
        %v6221 = vpack.c.bf16 %v6190, %v6189
        %v6222 = vpack.c.bf16 %v6192, %v6191
        %v6223 = vpack.c.bf16 %v6194, %v6193
        %v6224 = vpack.c.bf16 %v6196, %v6195
        %v6225 = vpack.c.bf16 %v6198, %v6197
        %v6226 = vpack.c.bf16 %v6200, %v6199
        %v6227 = vpack.c.bf16 %v6202, %v6201
        %v6228 = vpack.c.bf16 %v6204, %v6203
        %v6229 = vpack.c.bf16 %v6206, %v6205
        %v6230 = vpack.c.bf16 %v6208, %v6207
        %v6231 = vpack.c.bf16 %v6210, %v6209
        %v6232 = vpack.c.bf16 %v6212, %v6211
        %v6233 = vpack.c.bf16 %v6214, %v6213
        %v6234 = vpack.c.bf16 %v6216, %v6215
        %v6253 = vunpack.c.l.b16 %v6217
        %v6254 = vunpack.c.h.b16 %v6217
        %v6255 = vunpack.c.l.b16 %v6218
        %v6256 = vunpack.c.h.b16 %v6218
        %v6257 = vunpack.c.l.b16 %v6219
        %v6258 = vunpack.c.h.b16 %v6219
        %v6259 = vunpack.c.l.b16 %v6220
        %v6260 = vunpack.c.h.b16 %v6220
        %v6261 = vunpack.c.l.b16 %v6221
        %v6262 = vunpack.c.h.b16 %v6221
        %v6263 = vunpack.c.l.b16 %v6222
        %v6264 = vunpack.c.h.b16 %v6222
        %v6265 = vunpack.c.l.b16 %v6223
        %v6266 = vunpack.c.h.b16 %v6223
        %v6267 = vunpack.c.l.b16 %v6224
        %v6268 = vunpack.c.h.b16 %v6224
        %v6269 = vunpack.c.l.b16 %v6225
        %v6270 = vunpack.c.h.b16 %v6225
        %v6271 = vunpack.c.l.b16 %v6226
        %v6272 = vunpack.c.h.b16 %v6226
        %v6273 = vunpack.c.l.b16 %v6227
        %v6274 = vunpack.c.h.b16 %v6227
        %v6275 = vunpack.c.l.b16 %v6228
        %v6276 = vunpack.c.h.b16 %v6228
        %v6277 = vunpack.c.l.b16 %v6229
        %v6278 = vunpack.c.h.b16 %v6229
        %v6279 = vunpack.c.l.b16 %v6230
        %v6280 = vunpack.c.h.b16 %v6230
        %v6281 = vunpack.c.l.b16 %v6231
        %v6282 = vunpack.c.h.b16 %v6231
        %v6283 = vunpack.c.l.b16 %v6232
        %v6284 = vunpack.c.h.b16 %v6232
        %v6285 = vunpack.c.l.b16 %v6233
        %v6286 = vunpack.c.h.b16 %v6233
        %v6287 = vunpack.c.l.b16 %v6234
        %v6288 = vunpack.c.h.b16 %v6234
        %v6289 = vpack.c.b16 %v6253, %v6253
        %v6290 = vpack.c.b16 %v6254, %v6254
        %v6291 = vpack.c.b16 %v6255, %v6255
        %v6292 = vpack.c.b16 %v6256, %v6256
        %v6293 = vpack.c.b16 %v6257, %v6257
        %v6294 = vpack.c.b16 %v6258, %v6258
        %v6295 = vpack.c.b16 %v6259, %v6259
        %v6296 = vpack.c.b16 %v6260, %v6260
        %v6297 = vpack.c.b16 %v6261, %v6261
        %v6298 = vpack.c.b16 %v6262, %v6262
        %v6299 = vpack.c.b16 %v6263, %v6263
        %v6300 = vpack.c.b16 %v6264, %v6264
        %v6301 = vpack.c.b16 %v6265, %v6265
        %v6302 = vpack.c.b16 %v6266, %v6266
        %v6303 = vpack.c.b16 %v6267, %v6267
        %v6304 = vpack.c.b16 %v6268, %v6268
        %v6305 = vpack.c.b16 %v6269, %v6269
        %v6306 = vpack.c.b16 %v6270, %v6270
        %v6307 = vpack.c.b16 %v6271, %v6271
        %v6308 = vpack.c.b16 %v6272, %v6272
        %v6309 = vpack.c.b16 %v6273, %v6273
        %v6310 = vpack.c.b16 %v6274, %v6274
        %v6311 = vpack.c.b16 %v6275, %v6275
        %v6312 = vpack.c.b16 %v6276, %v6276
        %v6313 = vpack.c.b16 %v6277, %v6277
        %v6314 = vpack.c.b16 %v6278, %v6278
        %v6315 = vpack.c.b16 %v6279, %v6279
        %v6316 = vpack.c.b16 %v6280, %v6280
        %v6317 = vpack.c.b16 %v6281, %v6281
        %v6318 = vpack.c.b16 %v6282, %v6282
        %v6319 = vpack.c.b16 %v6283, %v6283
        %v6320 = vpack.c.b16 %v6284, %v6284
        %v6321 = vpack.c.b16 %v6285, %v6285
        %v6322 = vpack.c.b16 %v6286, %v6286
        %v6323 = vpack.c.b16 %v6287, %v6287
        %v6324 = vpack.c.b16 %v6288, %v6288
        %s6361 = smul.u32 %s5994, 36
        %s6362 = smul.addr %s6361, 4
        %s6363 = scalar_lea.vmem %s170, %s6362
        %vm6364 = vcmask 27648
        %6365 = vst.msk [vmem:[%s6363] sm:$0xf] %vm6364, %v6289
        %6366 = vst.msk [vmem:[%s6363 + $0x4] sm:$0xf] %vm6364, %v6290
        %6367 = vst.msk [vmem:[%s6363 + $0x8] sm:$0xf] %vm6364, %v6291
        %6368 = vst.msk [vmem:[%s6363 + $0xc] sm:$0xf] %vm6364, %v6292
        %6369 = vst.msk [vmem:[%s6363 + $0x10] sm:$0xf] %vm6364, %v6293
        %6370 = vst.msk [vmem:[%s6363 + $0x14] sm:$0xf] %vm6364, %v6294
        %6371 = vst.msk [vmem:[%s6363 + $0x18] sm:$0xf] %vm6364, %v6295
        %6372 = vst.msk [vmem:[%s6363 + $0x1c] sm:$0xf] %vm6364, %v6296
        %6373 = vst.msk [vmem:[%s6363 + $0x20] sm:$0xf] %vm6364, %v6297
        %6374 = vst.msk [vmem:[%s6363 + $0x24] sm:$0xf] %vm6364, %v6298
        %6375 = vst.msk [vmem:[%s6363 + $0x28] sm:$0xf] %vm6364, %v6299
        %6376 = vst.msk [vmem:[%s6363 + $0x2c] sm:$0xf] %vm6364, %v6300
        %6377 = vst.msk [vmem:[%s6363 + $0x30] sm:$0xf] %vm6364, %v6301
        %6378 = vst.msk [vmem:[%s6363 + $0x34] sm:$0xf] %vm6364, %v6302
        %6379 = vst.msk [vmem:[%s6363 + $0x38] sm:$0xf] %vm6364, %v6303
        %6380 = vst.msk [vmem:[%s6363 + $0x3c] sm:$0xf] %vm6364, %v6304
        %6381 = vst.msk [vmem:[%s6363 + $0x40] sm:$0xf] %vm6364, %v6305
        %6382 = vst.msk [vmem:[%s6363 + $0x44] sm:$0xf] %vm6364, %v6306
        %6383 = vst.msk [vmem:[%s6363 + $0x48] sm:$0xf] %vm6364, %v6307
        %6384 = vst.msk [vmem:[%s6363 + $0x4c] sm:$0xf] %vm6364, %v6308
        %6385 = vst.msk [vmem:[%s6363 + $0x50] sm:$0xf] %vm6364, %v6309
        %6386 = vst.msk [vmem:[%s6363 + $0x54] sm:$0xf] %vm6364, %v6310
        %6387 = vst.msk [vmem:[%s6363 + $0x58] sm:$0xf] %vm6364, %v6311
        %6388 = vst.msk [vmem:[%s6363 + $0x5c] sm:$0xf] %vm6364, %v6312
        %6389 = vst.msk [vmem:[%s6363 + $0x60] sm:$0xf] %vm6364, %v6313
        %6390 = vst.msk [vmem:[%s6363 + $0x64] sm:$0xf] %vm6364, %v6314
        %6391 = vst.msk [vmem:[%s6363 + $0x68] sm:$0xf] %vm6364, %v6315
        %6392 = vst.msk [vmem:[%s6363 + $0x6c] sm:$0xf] %vm6364, %v6316
        %6393 = vst.msk [vmem:[%s6363 + $0x70] sm:$0xf] %vm6364, %v6317
        %6394 = vst.msk [vmem:[%s6363 + $0x74] sm:$0xf] %vm6364, %v6318
        %6395 = vst.msk [vmem:[%s6363 + $0x78] sm:$0xf] %vm6364, %v6319
        %6396 = vst.msk [vmem:[%s6363 + $0x7c] sm:$0xf] %vm6364, %v6320
        %6397 = vst.msk [vmem:[%s6363 + $0x80] sm:$0xf] %vm6364, %v6321
        %6398 = vst.msk [vmem:[%s6363 + $0x84] sm:$0xf] %vm6364, %v6322
        %6399 = vst.msk [vmem:[%s6363 + $0x88] sm:$0xf] %vm6364, %v6323
        %6400 = vst.msk [vmem:[%s6363 + $0x8c] sm:$0xf] %vm6364, %v6324
      $region44: #{tpu_custom_call.1} parent=31 // loop_footer
        %s5998 = sadd.s32 1, %s5994
      $region45: #{tpu_custom_call.1} parent=31 // loop_footer_branch
        %5993 = sbr.rel target = $region41
      $region46: #{tpu_custom_call.1} parent=31 // loop_exit
        _
      %p6401 = scmp.lt.s32.totalorder %s14, 1
      %s6402 = scalar_select %p6401, %s14, 1
      %s6403 = smul.addr %s6402, 576
      %s6404 = smul.addr %s6403, 4
      %s6405 = scalar_lea.vmem %s3, %s6404
      // Predicated region
      $region47: #{tpu_custom_call.1} parent=31 // pred_check
        %p6406 = pneg %p100
      $region48: #{tpu_custom_call.1} parent=31 // pred_check_branch
        %6408 = sbr.rel (%p6406) target = $region50
      $region49: #{tpu_custom_call.1} parent=31 // pred_region
        _
      $region50: #{tpu_custom_call.1} parent=31 // pred_fallthru
        _
    $region32: #{tpu_custom_call.1} parent=5 // pred_fallthru
      _
    %p6409 = scmp.le.s32.totalorder 2, %s9
    // Predicated region
    $region51: #{tpu_custom_call.1} parent=5 // pred_check
      %p6410 = pneg %p6409
    $region52: #{tpu_custom_call.1} parent=5 // pred_check_branch
      %6412 = sbr.rel (%p6410) target = $region54
    $region53: #{tpu_custom_call.1} parent=5 // pred_region
      %s6413 = ssub.s32 %s9, 2
      // Predicated region
      $region55: #{tpu_custom_call.1} parent=53 // pred_check
        %p6414 = pneg %p106
      $region56: #{tpu_custom_call.1} parent=53 // pred_check_branch
        %6416 = sbr.rel (%p6414) target = $region58
      $region57: #{tpu_custom_call.1} parent=53 // pred_region
        %p6417 = scmp.lt.s32.totalorder %s15, 1
        %s6418 = scalar_select %p6417, %s15, 1
        %s6419 = smul.addr %s6418, 576
        %s6420 = smul.addr %s6419, 4
        %s6421 = scalar_lea.vmem %s3, %s6420
      $region58: #{tpu_custom_call.1} parent=53 // pred_fallthru
        _
    $region54: #{tpu_custom_call.1} parent=5 // pred_fallthru
      _
  $region6: #{tpu_custom_call.1} parent=0 // loop_footer
    %s13 = sadd.s32 1, %s9
  $region7: #{tpu_custom_call.1} parent=0 // loop_footer_branch
    %8 = sbr.rel target = $region3
  $region8: #{tpu_custom_call.1} parent=0 // loop_exit
    _

</llo_original>
